<compile_context>
chip_gen: v6e
topology: v6e:2x2x1
jax: 0.10.0
libtpu: 0.0.40
codegen_flags: <defaults>
</compile_context>

<pallas_src>
import functools
import math

import numpy as np

import jax
import jax.numpy as jnp
from jax.experimental import pallas as pl
from jax.experimental.pallas import tpu as pltpu


# ----------------------------- helpers (wrapper side) -----------------------------

def _kpad(W, Cin):
    """Pad the per-row conv contraction dim (W+2)*Cin up to a multiple of 32."""
    return ((W + 2) * Cin + 31) // 32 * 32


def _prep_frames(frames):
    """(F, Cin, H, W) -> (F, H+2, Kpad) channels-last row layout, zero padded.

    Row h', column j = w'*Cin + cin holds xpad[cin, h', w'].  Only ~1.5x the raw
    frame bytes (vs 9x for materialized im2col)."""
    F_, Cin, H, W = frames.shape
    Kpad = _kpad(W, Cin)
    x = jnp.transpose(frames, (0, 2, 3, 1))                 # (F, H, W, Cin)
    x = jnp.pad(x, ((0, 0), (1, 1), (1, 1), (0, 0)))        # (F, H+2, W+2, Cin)
    x = x.reshape(F_, H + 2, (W + 2) * Cin)
    return jnp.pad(x, ((0, 0), (0, 0), (0, Kpad - (W + 2) * Cin)))


def _build_feature_mats(conv_w, conv_b, proj_w, H, W):
    """Precompute (init-time, numpy) the structured conv / pooling+projection mats.

    Wm[dh, (w+dw)*Cin+cin, w*Cc+cc] = conv_w[cc, cin, dh, dw]
      => conv output y[h, w*Cc+cc] = sum_dh (xrow[h+dh, :] @ Wm[dh])[w*Cc+cc]
    Pproj[w*Cc+cc, d] = proj_w[cc, d] / (H*W)
      => GAP + projection fused into one matmul on the row-summed ReLU output."""
    Cc, Cin, KH, KW = conv_w.shape
    D = proj_w.shape[1]
    Kpad = _kpad(W, Cin)
    wnp = np.asarray(conv_w, dtype=np.float32)
    Wm = np.zeros((KH, Kpad, W * Cc), np.float32)
    for dh in range(KH):
        for dw in range(KW):
            for cin in range(Cin):
                taps = wnp[:, cin, dh, dw]                              # (Cc,)
                for w in range(W):
                    Wm[dh, (w + dw) * Cin + cin, w * Cc:(w + 1) * Cc] = taps
    cb_row = np.tile(np.asarray(conv_b, np.float32), W)[None, :]        # (1, W*Cc)
    pproj = np.tile(np.asarray(proj_w, np.float32), (W, 1)) / float(H * W)
    return (jnp.asarray(Wm, jnp.bfloat16),
            jnp.asarray(cb_row, jnp.float32),
            jnp.asarray(pproj, jnp.bfloat16))


def positional_encoding(T, D):
    pos = jnp.arange(T, dtype=jnp.float32)[:, None]
    i = jnp.arange(D, dtype=jnp.float32)[None, :]
    angle = pos / jnp.power(10000.0, (2.0 * jnp.floor(i / 2.0)) / D)
    return jnp.where((jnp.arange(D) % 2) == 0, jnp.sin(angle), jnp.cos(angle))


def _layernorm(x, g, b, eps=1e-5):
    mu = jnp.mean(x, axis=-1, keepdims=True)
    var = jnp.mean(jnp.square(x - mu), axis=-1, keepdims=True)
    return (x - mu) * jax.lax.rsqrt(var + eps) * g + b


# ----------------------------- Pallas kernels ------------------------------

def _feature_kernel(x_ref, wm_ref, cb_ref, pp_ref, pb_ref, pe_ref, o_ref, *, H, WCc):
    """One frame: conv3x3 (3 shifted matmuls) + bias + ReLU + GAP + proj + PE add."""
    x = x_ref[...]                                           # (H+2, Kpad) f32
    acc = jnp.zeros((H, WCc), jnp.float32)
    for dh in range(3):                                      # 3 row-shifted taps
        acc = acc + jnp.dot(x[dh:dh + H, :].astype(jnp.bfloat16), wm_ref[dh],
                            preferred_element_type=jnp.float32)
    y = jnp.maximum(acc + cb_ref[...], 0.0)                  # conv bias + ReLU, (H, W*Cc)
    z = jnp.sum(y, axis=0, keepdims=True)                    # spatial row-sum, (1, W*Cc)
    # GAP (1/(H*W) folded into pp) + projection to D in one matmul.
    feat = jnp.dot(z.astype(jnp.bfloat16), pp_ref[...],
                   preferred_element_type=jnp.float32)       # (1, D)
    o_ref[...] = feat + pb_ref[...] + pe_ref[...]            # + proj bias + pos. encoding


def _encoder_kernel(x_ref, bias_ref, wqkv_ref, bqkv_ref, wo_ref, bo_ref,
                    ln1g_ref, ln1b_ref, w1_ref, b1_ref, w2_ref, b2_ref,
                    ln2g_ref, ln2b_ref, clsw_ref, clsb_ref,
                    out_ref, h_s, *, B, T, nH, dk, dv, scale):
    """Entire transformer stack: grid iterates over blocks, h stays in VMEM scratch.
    Last iteration fuses the sequence mean-pool + classifier."""
    m = pl.program_id(0)

    @pl.when(m == 0)
    def _():
        h_s[...] = x_ref[...]                                # seed with features (+PE)

    h = h_s[...]                                             # (B*T, D) f32
    hb = h.astype(jnp.bfloat16)

    # ---- fused QKV projection (one lane-dense matmul instead of three) ----
    qkv = jnp.dot(hb, wqkv_ref[...], preferred_element_type=jnp.float32) + bqkv_ref[...]

    q_off, k_off, v_off = 0, nH * dk, 2 * nH * dk
    head_outs = []
    for hd in range(nH):                                     # all (B,T) rows per head
        qh = qkv[:, q_off + hd * dk: q_off + (hd + 1) * dk]
        kh = qkv[:, k_off + hd * dk: k_off + (hd + 1) * dk]
        vh = qkv[:, v_off + hd * dv: v_off + (hd + 1) * dv]
        # MXU consumes K^T directly via dot_general (no explicit transpose).
        s = jax.lax.dot_general(qh, kh, (((1,), (1,)), ((), ())),
                                preferred_element_type=jnp.float32) * scale
        s = s + bias_ref[...]                                # mask cross-batch pairs
        s = s - jnp.max(s, axis=-1, keepdims=True)
        p = jnp.exp(s)
        p = p * pl.reciprocal(jnp.sum(p, axis=-1, keepdims=True), approx=True)
        head_outs.append(jnp.dot(p, vh, preferred_element_type=jnp.float32))
    attn = jnp.concatenate(head_outs, axis=1)                # (B*T, nH*dv)

    proj = jnp.dot(attn.astype(jnp.bfloat16), wo_ref[...],
                   preferred_element_type=jnp.float32) + bo_ref[...]
    h1 = _layernorm(proj + h, ln1g_ref[...], ln1b_ref[...])  # post-LN residual

    ff = jnp.dot(h1.astype(jnp.bfloat16), w1_ref[...],
                 preferred_element_type=jnp.float32) + b1_ref[...]
    ff = jnp.maximum(ff, 0.0)
    ff2 = jnp.dot(ff.astype(jnp.bfloat16), w2_ref[...],
                  preferred_element_type=jnp.float32) + b2_ref[...]
    h2 = _layernorm(ff2 + h1, ln2g_ref[...], ln2b_ref[...])

    h_s[...] = h2

    # ---- fused mean-pool over T + classifier on the last block ----
    @pl.when(m == pl.num_programs(0) - 1)
    def _():
        BT = B * T
        rid = jax.lax.broadcasted_iota(jnp.int32, (B, BT), 0)
        cid = jax.lax.broadcasted_iota(jnp.int32, (B, BT), 1)
        pool = jnp.where((cid >= rid * T) & (cid < (rid + 1) * T),
                         jnp.float32(1.0 / T), jnp.float32(0.0))
        pooled = jnp.dot(pool, h2, preferred_element_type=jnp.float32)   # (B, D)
        out_ref[...] = (jnp.dot(pooled, clsw_ref[...],
                                preferred_element_type=jnp.float32) + clsb_ref[...])


# ------------------------------- params -------------------------------------

def init_params(key, cfg):
    D, dk, dv = cfg["input_dim"], cfg["d_k"], cfg["d_v"]
    nH, dff, Cc = cfg["n_head"], cfg["dff"], cfg["conv_channels"]
    ip, op, M = cfg["in_planes"], cfg["out_planes"], cfg["n_module"]
    H, W = cfg["height"], cfg["width"]
    qkv_n = 2 * nH * dk + nH * dv

    keys = jax.random.split(key, 3 + M)

    def dense(k, shape, scale=0.02):
        return scale * jax.random.normal(k, shape, dtype=jnp.float32)

    conv_w = dense(keys[0], (Cc, ip, 3, 3), 0.1)             # OIHW like PyTorch
    conv_b = jnp.zeros((Cc,), jnp.float32)
    proj_w = dense(keys[1], (Cc, D))
    proj_b = jnp.zeros((D,), jnp.float32)
    cls_w = dense(keys[2], (D, op))
    cls_b = jnp.zeros((op,), jnp.float32)

    wqkv, wo, w1, w2 = [], [], [], []
    for m in range(M):
        sub = jax.random.split(keys[3 + m], 6)
        wq = dense(sub[0], (D, nH * dk))
        wk = dense(sub[1], (D, nH * dk))
        wv = dense(sub[2], (D, nH * dv))
        wqkv.append(jnp.concatenate([wq, wk, wv], axis=1))   # fused QKV weight
        wo.append(dense(sub[3], (nH * dv, D)))
        w1.append(dense(sub[4], (D, dff)))
        w2.append(dense(sub[5], (dff, D)))

    conv_wmat, conv_brow, proj_pmat = _build_feature_mats(conv_w, conv_b, proj_w, H, W)

    return {
        # feature extractor (structured conv + fused GAP/proj)
        "conv_wmat": conv_wmat, "conv_brow": conv_brow,
        "proj_pmat": proj_pmat, "proj_brow": proj_b.reshape(1, D),
        # transformer blocks, stacked over n_module; matmul weights in bf16
        "wqkv": jnp.stack(wqkv).astype(jnp.bfloat16),
        "bqkv": jnp.zeros((M, 1, qkv_n), jnp.float32),
        "wo": jnp.stack(wo).astype(jnp.bfloat16),
        "bo": jnp.zeros((M, 1, D), jnp.float32),
        "ln1_g": jnp.ones((M, 1, D), jnp.float32), "ln1_b": jnp.zeros((M, 1, D), jnp.float32),
        "w1": jnp.stack(w1).astype(jnp.bfloat16),
        "b1": jnp.zeros((M, 1, dff), jnp.float32),
        "w2": jnp.stack(w2).astype(jnp.bfloat16),
        "b2": jnp.zeros((M, 1, D), jnp.float32),
        "ln2_g": jnp.ones((M, 1, D), jnp.float32), "ln2_b": jnp.zeros((M, 1, D), jnp.float32),
        # classifier
        "cls_w": cls_w, "cls_b": cls_b.reshape(1, op),
    }


# ------------------------------- forward -------------------------------------

def forward(params, x, cfg):
    B, C, H, W = x.shape
    ip = cfg["in_planes"]
    assert H == cfg["height"] and W == cfg["width"]
    T = C // ip
    D, nH, dk, dv = cfg["input_dim"], cfg["n_head"], cfg["d_k"], cfg["d_v"]
    dff, M, op, Cc = cfg["dff"], cfg["n_module"], cfg["out_planes"], cfg["conv_channels"]
    F_ = B * T
    Kpad = _kpad(W, ip)
    qkv_n = 2 * nH * dk + nH * dv

    # ---- self.features(x): fused conv+ReLU+GAP+proj (+ positional encoding) ----
    frames = x.reshape(F_, ip, H, W)
    xrow = _prep_frames(frames)                                          # (F, H+2, Kpad)
    pe_all = jnp.tile(positional_encoding(T, D), (B, 1)).reshape(F_, 1, D)

    feats = pl.pallas_call(
        functools.partial(_feature_kernel, H=H, WCc=W * Cc),
        out_shape=jax.ShapeDtypeStruct((F_, 1, D), jnp.float32),
        grid=(F_,),
        in_specs=[
            pl.BlockSpec((None, H + 2, Kpad), lambda f: (f, 0, 0)),
            pl.BlockSpec((3, Kpad, W * Cc), lambda f: (0, 0, 0)),
            pl.BlockSpec((1, W * Cc), lambda f: (0, 0)),
            pl.BlockSpec((W * Cc, D), lambda f: (0, 0)),
            pl.BlockSpec((1, D), lambda f: (0, 0)),
            pl.BlockSpec((None, 1, D), lambda f: (f, 0, 0)),
        ],
        out_specs=pl.BlockSpec((None, 1, D), lambda f: (f, 0, 0)),
        compiler_params=pltpu.CompilerParams(dimension_semantics=("parallel",)),
    )(xrow, params["conv_wmat"], params["conv_brow"],
      params["proj_pmat"], params["proj_brow"], pe_all)

    x0 = feats.reshape(F_, D)                                # (B*T, D), PE already added

    # additive attention bias masking cross-batch (query, key) pairs
    rid = jnp.arange(F_)[:, None] // T
    cid = jnp.arange(F_)[None, :] // T
    attn_bias = jnp.where(rid == cid, 0.0, -1e30).astype(jnp.float32)    # (B*T, B*T)

    # ---- self.self_attention + self.pool + self.classifier: one fused kernel ----
    logits = pl.pallas_call(
        functools.partial(_encoder_kernel, B=B, T=T, nH=nH, dk=dk, dv=dv,
                          scale=1.0 / math.sqrt(dk)),
        out_shape=jax.ShapeDtypeStruct((B, op), jnp.float32),
        grid=(M,),
        in_specs=[
            pl.BlockSpec((F_, D), lambda m: (0, 0)),                   # features (+PE)
            pl.BlockSpec((F_, F_), lambda m: (0, 0)),                  # attention bias
            pl.BlockSpec((None, D, qkv_n), lambda m: (m, 0, 0)),       # wqkv
            pl.BlockSpec((None, 1, qkv_n), lambda m: (m, 0, 0)),       # bqkv
            pl.BlockSpec((None, nH * dv, D), lambda m: (m, 0, 0)),     # wo
            pl.BlockSpec((None, 1, D), lambda m: (m, 0, 0)),           # bo
            pl.BlockSpec((None, 1, D), lambda m: (m, 0, 0)),           # ln1_g
            pl.BlockSpec((None, 1, D), lambda m: (m, 0, 0)),           # ln1_b
            pl.BlockSpec((None, D, dff), lambda m: (m, 0, 0)),         # w1
            pl.BlockSpec((None, 1, dff), lambda m: (m, 0, 0)),         # b1
            pl.BlockSpec((None, dff, D), lambda m: (m, 0, 0)),         # w2
            pl.BlockSpec((None, 1, D), lambda m: (m, 0, 0)),           # b2
            pl.BlockSpec((None, 1, D), lambda m: (m, 0, 0)),           # ln2_g
            pl.BlockSpec((None, 1, D), lambda m: (m, 0, 0)),           # ln2_b
            pl.BlockSpec((D, op), lambda m: (0, 0)),                   # cls_w
            pl.BlockSpec((1, op), lambda m: (0, 0)),                   # cls_b
        ],
        out_specs=pl.BlockSpec((B, op), lambda m: (0, 0)),
        scratch_shapes=[pltpu.VMEM((F_, D), jnp.float32)],             # resident h
        compiler_params=pltpu.CompilerParams(dimension_semantics=("arbitrary",)),
    )(x0, attn_bias, params["wqkv"], params["bqkv"], params["wo"], params["bo"],
      params["ln1_g"], params["ln1_b"], params["w1"], params["b1"],
      params["w2"], params["b2"], params["ln2_g"], params["ln2_b"],
      params["cls_w"], params["cls_b"])

    return logits                                                        # (B, out_planes)


# --------------------------------- main -------------------------------------

if __name__ == "__main__":
    key = jax.random.PRNGKey(0)
    B, in_planes, T, H, W = 2, 3, 4, 16, 16
    out_planes = 6
    cfg = dict(in_planes=in_planes, out_planes=out_planes, input_dim=128,
               d_k=64, d_v=64, n_head=2, dff=256, n_module=2, conv_channels=32,
               height=H, width=W)

    pkey, xkey = jax.random.split(key)
    params = init_params(pkey, cfg)
    x = jax.random.normal(xkey, (B, T * in_planes, H, W), dtype=jnp.float32)

    fwd = jax.jit(functools.partial(forward, cfg=cfg))
    out = jax.block_until_ready(fwd(params, x))
    assert out.shape == (B, out_planes), out.shape
    assert bool(jnp.all(jnp.isfinite(out)))
    print("KERNEL_OK")
</pallas_src>

<mosaic_0001>
module attributes {stable_mosaic.version = 11 : i64} {
  func.func @_feature_kernel(%arg0: i32, %arg1: memref<1x18x64xf32, #tpu.memory_space<vmem>>, %arg2: memref<3x64x512xbf16, #tpu.memory_space<vmem>>, %arg3: memref<1x512xf32, #tpu.memory_space<vmem>>, %arg4: memref<512x128xbf16, #tpu.memory_space<vmem>>, %arg5: memref<1x128xf32, #tpu.memory_space<vmem>>, %arg6: memref<1x1x128xf32, #tpu.memory_space<vmem>>, %arg7: memref<1x1x128xf32, #tpu.memory_space<vmem>>) attributes {dimension_semantics = [#tpu.dimension_semantics<parallel>], iteration_bounds = array<i64: 8>, scalar_prefetch = 0 : i64, scratch_operands = 0 : i64, tpu.core_type = #tpu.core_type<tc>, window_params = [{transform_indices = @transform_0, window_bounds = array<i64: 1, 18, 64>}, {pipeline_mode = #tpu.pipeline_mode<synchronous>, transform_indices = @transform_1, window_bounds = array<i64: 3, 64, 512>}, {pipeline_mode = #tpu.pipeline_mode<synchronous>, transform_indices = @transform_2, window_bounds = array<i64: 1, 512>}, {pipeline_mode = #tpu.pipeline_mode<synchronous>, transform_indices = @transform_3, window_bounds = array<i64: 512, 128>}, {pipeline_mode = #tpu.pipeline_mode<synchronous>, transform_indices = @transform_4, window_bounds = array<i64: 1, 128>}, {transform_indices = @transform_5, window_bounds = array<i64: 1, 1, 128>}, {transform_indices = @transform_6, window_bounds = array<i64: 1, 1, 128>}]} {
    %c0 = arith.constant 0 : index
    %c0_0 = arith.constant 0 : index
    %c0_1 = arith.constant 0 : index
    %0 = vector.load %arg1[%c0, %c0_0, %c0_1] : memref<1x18x64xf32, #tpu.memory_space<vmem>>, vector<1x18x64xf32>
    %1 = vector.shape_cast %0 : vector<1x18x64xf32> to vector<18x64xf32>
    %cst = arith.constant 0.000000e+00 : f32
    %2 = vector.broadcast %cst : f32 to vector<16x512xf32>
    %3 = vector.extract_strided_slice %1 {offsets = [0, 0], sizes = [16, 64], strides = [1, 1]} : vector<18x64xf32> to vector<16x64xf32>
    %4 = arith.truncf %3 : vector<16x64xf32> to vector<16x64xbf16>
    %c0_2 = arith.constant 0 : index
    %c0_3 = arith.constant 0 : index
    %c0_4 = arith.constant 0 : index
    %5 = vector.load %arg2[%c0_2, %c0_3, %c0_4] : memref<3x64x512xbf16, #tpu.memory_space<vmem>>, vector<1x64x512xbf16>
    %6 = vector.shape_cast %5 : vector<1x64x512xbf16> to vector<64x512xbf16>
    %cst_5 = arith.constant dense<0.000000e+00> : vector<16x512xf32>
    %7 = tpu.matmul %4, %6, %cst_5 {dimension_numbers = #tpu.dot_dimension_numbers<[1], [0], [0], [1], [0, 0, 1, 1], [], []>} : vector<16x64xbf16>, vector<64x512xbf16>, vector<16x512xf32> -> vector<16x512xf32>
    %8 = arith.addf %2, %7 : vector<16x512xf32>
    %9 = vector.extract_strided_slice %1 {offsets = [1, 0], sizes = [16, 64], strides = [1, 1]} : vector<18x64xf32> to vector<16x64xf32>
    %10 = arith.truncf %9 : vector<16x64xf32> to vector<16x64xbf16>
    %c1 = arith.constant 1 : index
    %c0_6 = arith.constant 0 : index
    %c0_7 = arith.constant 0 : index
    %11 = vector.load %arg2[%c1, %c0_6, %c0_7] : memref<3x64x512xbf16, #tpu.memory_space<vmem>>, vector<1x64x512xbf16>
    %12 = vector.shape_cast %11 : vector<1x64x512xbf16> to vector<64x512xbf16>
    %cst_8 = arith.constant dense<0.000000e+00> : vector<16x512xf32>
    %13 = tpu.matmul %10, %12, %cst_8 {dimension_numbers = #tpu.dot_dimension_numbers<[1], [0], [0], [1], [0, 0, 1, 1], [], []>} : vector<16x64xbf16>, vector<64x512xbf16>, vector<16x512xf32> -> vector<16x512xf32>
    %14 = arith.addf %8, %13 : vector<16x512xf32>
    %15 = vector.extract_strided_slice %1 {offsets = [2, 0], sizes = [16, 64], strides = [1, 1]} : vector<18x64xf32> to vector<16x64xf32>
    %16 = arith.truncf %15 : vector<16x64xf32> to vector<16x64xbf16>
    %c2 = arith.constant 2 : index
    %c0_9 = arith.constant 0 : index
    %c0_10 = arith.constant 0 : index
    %17 = vector.load %arg2[%c2, %c0_9, %c0_10] : memref<3x64x512xbf16, #tpu.memory_space<vmem>>, vector<1x64x512xbf16>
    %18 = vector.shape_cast %17 : vector<1x64x512xbf16> to vector<64x512xbf16>
    %cst_11 = arith.constant dense<0.000000e+00> : vector<16x512xf32>
    %19 = tpu.matmul %16, %18, %cst_11 {dimension_numbers = #tpu.dot_dimension_numbers<[1], [0], [0], [1], [0, 0, 1, 1], [], []>} : vector<16x64xbf16>, vector<64x512xbf16>, vector<16x512xf32> -> vector<16x512xf32>
    %20 = arith.addf %14, %19 : vector<16x512xf32>
    %c0_12 = arith.constant 0 : index
    %c0_13 = arith.constant 0 : index
    %21 = vector.load %arg3[%c0_12, %c0_13] : memref<1x512xf32, #tpu.memory_space<vmem>>, vector<1x512xf32>
    %22 = vector.broadcast %21 : vector<1x512xf32> to vector<16x512xf32>
    %23 = arith.addf %20, %22 : vector<16x512xf32>
    %cst_14 = arith.constant 0.000000e+00 : f32
    %24 = vector.broadcast %cst_14 : f32 to vector<16x512xf32>
    %25 = arith.maximumf %23, %24 : vector<16x512xf32>
    %cst_15 = arith.constant dense<0.000000e+00> : vector<512xf32>
    %26 = vector.multi_reduction <add>, %25, %cst_15 [0] : vector<16x512xf32> to vector<512xf32>
    %27 = vector.shape_cast %26 : vector<512xf32> to vector<1x512xf32>
    %28 = arith.truncf %27 : vector<1x512xf32> to vector<1x512xbf16>
    %c0_16 = arith.constant 0 : index
    %c0_17 = arith.constant 0 : index
    %29 = vector.load %arg4[%c0_16, %c0_17] : memref<512x128xbf16, #tpu.memory_space<vmem>>, vector<512x128xbf16>
    %cst_18 = arith.constant dense<0.000000e+00> : vector<1x128xf32>
    %30 = tpu.matmul %28, %29, %cst_18 {dimension_numbers = #tpu.dot_dimension_numbers<[1], [0], [0], [1], [0, 0, 1, 1], [], []>} : vector<1x512xbf16>, vector<512x128xbf16>, vector<1x128xf32> -> vector<1x128xf32>
    %c0_19 = arith.constant 0 : index
    %c0_20 = arith.constant 0 : index
    %31 = vector.load %arg5[%c0_19, %c0_20] : memref<1x128xf32, #tpu.memory_space<vmem>>, vector<1x128xf32>
    %32 = arith.addf %30, %31 : vector<1x128xf32>
    %c0_21 = arith.constant 0 : index
    %c0_22 = arith.constant 0 : index
    %c0_23 = arith.constant 0 : index
    %33 = vector.load %arg6[%c0_21, %c0_22, %c0_23] : memref<1x1x128xf32, #tpu.memory_space<vmem>>, vector<1x1x128xf32>
    %34 = vector.shape_cast %33 : vector<1x1x128xf32> to vector<1x128xf32>
    %35 = arith.addf %32, %34 : vector<1x128xf32>
    %c0_24 = arith.constant 0 : index
    %c0_25 = arith.constant 0 : index
    %c0_26 = arith.constant 0 : index
    %36 = vector.load %arg7[%c0_24, %c0_25, %c0_26] : memref<1x1x128xf32, #tpu.memory_space<vmem>>, vector<1x1x128xf32>
    %37 = vector.shape_cast %36 : vector<1x1x128xf32> to vector<1x128xf32>
    %38 = vector.shape_cast %35 : vector<1x128xf32> to vector<1x1x128xf32>
    tpu.vector_store %arg7[%c0_24, %c0_25, %c0_26], %38 {strides = array<i32>} : memref<1x1x128xf32, #tpu.memory_space<vmem>>, vector<1x1x128xf32>,
    return
  }
  func.func @transform_0(%arg0: i32) -> (i32, i32, i32) {
    %c0_i32 = arith.constant 0 : i32
    %c0_i32_0 = arith.constant 0 : i32
    %c0_i32_1 = arith.constant 0 : i32
    return %arg0, %c0_i32, %c0_i32_0 : i32, i32, i32
  }
  func.func @transform_1(%arg0: i32) -> (i32, i32, i32) {
    %c0_i32 = arith.constant 0 : i32
    %c0_i32_0 = arith.constant 0 : i32
    %c0_i32_1 = arith.constant 0 : i32
    %c0_i32_2 = arith.constant 0 : i32
    return %c0_i32, %c0_i32_0, %c0_i32_1 : i32, i32, i32
  }
  func.func @transform_2(%arg0: i32) -> (i32, i32) {
    %c0_i32 = arith.constant 0 : i32
    %c0_i32_0 = arith.constant 0 : i32
    %c0_i32_1 = arith.constant 0 : i32
    return %c0_i32, %c0_i32_0 : i32, i32
  }
  func.func @transform_3(%arg0: i32) -> (i32, i32) {
    %c0_i32 = arith.constant 0 : i32
    %c0_i32_0 = arith.constant 0 : i32
    %c0_i32_1 = arith.constant 0 : i32
    return %c0_i32, %c0_i32_0 : i32, i32
  }
  func.func @transform_4(%arg0: i32) -> (i32, i32) {
    %c0_i32 = arith.constant 0 : i32
    %c0_i32_0 = arith.constant 0 : i32
    %c0_i32_1 = arith.constant 0 : i32
    return %c0_i32, %c0_i32_0 : i32, i32
  }
  func.func @transform_5(%arg0: i32) -> (i32, i32, i32) {
    %c0_i32 = arith.constant 0 : i32
    %c0_i32_0 = arith.constant 0 : i32
    %c0_i32_1 = arith.constant 0 : i32
    return %arg0, %c0_i32, %c0_i32_0 : i32, i32, i32
  }
  func.func @transform_6(%arg0: i32) -> (i32, i32, i32) {
    %c0_i32 = arith.constant 0 : i32
    %c0_i32_0 = arith.constant 0 : i32
    %c0_i32_1 = arith.constant 0 : i32
    return %arg0, %c0_i32, %c0_i32_0 : i32, i32, i32
  }
}

module attributes {stable_mosaic.version = 11 : i64} {
  func.func @_encoder_kernel(%arg0: i32, %arg1: memref<8x128xf32, #tpu.memory_space<vmem>>, %arg2: memref<8x8xf32, #tpu.memory_space<vmem>>, %arg3: memref<1x128x384xbf16, #tpu.memory_space<vmem>>, %arg4: memref<1x1x384xf32, #tpu.memory_space<vmem>>, %arg5: memref<1x128x128xbf16, #tpu.memory_space<vmem>>, %arg6: memref<1x1x128xf32, #tpu.memory_space<vmem>>, %arg7: memref<1x1x128xf32, #tpu.memory_space<vmem>>, %arg8: memref<1x1x128xf32, #tpu.memory_space<vmem>>, %arg9: memref<1x128x256xbf16, #tpu.memory_space<vmem>>, %arg10: memref<1x1x256xf32, #tpu.memory_space<vmem>>, %arg11: memref<1x256x128xbf16, #tpu.memory_space<vmem>>, %arg12: memref<1x1x128xf32, #tpu.memory_space<vmem>>, %arg13: memref<1x1x128xf32, #tpu.memory_space<vmem>>, %arg14: memref<1x1x128xf32, #tpu.memory_space<vmem>>, %arg15: memref<128x6xf32, #tpu.memory_space<vmem>>, %arg16: memref<1x6xf32, #tpu.memory_space<vmem>>, %arg17: memref<2x6xf32, #tpu.memory_space<vmem>>, %arg18: memref<8x128xf32, #tpu.memory_space<vmem>>) attributes {dimension_semantics = [#tpu.dimension_semantics<arbitrary>], iteration_bounds = array<i64: 2>, scalar_prefetch = 0 : i64, scratch_operands = 1 : i64, tpu.core_type = #tpu.core_type<tc>, window_params = [{pipeline_mode = #tpu.pipeline_mode<synchronous>, transform_indices = @transform_0, window_bounds = array<i64: 8, 128>}, {pipeline_mode = #tpu.pipeline_mode<synchronous>, transform_indices = @transform_1, window_bounds = array<i64: 8, 8>}, {transform_indices = @transform_2, window_bounds = array<i64: 1, 128, 384>}, {transform_indices = @transform_3, window_bounds = array<i64: 1, 1, 384>}, {transform_indices = @transform_4, window_bounds = array<i64: 1, 128, 128>}, {transform_indices = @transform_5, window_bounds = array<i64: 1, 1, 128>}, {transform_indices = @transform_6, window_bounds = array<i64: 1, 1, 128>}, {transform_indices = @transform_7, window_bounds = array<i64: 1, 1, 128>}, {transform_indices = @transform_8, window_bounds = array<i64: 1, 128, 256>}, {transform_indices = @transform_9, window_bounds = array<i64: 1, 1, 256>}, {transform_indices = @transform_10, window_bounds = array<i64: 1, 256, 128>}, {transform_indices = @transform_11, window_bounds = array<i64: 1, 1, 128>}, {transform_indices = @transform_12, window_bounds = array<i64: 1, 1, 128>}, {transform_indices = @transform_13, window_bounds = array<i64: 1, 1, 128>}, {pipeline_mode = #tpu.pipeline_mode<synchronous>, transform_indices = @transform_14, window_bounds = array<i64: 128, 6>}, {pipeline_mode = #tpu.pipeline_mode<synchronous>, transform_indices = @transform_15, window_bounds = array<i64: 1, 6>}, {pipeline_mode = #tpu.pipeline_mode<synchronous>, transform_indices = @transform_16, window_bounds = array<i64: 2, 6>}]} {
    %c0_i32 = arith.constant 0 : i32
    %0 = arith.cmpi eq, %arg0, %c0_i32 : i32
    %1 = arith.extui %0 : i1 to i32
    %c0_i32_0 = arith.constant 0 : i32
    %2 = arith.cmpi ne, %1, %c0_i32_0 : i32
    scf.if %2 {
      %c0_69 = arith.constant 0 : index
      %c0_70 = arith.constant 0 : index
      %135 = vector.load %arg1[%c0_69, %c0_70] : memref<8x128xf32, #tpu.memory_space<vmem>>, vector<8x128xf32>
      %c0_71 = arith.constant 0 : index
      %c0_72 = arith.constant 0 : index
      %136 = vector.load %arg18[%c0_71, %c0_72] : memref<8x128xf32, #tpu.memory_space<vmem>>, vector<8x128xf32>
      tpu.vector_store %arg18[%c0_71, %c0_72], %135 {strides = array<i32>} : memref<8x128xf32, #tpu.memory_space<vmem>>, vector<8x128xf32>,
    } else {
    }
    %c0 = arith.constant 0 : index
    %c0_1 = arith.constant 0 : index
    %3 = vector.load %arg18[%c0, %c0_1] : memref<8x128xf32, #tpu.memory_space<vmem>>, vector<8x128xf32>
    %4 = arith.truncf %3 : vector<8x128xf32> to vector<8x128xbf16>
    %c0_2 = arith.constant 0 : index
    %c0_3 = arith.constant 0 : index
    %c0_4 = arith.constant 0 : index
    %5 = vector.load %arg3[%c0_2, %c0_3, %c0_4] : memref<1x128x384xbf16, #tpu.memory_space<vmem>>, vector<1x128x384xbf16>
    %6 = vector.shape_cast %5 : vector<1x128x384xbf16> to vector<128x384xbf16>
    %cst = arith.constant dense<0.000000e+00> : vector<8x384xf32>
    %7 = tpu.matmul %4, %6, %cst {dimension_numbers = #tpu.dot_dimension_numbers<[1], [0], [0], [1], [0, 0, 1, 1], [], []>} : vector<8x128xbf16>, vector<128x384xbf16>, vector<8x384xf32> -> vector<8x384xf32>
    %c0_5 = arith.constant 0 : index
    %c0_6 = arith.constant 0 : index
    %c0_7 = arith.constant 0 : index
    %8 = vector.load %arg4[%c0_5, %c0_6, %c0_7] : memref<1x1x384xf32, #tpu.memory_space<vmem>>, vector<1x1x384xf32>
    %9 = vector.shape_cast %8 : vector<1x1x384xf32> to vector<1x384xf32>
    %10 = vector.broadcast %9 : vector<1x384xf32> to vector<8x384xf32>
    %11 = arith.addf %7, %10 : vector<8x384xf32>
    %12 = vector.extract_strided_slice %11 {offsets = [0, 0], sizes = [8, 64], strides = [1, 1]} : vector<8x384xf32> to vector<8x64xf32>
    %13 = vector.extract_strided_slice %11 {offsets = [0, 128], sizes = [8, 64], strides = [1, 1]} : vector<8x384xf32> to vector<8x64xf32>
    %14 = vector.extract_strided_slice %11 {offsets = [0, 256], sizes = [8, 64], strides = [1, 1]} : vector<8x384xf32> to vector<8x64xf32>
    %cst_8 = arith.constant dense<0.000000e+00> : vector<8x8xf32>
    %15 = tpu.matmul %12, %13, %cst_8 {dimension_numbers = #tpu.dot_dimension_numbers<[1], [1], [0], [0], [0, 0, 1, 0], [], []>} : vector<8x64xf32>, vector<8x64xf32>, vector<8x8xf32> -> vector<8x8xf32>
    %cst_9 = arith.constant 1.250000e-01 : f32
    %16 = vector.broadcast %cst_9 : f32 to vector<8x8xf32>
    %17 = arith.mulf %15, %16 : vector<8x8xf32>
    %c0_10 = arith.constant 0 : index
    %c0_11 = arith.constant 0 : index
    %18 = vector.load %arg2[%c0_10, %c0_11] : memref<8x8xf32, #tpu.memory_space<vmem>>, vector<8x8xf32>
    %19 = arith.addf %17, %18 : vector<8x8xf32>
    %cst_12 = arith.constant dense<0xFF800000> : vector<8xf32>
    %20 = vector.multi_reduction <maximumf>, %19, %cst_12 [1] : vector<8x8xf32> to vector<8xf32>
    %21 = vector.shape_cast %20 : vector<8xf32> to vector<8x1xf32>
    %22 = vector.broadcast %21 : vector<8x1xf32> to vector<8x8xf32>
    %23 = arith.subf %19, %22 : vector<8x8xf32>
    %24 = math.exp %23 : vector<8x8xf32>
    %cst_13 = arith.constant dense<0.000000e+00> : vector<8xf32>
    %25 = vector.multi_reduction <add>, %24, %cst_13 [1] : vector<8x8xf32> to vector<8xf32>
    %26 = vector.shape_cast %25 : vector<8xf32> to vector<8x1xf32>
    %27 = tpu.reciprocal %26 {approx = true} : vector<8x1xf32> -> vector<8x1xf32>
    %28 = vector.broadcast %27 : vector<8x1xf32> to vector<8x8xf32>
    %29 = arith.mulf %24, %28 : vector<8x8xf32>
    %cst_14 = arith.constant dense<0.000000e+00> : vector<8x64xf32>
    %30 = tpu.matmul %29, %14, %cst_14 {dimension_numbers = #tpu.dot_dimension_numbers<[1], [0], [0], [1], [0, 0, 1, 1], [], []>} : vector<8x8xf32>, vector<8x64xf32>, vector<8x64xf32> -> vector<8x64xf32>
    %31 = vector.extract_strided_slice %11 {offsets = [0, 64], sizes = [8, 64], strides = [1, 1]} : vector<8x384xf32> to vector<8x64xf32>
    %32 = vector.extract_strided_slice %11 {offsets = [0, 192], sizes = [8, 64], strides = [1, 1]} : vector<8x384xf32> to vector<8x64xf32>
    %33 = vector.extract_strided_slice %11 {offsets = [0, 320], sizes = [8, 64], strides = [1, 1]} : vector<8x384xf32> to vector<8x64xf32>
    %cst_15 = arith.constant dense<0.000000e+00> : vector<8x8xf32>
    %34 = tpu.matmul %31, %32, %cst_15 {dimension_numbers = #tpu.dot_dimension_numbers<[1], [1], [0], [0], [0, 0, 1, 0], [], []>} : vector<8x64xf32>, vector<8x64xf32>, vector<8x8xf32> -> vector<8x8xf32>
    %cst_16 = arith.constant 1.250000e-01 : f32
    %35 = vector.broadcast %cst_16 : f32 to vector<8x8xf32>
    %36 = arith.mulf %34, %35 : vector<8x8xf32>
    %c0_17 = arith.constant 0 : index
    %c0_18 = arith.constant 0 : index
    %37 = vector.load %arg2[%c0_17, %c0_18] : memref<8x8xf32, #tpu.memory_space<vmem>>, vector<8x8xf32>
    %38 = arith.addf %36, %37 : vector<8x8xf32>
    %cst_19 = arith.constant dense<0xFF800000> : vector<8xf32>
    %39 = vector.multi_reduction <maximumf>, %38, %cst_19 [1] : vector<8x8xf32> to vector<8xf32>
    %40 = vector.shape_cast %39 : vector<8xf32> to vector<8x1xf32>
    %41 = vector.broadcast %40 : vector<8x1xf32> to vector<8x8xf32>
    %42 = arith.subf %38, %41 : vector<8x8xf32>
    %43 = math.exp %42 : vector<8x8xf32>
    %cst_20 = arith.constant dense<0.000000e+00> : vector<8xf32>
    %44 = vector.multi_reduction <add>, %43, %cst_20 [1] : vector<8x8xf32> to vector<8xf32>
    %45 = vector.shape_cast %44 : vector<8xf32> to vector<8x1xf32>
    %46 = tpu.reciprocal %45 {approx = true} : vector<8x1xf32> -> vector<8x1xf32>
    %47 = vector.broadcast %46 : vector<8x1xf32> to vector<8x8xf32>
    %48 = arith.mulf %43, %47 : vector<8x8xf32>
    %cst_21 = arith.constant dense<0.000000e+00> : vector<8x64xf32>
    %49 = tpu.matmul %48, %33, %cst_21 {dimension_numbers = #tpu.dot_dimension_numbers<[1], [0], [0], [1], [0, 0, 1, 1], [], []>} : vector<8x8xf32>, vector<8x64xf32>, vector<8x64xf32> -> vector<8x64xf32>
    %50 = tpu.concatenate %30, %49 in 1 : vector<8x64xf32>, vector<8x64xf32> -> vector<8x128xf32>
    %51 = arith.truncf %50 : vector<8x128xf32> to vector<8x128xbf16>
    %c0_22 = arith.constant 0 : index
    %c0_23 = arith.constant 0 : index
    %c0_24 = arith.constant 0 : index
    %52 = vector.load %arg5[%c0_22, %c0_23, %c0_24] : memref<1x128x128xbf16, #tpu.memory_space<vmem>>, vector<1x128x128xbf16>
    %53 = vector.shape_cast %52 : vector<1x128x128xbf16> to vector<128x128xbf16>
    %cst_25 = arith.constant dense<0.000000e+00> : vector<8x128xf32>
    %54 = tpu.matmul %51, %53, %cst_25 {dimension_numbers = #tpu.dot_dimension_numbers<[1], [0], [0], [1], [0, 0, 1, 1], [], []>} : vector<8x128xbf16>, vector<128x128xbf16>, vector<8x128xf32> -> vector<8x128xf32>
    %c0_26 = arith.constant 0 : index
    %c0_27 = arith.constant 0 : index
    %c0_28 = arith.constant 0 : index
    %55 = vector.load %arg6[%c0_26, %c0_27, %c0_28] : memref<1x1x128xf32, #tpu.memory_space<vmem>>, vector<1x1x128xf32>
    %56 = vector.shape_cast %55 : vector<1x1x128xf32> to vector<1x128xf32>
    %57 = vector.broadcast %56 : vector<1x128xf32> to vector<8x128xf32>
    %58 = arith.addf %54, %57 : vector<8x128xf32>
    %59 = arith.addf %58, %3 : vector<8x128xf32>
    %c0_29 = arith.constant 0 : index
    %c0_30 = arith.constant 0 : index
    %c0_31 = arith.constant 0 : index
    %60 = vector.load %arg7[%c0_29, %c0_30, %c0_31] : memref<1x1x128xf32, #tpu.memory_space<vmem>>, vector<1x1x128xf32>
    %61 = vector.shape_cast %60 : vector<1x1x128xf32> to vector<1x128xf32>
    %c0_32 = arith.constant 0 : index
    %c0_33 = arith.constant 0 : index
    %c0_34 = arith.constant 0 : index
    %62 = vector.load %arg8[%c0_32, %c0_33, %c0_34] : memref<1x1x128xf32, #tpu.memory_space<vmem>>, vector<1x1x128xf32>
    %63 = vector.shape_cast %62 : vector<1x1x128xf32> to vector<1x128xf32>
    %cst_35 = arith.constant dense<0.000000e+00> : vector<8xf32>
    %64 = vector.multi_reduction <add>, %59, %cst_35 [1] : vector<8x128xf32> to vector<8xf32>
    %65 = vector.shape_cast %64 : vector<8xf32> to vector<8x1xf32>
    %cst_36 = arith.constant 1.280000e+02 : f32
    %66 = vector.broadcast %cst_36 : f32 to vector<8x1xf32>
    %67 = arith.divf %65, %66 : vector<8x1xf32>
    %68 = vector.broadcast %67 : vector<8x1xf32> to vector<8x128xf32>
    %69 = arith.subf %59, %68 : vector<8x128xf32>
    %70 = arith.mulf %69, %69 : vector<8x128xf32>
    %cst_37 = arith.constant dense<0.000000e+00> : vector<8xf32>
    %71 = vector.multi_reduction <add>, %70, %cst_37 [1] : vector<8x128xf32> to vector<8xf32>
    %72 = vector.shape_cast %71 : vector<8xf32> to vector<8x1xf32>
    %cst_38 = arith.constant 1.280000e+02 : f32
    %73 = vector.broadcast %cst_38 : f32 to vector<8x1xf32>
    %74 = arith.divf %72, %73 : vector<8x1xf32>
    %75 = vector.broadcast %67 : vector<8x1xf32> to vector<8x128xf32>
    %76 = arith.subf %59, %75 : vector<8x128xf32>
    %cst_39 = arith.constant 9.99999974E-6 : f32
    %77 = vector.broadcast %cst_39 : f32 to vector<8x1xf32>
    %78 = arith.addf %74, %77 : vector<8x1xf32>
    %79 = math.rsqrt %78 : vector<8x1xf32>
    %80 = vector.broadcast %79 : vector<8x1xf32> to vector<8x128xf32>
    %81 = arith.mulf %76, %80 : vector<8x128xf32>
    %82 = vector.broadcast %61 : vector<1x128xf32> to vector<8x128xf32>
    %83 = arith.mulf %81, %82 : vector<8x128xf32>
    %84 = vector.broadcast %63 : vector<1x128xf32> to vector<8x128xf32>
    %85 = arith.addf %83, %84 : vector<8x128xf32>
    %86 = arith.truncf %85 : vector<8x128xf32> to vector<8x128xbf16>
    %c0_40 = arith.constant 0 : index
    %c0_41 = arith.constant 0 : index
    %c0_42 = arith.constant 0 : index
    %87 = vector.load %arg9[%c0_40, %c0_41, %c0_42] : memref<1x128x256xbf16, #tpu.memory_space<vmem>>, vector<1x128x256xbf16>
    %88 = vector.shape_cast %87 : vector<1x128x256xbf16> to vector<128x256xbf16>
    %cst_43 = arith.constant dense<0.000000e+00> : vector<8x256xf32>
    %89 = tpu.matmul %86, %88, %cst_43 {dimension_numbers = #tpu.dot_dimension_numbers<[1], [0], [0], [1], [0, 0, 1, 1], [], []>} : vector<8x128xbf16>, vector<128x256xbf16>, vector<8x256xf32> -> vector<8x256xf32>
    %c0_44 = arith.constant 0 : index
    %c0_45 = arith.constant 0 : index
    %c0_46 = arith.constant 0 : index
    %90 = vector.load %arg10[%c0_44, %c0_45, %c0_46] : memref<1x1x256xf32, #tpu.memory_space<vmem>>, vector<1x1x256xf32>
    %91 = vector.shape_cast %90 : vector<1x1x256xf32> to vector<1x256xf32>
    %92 = vector.broadcast %91 : vector<1x256xf32> to vector<8x256xf32>
    %93 = arith.addf %89, %92 : vector<8x256xf32>
    %cst_47 = arith.constant 0.000000e+00 : f32
    %94 = vector.broadcast %cst_47 : f32 to vector<8x256xf32>
    %95 = arith.maximumf %93, %94 : vector<8x256xf32>
    %96 = arith.truncf %95 : vector<8x256xf32> to vector<8x256xbf16>
    %c0_48 = arith.constant 0 : index
    %c0_49 = arith.constant 0 : index
    %c0_50 = arith.constant 0 : index
    %97 = vector.load %arg11[%c0_48, %c0_49, %c0_50] : memref<1x256x128xbf16, #tpu.memory_space<vmem>>, vector<1x256x128xbf16>
    %98 = vector.shape_cast %97 : vector<1x256x128xbf16> to vector<256x128xbf16>
    %cst_51 = arith.constant dense<0.000000e+00> : vector<8x128xf32>
    %99 = tpu.matmul %96, %98, %cst_51 {dimension_numbers = #tpu.dot_dimension_numbers<[1], [0], [0], [1], [0, 0, 1, 1], [], []>} : vector<8x256xbf16>, vector<256x128xbf16>, vector<8x128xf32> -> vector<8x128xf32>
    %c0_52 = arith.constant 0 : index
    %c0_53 = arith.constant 0 : index
    %c0_54 = arith.constant 0 : index
    %100 = vector.load %arg12[%c0_52, %c0_53, %c0_54] : memref<1x1x128xf32, #tpu.memory_space<vmem>>, vector<1x1x128xf32>
    %101 = vector.shape_cast %100 : vector<1x1x128xf32> to vector<1x128xf32>
    %102 = vector.broadcast %101 : vector<1x128xf32> to vector<8x128xf32>
    %103 = arith.addf %99, %102 : vector<8x128xf32>
    %104 = arith.addf %103, %85 : vector<8x128xf32>
    %c0_55 = arith.constant 0 : index
    %c0_56 = arith.constant 0 : index
    %c0_57 = arith.constant 0 : index
    %105 = vector.load %arg13[%c0_55, %c0_56, %c0_57] : memref<1x1x128xf32, #tpu.memory_space<vmem>>, vector<1x1x128xf32>
    %106 = vector.shape_cast %105 : vector<1x1x128xf32> to vector<1x128xf32>
    %c0_58 = arith.constant 0 : index
    %c0_59 = arith.constant 0 : index
    %c0_60 = arith.constant 0 : index
    %107 = vector.load %arg14[%c0_58, %c0_59, %c0_60] : memref<1x1x128xf32, #tpu.memory_space<vmem>>, vector<1x1x128xf32>
    %108 = vector.shape_cast %107 : vector<1x1x128xf32> to vector<1x128xf32>
    %cst_61 = arith.constant dense<0.000000e+00> : vector<8xf32>
    %109 = vector.multi_reduction <add>, %104, %cst_61 [1] : vector<8x128xf32> to vector<8xf32>
    %110 = vector.shape_cast %109 : vector<8xf32> to vector<8x1xf32>
    %cst_62 = arith.constant 1.280000e+02 : f32
    %111 = vector.broadcast %cst_62 : f32 to vector<8x1xf32>
    %112 = arith.divf %110, %111 : vector<8x1xf32>
    %113 = vector.broadcast %112 : vector<8x1xf32> to vector<8x128xf32>
    %114 = arith.subf %104, %113 : vector<8x128xf32>
    %115 = arith.mulf %114, %114 : vector<8x128xf32>
    %cst_63 = arith.constant dense<0.000000e+00> : vector<8xf32>
    %116 = vector.multi_reduction <add>, %115, %cst_63 [1] : vector<8x128xf32> to vector<8xf32>
    %117 = vector.shape_cast %116 : vector<8xf32> to vector<8x1xf32>
    %cst_64 = arith.constant 1.280000e+02 : f32
    %118 = vector.broadcast %cst_64 : f32 to vector<8x1xf32>
    %119 = arith.divf %117, %118 : vector<8x1xf32>
    %120 = vector.broadcast %112 : vector<8x1xf32> to vector<8x128xf32>
    %121 = arith.subf %104, %120 : vector<8x128xf32>
    %cst_65 = arith.constant 9.99999974E-6 : f32
    %122 = vector.broadcast %cst_65 : f32 to vector<8x1xf32>
    %123 = arith.addf %119, %122 : vector<8x1xf32>
    %124 = math.rsqrt %123 : vector<8x1xf32>
    %125 = vector.broadcast %124 : vector<8x1xf32> to vector<8x128xf32>
    %126 = arith.mulf %121, %125 : vector<8x128xf32>
    %127 = vector.broadcast %106 : vector<1x128xf32> to vector<8x128xf32>
    %128 = arith.mulf %126, %127 : vector<8x128xf32>
    %129 = vector.broadcast %108 : vector<1x128xf32> to vector<8x128xf32>
    %130 = arith.addf %128, %129 : vector<8x128xf32>
    %c0_66 = arith.constant 0 : index
    %c0_67 = arith.constant 0 : index
    %131 = vector.load %arg18[%c0_66, %c0_67] : memref<8x128xf32, #tpu.memory_space<vmem>>, vector<8x128xf32>
    tpu.vector_store %arg18[%c0_66, %c0_67], %130 {strides = array<i32>} : memref<8x128xf32, #tpu.memory_space<vmem>>, vector<8x128xf32>,
    %c1_i32 = arith.constant 1 : i32
    %132 = arith.cmpi eq, %arg0, %c1_i32 : i32
    %133 = arith.extui %132 : i1 to i32
    %c0_i32_68 = arith.constant 0 : i32
    %134 = arith.cmpi ne, %133, %c0_i32_68 : i32
    scf.if %134 {
      %135 = tpu.iota {dimensions = array<i32: 0>} : vector<2x8xi32>
      %136 = tpu.iota {dimensions = array<i32: 1>} : vector<2x8xi32>
      %c4_i32 = arith.constant 4 : i32
      %137 = vector.broadcast %c4_i32 : i32 to vector<2x8xi32>
      %138 = arith.muli %135, %137 : vector<2x8xi32>
      %139 = arith.cmpi sge, %136, %138 : vector<2x8xi32>
      %c1_i32_69 = arith.constant 1 : i32
      %140 = vector.broadcast %c1_i32_69 : i32 to vector<2x8xi32>
      %141 = arith.addi %135, %140 : vector<2x8xi32>
      %c4_i32_70 = arith.constant 4 : i32
      %142 = vector.broadcast %c4_i32_70 : i32 to vector<2x8xi32>
      %143 = arith.muli %141, %142 : vector<2x8xi32>
      %144 = arith.cmpi slt, %136, %143 : vector<2x8xi32>
      %145 = arith.andi %139, %144 : vector<2x8xi1>
      %cst_71 = arith.constant 2.500000e-01 : f32
      %cst_72 = arith.constant 0.000000e+00 : f32
      %146 = vector.broadcast %cst_71 : f32 to vector<2x8xf32>
      %147 = vector.broadcast %cst_72 : f32 to vector<2x8xf32>
      %148 = arith.select %145, %146, %147 : vector<2x8xi1>, vector<2x8xf32>
      %cst_73 = arith.constant dense<0.000000e+00> : vector<2x128xf32>
      %149 = tpu.matmul %148, %130, %cst_73 {dimension_numbers = #tpu.dot_dimension_numbers<[1], [0], [0], [1], [0, 0, 1, 1], [], []>} : vector<2x8xf32>, vector<8x128xf32>, vector<2x128xf32> -> vector<2x128xf32>
      %c0_74 = arith.constant 0 : index
      %c0_75 = arith.constant 0 : index
      %150 = vector.load %arg15[%c0_74, %c0_75] : memref<128x6xf32, #tpu.memory_space<vmem>>, vector<128x6xf32>
      %cst_76 = arith.constant dense<0.000000e+00> : vector<2x6xf32>
      %151 = tpu.matmul %149, %150, %cst_76 {dimension_numbers = #tpu.dot_dimension_numbers<[1], [0], [0], [1], [0, 0, 1, 1], [], []>} : vector<2x128xf32>, vector<128x6xf32>, vector<2x6xf32> -> vector<2x6xf32>
      %c0_77 = arith.constant 0 : index
      %c0_78 = arith.constant 0 : index
      %152 = vector.load %arg16[%c0_77, %c0_78] : memref<1x6xf32, #tpu.memory_space<vmem>>, vector<1x6xf32>
      %153 = vector.broadcast %152 : vector<1x6xf32> to vector<2x6xf32>
      %154 = arith.addf %151, %153 : vector<2x6xf32>
      %c0_79 = arith.constant 0 : index
      %c0_80 = arith.constant 0 : index
      %155 = vector.load %arg17[%c0_79, %c0_80] : memref<2x6xf32, #tpu.memory_space<vmem>>, vector<2x6xf32>
      tpu.vector_store %arg17[%c0_79, %c0_80], %154 {strides = array<i32>} : memref<2x6xf32, #tpu.memory_space<vmem>>, vector<2x6xf32>,
    } else {
    }
    return
  }
  func.func @transform_0(%arg0: i32) -> (i32, i32) {
    %c0_i32 = arith.constant 0 : i32
    %c0_i32_0 = arith.constant 0 : i32
    %c0_i32_1 = arith.constant 0 : i32
    return %c0_i32, %c0_i32_0 : i32, i32
  }
  func.func @transform_1(%arg0: i32) -> (i32, i32) {
    %c0_i32 = arith.constant 0 : i32
    %c0_i32_0 = arith.constant 0 : i32
    %c0_i32_1 = arith.constant 0 : i32
    return %c0_i32, %c0_i32_0 : i32, i32
  }
  func.func @transform_2(%arg0: i32) -> (i32, i32, i32) {
    %c0_i32 = arith.constant 0 : i32
    %c0_i32_0 = arith.constant 0 : i32
    %c0_i32_1 = arith.constant 0 : i32
    return %arg0, %c0_i32, %c0_i32_0 : i32, i32, i32
  }
  func.func @transform_3(%arg0: i32) -> (i32, i32, i32) {
    %c0_i32 = arith.constant 0 : i32
    %c0_i32_0 = arith.constant 0 : i32
    %c0_i32_1 = arith.constant 0 : i32
    return %arg0, %c0_i32, %c0_i32_0 : i32, i32, i32
  }
  func.func @transform_4(%arg0: i32) -> (i32, i32, i32) {
    %c0_i32 = arith.constant 0 : i32
    %c0_i32_0 = arith.constant 0 : i32
    %c0_i32_1 = arith.constant 0 : i32
    return %arg0, %c0_i32, %c0_i32_0 : i32, i32, i32
  }
  func.func @transform_5(%arg0: i32) -> (i32, i32, i32) {
    %c0_i32 = arith.constant 0 : i32
    %c0_i32_0 = arith.constant 0 : i32
    %c0_i32_1 = arith.constant 0 : i32
    return %arg0, %c0_i32, %c0_i32_0 : i32, i32, i32
  }
  func.func @transform_6(%arg0: i32) -> (i32, i32, i32) {
    %c0_i32 = arith.constant 0 : i32
    %c0_i32_0 = arith.constant 0 : i32
    %c0_i32_1 = arith.constant 0 : i32
    return %arg0, %c0_i32, %c0_i32_0 : i32, i32, i32
  }
  func.func @transform_7(%arg0: i32) -> (i32, i32, i32) {
    %c0_i32 = arith.constant 0 : i32
    %c0_i32_0 = arith.constant 0 : i32
    %c0_i32_1 = arith.constant 0 : i32
    return %arg0, %c0_i32, %c0_i32_0 : i32, i32, i32
  }
  func.func @transform_8(%arg0: i32) -> (i32, i32, i32) {
    %c0_i32 = arith.constant 0 : i32
    %c0_i32_0 = arith.constant 0 : i32
    %c0_i32_1 = arith.constant 0 : i32
    return %arg0, %c0_i32, %c0_i32_0 : i32, i32, i32
  }
  func.func @transform_9(%arg0: i32) -> (i32, i32, i32) {
    %c0_i32 = arith.constant 0 : i32
    %c0_i32_0 = arith.constant 0 : i32
    %c0_i32_1 = arith.constant 0 : i32
    return %arg0, %c0_i32, %c0_i32_0 : i32, i32, i32
  }
  func.func @transform_10(%arg0: i32) -> (i32, i32, i32) {
    %c0_i32 = arith.constant 0 : i32
    %c0_i32_0 = arith.constant 0 : i32
    %c0_i32_1 = arith.constant 0 : i32
    return %arg0, %c0_i32, %c0_i32_0 : i32, i32, i32
  }
  func.func @transform_11(%arg0: i32) -> (i32, i32, i32) {
    %c0_i32 = arith.constant 0 : i32
    %c0_i32_0 = arith.constant 0 : i32
    %c0_i32_1 = arith.constant 0 : i32
    return %arg0, %c0_i32, %c0_i32_0 : i32, i32, i32
  }
  func.func @transform_12(%arg0: i32) -> (i32, i32, i32) {
    %c0_i32 = arith.constant 0 : i32
    %c0_i32_0 = arith.constant 0 : i32
    %c0_i32_1 = arith.constant 0 : i32
    return %arg0, %c0_i32, %c0_i32_0 : i32, i32, i32
  }
  func.func @transform_13(%arg0: i32) -> (i32, i32, i32) {
    %c0_i32 = arith.constant 0 : i32
    %c0_i32_0 = arith.constant 0 : i32
    %c0_i32_1 = arith.constant 0 : i32
    return %arg0, %c0_i32, %c0_i32_0 : i32, i32, i32
  }
  func.func @transform_14(%arg0: i32) -> (i32, i32) {
    %c0_i32 = arith.constant 0 : i32
    %c0_i32_0 = arith.constant 0 : i32
    %c0_i32_1 = arith.constant 0 : i32
    return %c0_i32, %c0_i32_0 : i32, i32
  }
  func.func @transform_15(%arg0: i32) -> (i32, i32) {
    %c0_i32 = arith.constant 0 : i32
    %c0_i32_0 = arith.constant 0 : i32
    %c0_i32_1 = arith.constant 0 : i32
    return %c0_i32, %c0_i32_0 : i32, i32
  }
  func.func @transform_16(%arg0: i32) -> (i32, i32) {
    %c0_i32 = arith.constant 0 : i32
    %c0_i32_0 = arith.constant 0 : i32
    %c0_i32_1 = arith.constant 0 : i32
    return %c0_i32, %c0_i32_0 : i32, i32
  }
}

</mosaic_0001>

<llo_original>
// kernel: forward.2
$region0: #{forward.2}
  #allocation0 [shape = 'u32[]', space=smem, size = 0x4, offset = 0x4, fixed_abs, tag = 'smem constant byte address 0x4 - core index']
  #allocation1 [shape = 'u32[144,128]{1,0:T(1,128)}', space=vmem, size = 0x12000, scoped, tag = 'internal scratch']
  %s0 = inlined_call_operand.vmem [shape: f32[8,18,64], index: 0, kind: input, shape index: {}]
  %s1 = inlined_call_operand.vmem [shape: bf16[3,64,512], index: 1, kind: input, shape index: {}]
  %s2 = inlined_call_operand.vmem [shape: f32[1,512], index: 2, kind: input, shape index: {}]
  %s3 = inlined_call_operand.vmem [shape: bf16[512,128], index: 3, kind: input, shape index: {}]
  %s4 = inlined_call_operand.vmem [shape: f32[1,128], index: 4, kind: input, shape index: {}]
  %s5 = inlined_call_operand.vmem [shape: f32[8,1,128], index: 5, kind: input, shape index: {}]
  %s6 = inlined_call_operand.vmem [shape: f32[8,1,128], index: 6, kind: output, shape index: {}]
  %s7 = sld [smem:[#allocation0]]
  $region57: #{forward.2} parent=0
    _
  %s9 = ssub.s32 1, %s7
  %s10 = scalar_select 0, %s9, %s7
  loop: start=0, step=1, limit=10
  $region2: #{forward.2} parent=0 // loop_pre_header
    _
  $region3: #{forward.2} parent=0 // loop_header
    %s12 = sphi 0, %s16
    %p13 = scmp.ge.s32.totalorder %s12, 10
    %s22 = sphi 0, %s24
    %s25 = sphi 0, %s22
    %s26 = sphi 0, %s25
    %s42 = sphi 0, %s26
    %s46 = sphi 0, %s46
    %s48 = sphi 0, %s46
    %s49 = sphi 0, %s48
    %s63 = sphi 0, %s49
    %s67 = sphi 0, %s67
    %s69 = sphi 0, %s67
    %s70 = sphi 0, %s69
    %s84 = sphi 0, %s70
    %s88 = sphi 0, %s88
    %s90 = sphi 0, %s88
    %s91 = sphi 0, %s90
    %s105 = sphi 0, %s91
    %s109 = sphi 0, %s109
    %s111 = sphi 0, %s109
    %s112 = sphi 0, %s111
    %s126 = sphi 0, %s112
    %s132 = sphi 0, %s134
    %s135 = sphi 0, %s132
    %s136 = sphi 0, %s135
    %s152 = sphi 0, %s136
    %s158 = sphi 0, %s160
    %s161 = sphi 0, %s158
    %s162 = sphi 0, %s161
    %s178 = sphi 0, %s162
  $region4: #{forward.2} parent=0 // loop_header_branch
    %15 = sbr.rel (%p13) target = $region8
  $region5: #{forward.2} parent=0 // loop_body
    %s17 = ssub.s32 %s12, 1
    %s18 = ssub.s32 %s12, 2
    %s19 = sadd.s32 %s12, 1
    %s20 = ssub.s32 %s12, %s19
    %p21 = scmp.eq.s32.totalorder %s20, 0
    %s23 = sadd.s32 %s22, 1
    %s24 = scalar_select %p21, %s22, %s23
    %p27 = pneg %p21
    %p28 = scmp.eq.s32.totalorder %s12, 7
    %p29 = por %p27, %p28
    %p30 = scmp.ne.s32.totalorder %s22, %s25
    %p31 = scmp.eq.s32.totalorder %s12, 0
    %p32 = por %p30, %p31
    %p33 = scmp.ne.s32.totalorder %s22, %s25
    %p34 = scmp.eq.s32.totalorder %s17, 7
    %p35 = por %p33, %p34
    %p36 = scmp.ne.s32.totalorder %s25, %s26
    %p37 = scmp.eq.s32.totalorder %s17, 0
    %p38 = por %p36, %p37
    %p39 = scmp.ne.s32.totalorder %s25, %s26
    %p40 = scmp.eq.s32.totalorder %s18, 7
    %p41 = por %p39, %p40
    %p43 = scmp.ne.s32.totalorder %s26, %s42
    %p44 = scmp.eq.s32.totalorder %s18, 0
    %p45 = por %p43, %p44
    %s47 = sadd.s32 %s46, 1
    %p50 = scmp.eq.s32.totalorder %s12, 7
    %p51 = scmp.ne.s32.totalorder %s46, %s48
    %p52 = scmp.eq.s32.totalorder %s12, 0
    %p53 = por %p51, %p52
    %p54 = scmp.ne.s32.totalorder %s46, %s48
    %p55 = scmp.eq.s32.totalorder %s17, 7
    %p56 = por %p54, %p55
    %p57 = scmp.ne.s32.totalorder %s48, %s49
    %p58 = scmp.eq.s32.totalorder %s17, 0
    %p59 = por %p57, %p58
    %p60 = scmp.ne.s32.totalorder %s48, %s49
    %p61 = scmp.eq.s32.totalorder %s18, 7
    %p62 = por %p60, %p61
    %p64 = scmp.ne.s32.totalorder %s49, %s63
    %p65 = scmp.eq.s32.totalorder %s18, 0
    %p66 = por %p64, %p65
    %s68 = sadd.s32 %s67, 1
    %p71 = scmp.eq.s32.totalorder %s12, 7
    %p72 = scmp.ne.s32.totalorder %s67, %s69
    %p73 = scmp.eq.s32.totalorder %s12, 0
    %p74 = por %p72, %p73
    %p75 = scmp.ne.s32.totalorder %s67, %s69
    %p76 = scmp.eq.s32.totalorder %s17, 7
    %p77 = por %p75, %p76
    %p78 = scmp.ne.s32.totalorder %s69, %s70
    %p79 = scmp.eq.s32.totalorder %s17, 0
    %p80 = por %p78, %p79
    %p81 = scmp.ne.s32.totalorder %s69, %s70
    %p82 = scmp.eq.s32.totalorder %s18, 7
    %p83 = por %p81, %p82
    %p85 = scmp.ne.s32.totalorder %s70, %s84
    %p86 = scmp.eq.s32.totalorder %s18, 0
    %p87 = por %p85, %p86
    %s89 = sadd.s32 %s88, 1
    %p92 = scmp.eq.s32.totalorder %s12, 7
    %p93 = scmp.ne.s32.totalorder %s88, %s90
    %p94 = scmp.eq.s32.totalorder %s12, 0
    %p95 = por %p93, %p94
    %p96 = scmp.ne.s32.totalorder %s88, %s90
    %p97 = scmp.eq.s32.totalorder %s17, 7
    %p98 = por %p96, %p97
    %p99 = scmp.ne.s32.totalorder %s90, %s91
    %p100 = scmp.eq.s32.totalorder %s17, 0
    %p101 = por %p99, %p100
    %p102 = scmp.ne.s32.totalorder %s90, %s91
    %p103 = scmp.eq.s32.totalorder %s18, 7
    %p104 = por %p102, %p103
    %p106 = scmp.ne.s32.totalorder %s91, %s105
    %p107 = scmp.eq.s32.totalorder %s18, 0
    %p108 = por %p106, %p107
    %s110 = sadd.s32 %s109, 1
    %p113 = scmp.eq.s32.totalorder %s12, 7
    %p114 = scmp.ne.s32.totalorder %s109, %s111
    %p115 = scmp.eq.s32.totalorder %s12, 0
    %p116 = por %p114, %p115
    %p117 = scmp.ne.s32.totalorder %s109, %s111
    %p118 = scmp.eq.s32.totalorder %s17, 7
    %p119 = por %p117, %p118
    %p120 = scmp.ne.s32.totalorder %s111, %s112
    %p121 = scmp.eq.s32.totalorder %s17, 0
    %p122 = por %p120, %p121
    %p123 = scmp.ne.s32.totalorder %s111, %s112
    %p124 = scmp.eq.s32.totalorder %s18, 7
    %p125 = por %p123, %p124
    %p127 = scmp.ne.s32.totalorder %s112, %s126
    %p128 = scmp.eq.s32.totalorder %s18, 0
    %p129 = por %p127, %p128
    %s130 = ssub.s32 %s12, %s19
    %p131 = scmp.eq.s32.totalorder %s130, 0
    %s133 = sadd.s32 %s132, 1
    %s134 = scalar_select %p131, %s132, %s133
    %p137 = pneg %p131
    %p138 = scmp.eq.s32.totalorder %s12, 7
    %p139 = por %p137, %p138
    %p140 = scmp.ne.s32.totalorder %s132, %s135
    %p141 = scmp.eq.s32.totalorder %s12, 0
    %p142 = por %p140, %p141
    %p143 = scmp.ne.s32.totalorder %s132, %s135
    %p144 = scmp.eq.s32.totalorder %s17, 7
    %p145 = por %p143, %p144
    %p146 = scmp.ne.s32.totalorder %s135, %s136
    %p147 = scmp.eq.s32.totalorder %s17, 0
    %p148 = por %p146, %p147
    %p149 = scmp.ne.s32.totalorder %s135, %s136
    %p150 = scmp.eq.s32.totalorder %s18, 7
    %p151 = por %p149, %p150
    %p153 = scmp.ne.s32.totalorder %s136, %s152
    %p154 = scmp.eq.s32.totalorder %s18, 0
    %p155 = por %p153, %p154
    %s156 = ssub.s32 %s12, %s19
    %p157 = scmp.eq.s32.totalorder %s156, 0
    %s159 = sadd.s32 %s158, 1
    %s160 = scalar_select %p157, %s158, %s159
    %p163 = pneg %p157
    %p164 = scmp.eq.s32.totalorder %s12, 7
    %p165 = por %p163, %p164
    %p166 = scmp.ne.s32.totalorder %s158, %s161
    %p167 = scmp.eq.s32.totalorder %s12, 0
    %p168 = por %p166, %p167
    %p169 = scmp.ne.s32.totalorder %s158, %s161
    %p170 = scmp.eq.s32.totalorder %s17, 7
    %p171 = por %p169, %p170
    %p172 = scmp.ne.s32.totalorder %s161, %s162
    %p173 = scmp.eq.s32.totalorder %s17, 0
    %p174 = por %p172, %p173
    %p175 = scmp.ne.s32.totalorder %s161, %s162
    %p176 = scmp.eq.s32.totalorder %s18, 7
    %p177 = por %p175, %p176
    %p179 = scmp.ne.s32.totalorder %s162, %s178
    %p180 = scmp.eq.s32.totalorder %s18, 0
    %p181 = por %p179, %p180
    %p182 = scmp.le.s32.totalorder 1, %s12
    %p183 = scmp.lt.s32.totalorder %s12, 9
    %p184 = pnand %p182, %p183
    %p185 = pneg %p184
    // Predicated region
    $region9: #{forward.2} parent=5 // pred_check
      _
    $region10: #{forward.2} parent=5 // pred_check_branch
      %187 = sbr.rel (%p184) target = $region12
    $region11: #{forward.2} parent=5 // pred_region
      %s188 = ssub.s32 %s12, 1
      // Predicated region
      $region13: #{forward.2} parent=11 // pred_check
        %p189 = pneg %p59
      $region14: #{forward.2} parent=11 // pred_check_branch
        %191 = sbr.rel (%p189) target = $region16
      $region15: #{forward.2} parent=11 // pred_region
        _
      $region16: #{forward.2} parent=11 // pred_fallthru
        _
      // Predicated region
      $region17: #{forward.2} parent=11 // pred_check
        %p192 = pneg %p80
      $region18: #{forward.2} parent=11 // pred_check_branch
        %194 = sbr.rel (%p192) target = $region20
      $region19: #{forward.2} parent=11 // pred_region
        _
      $region20: #{forward.2} parent=11 // pred_fallthru
        _
      // Predicated region
      $region21: #{forward.2} parent=11 // pred_check
        %p195 = pneg %p101
      $region22: #{forward.2} parent=11 // pred_check_branch
        %197 = sbr.rel (%p195) target = $region24
      $region23: #{forward.2} parent=11 // pred_region
        _
      $region24: #{forward.2} parent=11 // pred_fallthru
        _
      // Predicated region
      $region25: #{forward.2} parent=11 // pred_check
        %p198 = pneg %p122
      $region26: #{forward.2} parent=11 // pred_check_branch
        %200 = sbr.rel (%p198) target = $region28
      $region27: #{forward.2} parent=11 // pred_region
        _
      $region28: #{forward.2} parent=11 // pred_fallthru
        _
    $region12: #{forward.2} parent=5 // pred_fallthru
      _
    %p201 = scmp.lt.s32.totalorder %s12, 8
    // Predicated region
    $region29: #{forward.2} parent=5 // pred_check
      %p202 = pneg %p201
    $region30: #{forward.2} parent=5 // pred_check_branch
      %204 = sbr.rel (%p202) target = $region32
    $region31: #{forward.2} parent=5 // pred_region
      // Predicated region
      $region33: #{forward.2} parent=31 // pred_check
        %p205 = pneg %p32
      $region34: #{forward.2} parent=31 // pred_check_branch
        %207 = sbr.rel (%p205) target = $region36
      $region35: #{forward.2} parent=31 // pred_region
        %p208 = scmp.lt.s32.totalorder %s12, 7
        %s209 = scalar_select %p208, %s12, 7
        %s210 = smul.addr %s209, 3
        %s211 = smul.addr %s210, 8
        %s212 = scalar_lea.vmem %s0, %s211
      $region36: #{forward.2} parent=31 // pred_fallthru
        _
      // Predicated region
      $region37: #{forward.2} parent=31 // pred_check
        %p213 = pneg %p142
      $region38: #{forward.2} parent=31 // pred_check_branch
        %215 = sbr.rel (%p213) target = $region40
      $region39: #{forward.2} parent=31 // pred_region
        %p216 = scmp.lt.s32.totalorder %s12, 7
        %s217 = scalar_select %p216, %s12, 7
        %s218 = scalar_lea.vmem %s5, %s217
      $region40: #{forward.2} parent=31 // pred_fallthru
        _
    $region32: #{forward.2} parent=5 // pred_fallthru
      _
    %p219 = scmp.le.s32.totalorder 1, %s12
    %p220 = scmp.lt.s32.totalorder %s12, 9
    %p221 = pnand %p219, %p220
    %p222 = pneg %p221
    // Predicated region
    $region41: #{forward.2} parent=5 // pred_check
      _
    $region42: #{forward.2} parent=5 // pred_check_branch
      %224 = sbr.rel (%p221) target = $region44
    $region43: #{forward.2} parent=5 // pred_region
      %s225 = ssub.s32 %s12, 1
      %p226 = scmp.lt.s32.totalorder %s17, 7
      %s227 = scalar_select %p226, %s17, 7
      %s228 = smul.addr %s227, 3
      %s229 = smul.addr %s228, 8
      %s230 = scalar_lea.vmem %s0, %s229
      %p231 = pneg %p38
      %p232 = pneg %p35
      %p233 = pneg %p59
      %p234 = pneg %p56
      %p235 = pneg %p80
      %p236 = pneg %p77
      %p237 = pneg %p101
      %p238 = pneg %p98
      %p239 = pneg %p122
      %p240 = pneg %p119
      %p241 = scmp.lt.s32.totalorder %s17, 7
      %s242 = scalar_select %p241, %s17, 7
      %s243 = scalar_lea.vmem %s5, %s242
      %p244 = pneg %p148
      %p245 = pneg %p145
      %p246 = pneg %p174
      %p247 = pneg %p171
      %p248 = scmp.lt.s32.totalorder %s17, 7
      %s249 = scalar_select %p248, %s17, 7
      %s250 = scalar_lea.vmem %s6, %s249
      %p251 = scmp.lt.s32.totalorder %s17, 7
      %s252 = scalar_select %p251, %s17, 7
      %s253 = smul.addr %s252, 3
      %s254 = smul.addr %s253, 8
      %s255 = scalar_lea.vmem %s0, %s254
      %p256 = scmp.lt.s32.totalorder %s17, 7
      %s257 = scalar_select %p256, %s17, 7
      %s258 = scalar_lea.vmem %s5, %s257
      %p259 = scmp.lt.s32.totalorder %s17, 7
      %s260 = scalar_select %p259, %s17, 7
      %s261 = scalar_lea.vmem %s6, %s260
      %v263 = vld [vmem:[%s255] sm:$0xff]
      %v264 = vld [vmem:[%s255 + $0x8] sm:$0xff]
      %v265 = vld [vmem:[%s255 + $0x10] sm:$0x3]
      %v266 = vpack.c.bf16 %v264, %v263
      %v267 = vld [vmem:[%s1] sm:$0xff]
      %v268 = vld [vmem:[%s1 + $0x8] sm:$0xff]
      %v269 = vld [vmem:[%s1 + $0x10] sm:$0xff]
      %v270 = vld [vmem:[%s1 + $0x18] sm:$0xff]
      %v271 = vld [vmem:[%s1 + $0x20] sm:$0xff]
      %v272 = vld [vmem:[%s1 + $0x28] sm:$0xff]
      %v273 = vld [vmem:[%s1 + $0x30] sm:$0xff]
      %v274 = vld [vmem:[%s1 + $0x38] sm:$0xff]
      %v275 = vld [vmem:[%s1 + $0x40] sm:$0xff]
      %v276 = vld [vmem:[%s1 + $0x48] sm:$0xff]
      %v277 = vld [vmem:[%s1 + $0x50] sm:$0xff]
      %v278 = vld [vmem:[%s1 + $0x58] sm:$0xff]
      %v279 = vld [vmem:[%s1 + $0x60] sm:$0xff]
      %v280 = vld [vmem:[%s1 + $0x68] sm:$0xff]
      %v281 = vld [vmem:[%s1 + $0x70] sm:$0xff]
      %v282 = vld [vmem:[%s1 + $0x78] sm:$0xff]
      %v283 = vpack.c.bf16 %v265, %v265
      %s284 = scalar_lea.vmem %s1, 128
      %v285 = vld [vmem:[%s284] sm:$0xff]
      %v286 = vld [vmem:[%s284 + $0x8] sm:$0xff]
      %v287 = vld [vmem:[%s284 + $0x10] sm:$0xff]
      %v288 = vld [vmem:[%s284 + $0x18] sm:$0xff]
      %v289 = vld [vmem:[%s284 + $0x20] sm:$0xff]
      %v290 = vld [vmem:[%s284 + $0x28] sm:$0xff]
      %v291 = vld [vmem:[%s284 + $0x30] sm:$0xff]
      %v292 = vld [vmem:[%s284 + $0x38] sm:$0xff]
      %v293 = vld [vmem:[%s284 + $0x40] sm:$0xff]
      %v294 = vld [vmem:[%s284 + $0x48] sm:$0xff]
      %v295 = vld [vmem:[%s284 + $0x50] sm:$0xff]
      %v296 = vld [vmem:[%s284 + $0x58] sm:$0xff]
      %v297 = vld [vmem:[%s284 + $0x60] sm:$0xff]
      %v298 = vld [vmem:[%s284 + $0x68] sm:$0xff]
      %v299 = vld [vmem:[%s284 + $0x70] sm:$0xff]
      %v300 = vld [vmem:[%s284 + $0x78] sm:$0xff]
      %vm301 = vsmask.f32 7424
      %v303 = vshrl.u32 %v266, 16
      %v305 = vshll.u32 %v266, 16
      %v307 = vrot.slane %v305, 1
      %v308 = vor.u32 %v303, %v307
      %v310 = vshll.u32 %v283, 16
      %v312 = vrot.slane %v310, 1
      %v313 = vsel %vm301, %v308, %v312
      %v330 = vunpack.c.l.b16 %v285
      %v331 = vunpack.c.h.b16 %v285
      %v332 = vunpack.c.l.b16 %v286
      %v333 = vunpack.c.h.b16 %v286
      %v334 = vunpack.c.l.b16 %v287
      %v335 = vunpack.c.h.b16 %v287
      %v336 = vunpack.c.l.b16 %v288
      %v337 = vunpack.c.h.b16 %v288
      %v338 = vunpack.c.l.b16 %v289
      %v339 = vunpack.c.h.b16 %v289
      %v340 = vunpack.c.l.b16 %v290
      %v341 = vunpack.c.h.b16 %v290
      %v342 = vunpack.c.l.b16 %v291
      %v343 = vunpack.c.h.b16 %v291
      %v344 = vunpack.c.l.b16 %v292
      %v345 = vunpack.c.h.b16 %v292
      %v346 = vunpack.c.l.b16 %v293
      %v347 = vunpack.c.h.b16 %v293
      %v348 = vunpack.c.l.b16 %v294
      %v349 = vunpack.c.h.b16 %v294
      %v350 = vunpack.c.l.b16 %v295
      %v351 = vunpack.c.h.b16 %v295
      %v352 = vunpack.c.l.b16 %v296
      %v353 = vunpack.c.h.b16 %v296
      %v354 = vunpack.c.l.b16 %v297
      %v355 = vunpack.c.h.b16 %v297
      %v356 = vunpack.c.l.b16 %v298
      %v357 = vunpack.c.h.b16 %v298
      %v358 = vunpack.c.l.b16 %v299
      %v359 = vunpack.c.h.b16 %v299
      %v360 = vunpack.c.l.b16 %v300
      %v361 = vunpack.c.h.b16 %v300
      %v362 = vpack.c.b16 %v334, %v330
      %v363 = vpack.c.b16 %v335, %v331
      %v364 = vpack.c.b16 %v336, %v332
      %v365 = vpack.c.b16 %v337, %v333
      %v366 = vpack.c.b16 %v342, %v338
      %v367 = vpack.c.b16 %v343, %v339
      %v368 = vpack.c.b16 %v344, %v340
      %v369 = vpack.c.b16 %v345, %v341
      %v370 = vpack.c.b16 %v350, %v346
      %v371 = vpack.c.b16 %v351, %v347
      %v372 = vpack.c.b16 %v352, %v348
      %v373 = vpack.c.b16 %v353, %v349
      %v374 = vpack.c.b16 %v358, %v354
      %v375 = vpack.c.b16 %v359, %v355
      %v376 = vpack.c.b16 %v360, %v356
      %v377 = vpack.c.b16 %v361, %v357
      %vm394 = vcmask 523264
      %v396 = vsel %vm394, %v313, 0
      %398 = vmatprep.subr.bf16.mxu0 0
      %399 = vmatpush1.bf16.msra.mxu0 0
      %400 = vmatprep.subr.bf16.mxu0 0
      %401 = vmatpush1.bf16.msra.mxu0 0
      %402 = vmatprep.subr.bf16.mxu0 0
      %403 = vmatpush1.bf16.msra.mxu0 0
      %404 = vmatprep.subr.bf16.mxu0 0
      %405 = vmatpush1.bf16.msra.mxu0 0
      %406 = vmatprep.subr.bf16.mxu0 %v375
      %407 = vmatpush1.bf16.msra.mxu0 %v374
      %408 = vmatprep.subr.bf16.mxu0 %v371
      %409 = vmatpush1.bf16.msra.mxu0 %v370
      %410 = vmatprep.subr.bf16.mxu0 %v367
      %411 = vmatpush1.bf16.msra.mxu0 %v366
      %412 = vmatprep.subr.bf16.mxu0 %v363
      %413 = vmatpush1.bf16.msra.mxu0 %v362
      %414 = vmatprep.subr.bf16.mxu0 0
      %415 = vmatpush2.bf16.msra.mxu0 0
      %416 = vmatprep.subr.bf16.mxu0 0
      %417 = vmatpush2.bf16.msra.mxu0 0
      %418 = vmatprep.subr.bf16.mxu0 0
      %419 = vmatpush2.bf16.msra.mxu0 0
      %420 = vmatprep.subr.bf16.mxu0 0
      %421 = vmatpush2.bf16.msra.mxu0 0
      %422 = vmatprep.subr.bf16.mxu0 0
      %423 = vmatpush2.bf16.msra.mxu0 0
      %424 = vmatprep.subr.bf16.mxu0 0
      %425 = vmatpush2.bf16.msra.mxu0 0
      %426 = vmatprep.subr.bf16.mxu0 0
      %427 = vmatpush2.bf16.msra.mxu0 0
      %428 = vmatprep.subr.bf16.mxu0 0
      %429 = vmatpush2.bf16.msra.mxu0 0
      %430 = vmatprep.mubr.bf16.mxu0 0
      %431 = vmatmul.mubr.bf16.gmra.mxu0 %v396
      %v432 = vpop.f32.mrf.mxu0
      %v433 = vadd.f32 0.0, %v432
      %v434 = vpop.f32.mrf.mxu0
      %v435 = vadd.f32 0.0, %v434
      %v436 = vpop.f32.mrf.mxu0
      %v437 = vadd.f32 0.0, %v436
      %v438 = vpop.f32.mrf.mxu0
      %v439 = vadd.f32 0.0, %v438
      %440 = vdwg.mxu0
      %441 = vmatprep.subr.bf16.mxu0 0
      %442 = vmatpush1.bf16.msra.mxu0 0
      %443 = vmatprep.subr.bf16.mxu0 0
      %444 = vmatpush1.bf16.msra.mxu0 0
      %445 = vmatprep.subr.bf16.mxu0 0
      %446 = vmatpush1.bf16.msra.mxu0 0
      %447 = vmatprep.subr.bf16.mxu0 0
      %448 = vmatpush1.bf16.msra.mxu0 0
      %449 = vmatprep.subr.bf16.mxu0 %v377
      %450 = vmatpush1.bf16.msra.mxu0 %v376
      %451 = vmatprep.subr.bf16.mxu0 %v373
      %452 = vmatpush1.bf16.msra.mxu0 %v372
      %453 = vmatprep.subr.bf16.mxu0 %v369
      %454 = vmatpush1.bf16.msra.mxu0 %v368
      %455 = vmatprep.subr.bf16.mxu0 %v365
      %456 = vmatpush1.bf16.msra.mxu0 %v364
      %457 = vmatprep.subr.bf16.mxu0 0
      %458 = vmatpush2.bf16.msra.mxu0 0
      %459 = vmatprep.subr.bf16.mxu0 0
      %460 = vmatpush2.bf16.msra.mxu0 0
      %461 = vmatprep.subr.bf16.mxu0 0
      %462 = vmatpush2.bf16.msra.mxu0 0
      %463 = vmatprep.subr.bf16.mxu0 0
      %464 = vmatpush2.bf16.msra.mxu0 0
      %465 = vmatprep.subr.bf16.mxu0 0
      %466 = vmatpush2.bf16.msra.mxu0 0
      %467 = vmatprep.subr.bf16.mxu0 0
      %468 = vmatpush2.bf16.msra.mxu0 0
      %469 = vmatprep.subr.bf16.mxu0 0
      %470 = vmatpush2.bf16.msra.mxu0 0
      %471 = vmatprep.subr.bf16.mxu0 0
      %472 = vmatpush2.bf16.msra.mxu0 0
      %473 = vmatprep.mubr.bf16.mxu0 0
      %474 = vmatmul.mubr.bf16.gmra.mxu0 %v396
      %v475 = vpop.f32.mrf.mxu0
      %v476 = vadd.f32 0.0, %v475
      %v477 = vpop.f32.mrf.mxu0
      %v478 = vadd.f32 0.0, %v477
      %v479 = vpop.f32.mrf.mxu0
      %v480 = vadd.f32 0.0, %v479
      %v481 = vpop.f32.mrf.mxu0
      %v482 = vadd.f32 0.0, %v481
      %483 = vdwg.mxu0
      %v500 = vunpack.c.l.b16 %v267
      %v501 = vunpack.c.h.b16 %v267
      %v502 = vunpack.c.l.b16 %v268
      %v503 = vunpack.c.h.b16 %v268
      %v504 = vunpack.c.l.b16 %v269
      %v505 = vunpack.c.h.b16 %v269
      %v506 = vunpack.c.l.b16 %v270
      %v507 = vunpack.c.h.b16 %v270
      %v508 = vunpack.c.l.b16 %v271
      %v509 = vunpack.c.h.b16 %v271
      %v510 = vunpack.c.l.b16 %v272
      %v511 = vunpack.c.h.b16 %v272
      %v512 = vunpack.c.l.b16 %v273
      %v513 = vunpack.c.h.b16 %v273
      %v514 = vunpack.c.l.b16 %v274
      %v515 = vunpack.c.h.b16 %v274
      %v516 = vunpack.c.l.b16 %v275
      %v517 = vunpack.c.h.b16 %v275
      %v518 = vunpack.c.l.b16 %v276
      %v519 = vunpack.c.h.b16 %v276
      %v520 = vunpack.c.l.b16 %v277
      %v521 = vunpack.c.h.b16 %v277
      %v522 = vunpack.c.l.b16 %v278
      %v523 = vunpack.c.h.b16 %v278
      %v524 = vunpack.c.l.b16 %v279
      %v525 = vunpack.c.h.b16 %v279
      %v526 = vunpack.c.l.b16 %v280
      %v527 = vunpack.c.h.b16 %v280
      %v528 = vunpack.c.l.b16 %v281
      %v529 = vunpack.c.h.b16 %v281
      %v530 = vunpack.c.l.b16 %v282
      %v531 = vunpack.c.h.b16 %v282
      %v532 = vpack.c.b16 %v504, %v500
      %v533 = vpack.c.b16 %v505, %v501
      %v534 = vpack.c.b16 %v506, %v502
      %v535 = vpack.c.b16 %v507, %v503
      %v536 = vpack.c.b16 %v512, %v508
      %v537 = vpack.c.b16 %v513, %v509
      %v538 = vpack.c.b16 %v514, %v510
      %v539 = vpack.c.b16 %v515, %v511
      %v540 = vpack.c.b16 %v520, %v516
      %v541 = vpack.c.b16 %v521, %v517
      %v542 = vpack.c.b16 %v522, %v518
      %v543 = vpack.c.b16 %v523, %v519
      %v544 = vpack.c.b16 %v528, %v524
      %v545 = vpack.c.b16 %v529, %v525
      %v546 = vpack.c.b16 %v530, %v526
      %v547 = vpack.c.b16 %v531, %v527
      %v564 = vsel %vm394, %v266, 0
      %566 = vmatprep.subr.bf16.mxu0 0
      %567 = vmatpush1.bf16.msra.mxu0 0
      %568 = vmatprep.subr.bf16.mxu0 0
      %569 = vmatpush1.bf16.msra.mxu0 0
      %570 = vmatprep.subr.bf16.mxu0 0
      %571 = vmatpush1.bf16.msra.mxu0 0
      %572 = vmatprep.subr.bf16.mxu0 0
      %573 = vmatpush1.bf16.msra.mxu0 0
      %574 = vmatprep.subr.bf16.mxu0 %v545
      %575 = vmatpush1.bf16.msra.mxu0 %v544
      %576 = vmatprep.subr.bf16.mxu0 %v541
      %577 = vmatpush1.bf16.msra.mxu0 %v540
      %578 = vmatprep.subr.bf16.mxu0 %v537
      %579 = vmatpush1.bf16.msra.mxu0 %v536
      %580 = vmatprep.subr.bf16.mxu0 %v533
      %581 = vmatpush1.bf16.msra.mxu0 %v532
      %582 = vmatprep.subr.bf16.mxu0 0
      %583 = vmatpush2.bf16.msra.mxu0 0
      %584 = vmatprep.subr.bf16.mxu0 0
      %585 = vmatpush2.bf16.msra.mxu0 0
      %586 = vmatprep.subr.bf16.mxu0 0
      %587 = vmatpush2.bf16.msra.mxu0 0
      %588 = vmatprep.subr.bf16.mxu0 0
      %589 = vmatpush2.bf16.msra.mxu0 0
      %590 = vmatprep.subr.bf16.mxu0 0
      %591 = vmatpush2.bf16.msra.mxu0 0
      %592 = vmatprep.subr.bf16.mxu0 0
      %593 = vmatpush2.bf16.msra.mxu0 0
      %594 = vmatprep.subr.bf16.mxu0 0
      %595 = vmatpush2.bf16.msra.mxu0 0
      %596 = vmatprep.subr.bf16.mxu0 0
      %597 = vmatpush2.bf16.msra.mxu0 0
      %598 = vmatprep.mubr.bf16.mxu0 0
      %599 = vmatmul.mubr.bf16.gmra.mxu0 %v564
      %v600 = vpop.f32.mrf.mxu0
      %v601 = vadd.f32 %v433, %v600
      %v602 = vpop.f32.mrf.mxu0
      %v603 = vadd.f32 %v435, %v602
      %v604 = vpop.f32.mrf.mxu0
      %v605 = vadd.f32 %v437, %v604
      %v606 = vpop.f32.mrf.mxu0
      %v607 = vadd.f32 %v439, %v606
      %608 = vdwg.mxu0
      %609 = vmatprep.subr.bf16.mxu0 0
      %610 = vmatpush1.bf16.msra.mxu0 0
      %611 = vmatprep.subr.bf16.mxu0 0
      %612 = vmatpush1.bf16.msra.mxu0 0
      %613 = vmatprep.subr.bf16.mxu0 0
      %614 = vmatpush1.bf16.msra.mxu0 0
      %615 = vmatprep.subr.bf16.mxu0 0
      %616 = vmatpush1.bf16.msra.mxu0 0
      %617 = vmatprep.subr.bf16.mxu0 %v547
      %618 = vmatpush1.bf16.msra.mxu0 %v546
      %619 = vmatprep.subr.bf16.mxu0 %v543
      %620 = vmatpush1.bf16.msra.mxu0 %v542
      %621 = vmatprep.subr.bf16.mxu0 %v539
      %622 = vmatpush1.bf16.msra.mxu0 %v538
      %623 = vmatprep.subr.bf16.mxu0 %v535
      %624 = vmatpush1.bf16.msra.mxu0 %v534
      %625 = vmatprep.subr.bf16.mxu0 0
      %626 = vmatpush2.bf16.msra.mxu0 0
      %627 = vmatprep.subr.bf16.mxu0 0
      %628 = vmatpush2.bf16.msra.mxu0 0
      %629 = vmatprep.subr.bf16.mxu0 0
      %630 = vmatpush2.bf16.msra.mxu0 0
      %631 = vmatprep.subr.bf16.mxu0 0
      %632 = vmatpush2.bf16.msra.mxu0 0
      %633 = vmatprep.subr.bf16.mxu0 0
      %634 = vmatpush2.bf16.msra.mxu0 0
      %635 = vmatprep.subr.bf16.mxu0 0
      %636 = vmatpush2.bf16.msra.mxu0 0
      %637 = vmatprep.subr.bf16.mxu0 0
      %638 = vmatpush2.bf16.msra.mxu0 0
      %639 = vmatprep.subr.bf16.mxu0 0
      %640 = vmatpush2.bf16.msra.mxu0 0
      %641 = vmatprep.mubr.bf16.mxu0 0
      %642 = vmatmul.mubr.bf16.gmra.mxu0 %v564
      %v643 = vpop.f32.mrf.mxu0
      %v644 = vadd.f32 %v476, %v643
      %v645 = vpop.f32.mrf.mxu0
      %v646 = vadd.f32 %v478, %v645
      %v647 = vpop.f32.mrf.mxu0
      %v648 = vadd.f32 %v480, %v647
      %v649 = vpop.f32.mrf.mxu0
      %v650 = vadd.f32 %v482, %v649
      %651 = vdwg.mxu0
      %s652 = scalar_lea.vmem %s1, 256
      %v653 = vld [vmem:[%s652] sm:$0xff]
      %v654 = vld [vmem:[%s652 + $0x8] sm:$0xff]
      %v655 = vld [vmem:[%s652 + $0x10] sm:$0xff]
      %v656 = vld [vmem:[%s652 + $0x18] sm:$0xff]
      %v657 = vld [vmem:[%s652 + $0x20] sm:$0xff]
      %v658 = vld [vmem:[%s652 + $0x28] sm:$0xff]
      %v659 = vld [vmem:[%s652 + $0x30] sm:$0xff]
      %v660 = vld [vmem:[%s652 + $0x38] sm:$0xff]
      %v661 = vld [vmem:[%s652 + $0x40] sm:$0xff]
      %v662 = vld [vmem:[%s652 + $0x48] sm:$0xff]
      %v663 = vld [vmem:[%s652 + $0x50] sm:$0xff]
      %v664 = vld [vmem:[%s652 + $0x58] sm:$0xff]
      %v665 = vld [vmem:[%s652 + $0x60] sm:$0xff]
      %v666 = vld [vmem:[%s652 + $0x68] sm:$0xff]
      %v667 = vld [vmem:[%s652 + $0x70] sm:$0xff]
      %v668 = vld [vmem:[%s652 + $0x78] sm:$0xff]
      %vm671 = vcmask 1046528
      %v672 = vrot.slane %v266, 1
      %v673 = vrot.slane %v283, 1
      %v674 = vsel %vm671, %v672, %v673
      %v691 = vunpack.c.l.b16 %v653
      %v692 = vunpack.c.h.b16 %v653
      %v693 = vunpack.c.l.b16 %v654
      %v694 = vunpack.c.h.b16 %v654
      %v695 = vunpack.c.l.b16 %v655
      %v696 = vunpack.c.h.b16 %v655
      %v697 = vunpack.c.l.b16 %v656
      %v698 = vunpack.c.h.b16 %v656
      %v699 = vunpack.c.l.b16 %v657
      %v700 = vunpack.c.h.b16 %v657
      %v701 = vunpack.c.l.b16 %v658
      %v702 = vunpack.c.h.b16 %v658
      %v703 = vunpack.c.l.b16 %v659
      %v704 = vunpack.c.h.b16 %v659
      %v705 = vunpack.c.l.b16 %v660
      %v706 = vunpack.c.h.b16 %v660
      %v707 = vunpack.c.l.b16 %v661
      %v708 = vunpack.c.h.b16 %v661
      %v709 = vunpack.c.l.b16 %v662
      %v710 = vunpack.c.h.b16 %v662
      %v711 = vunpack.c.l.b16 %v663
      %v712 = vunpack.c.h.b16 %v663
      %v713 = vunpack.c.l.b16 %v664
      %v714 = vunpack.c.h.b16 %v664
      %v715 = vunpack.c.l.b16 %v665
      %v716 = vunpack.c.h.b16 %v665
      %v717 = vunpack.c.l.b16 %v666
      %v718 = vunpack.c.h.b16 %v666
      %v719 = vunpack.c.l.b16 %v667
      %v720 = vunpack.c.h.b16 %v667
      %v721 = vunpack.c.l.b16 %v668
      %v722 = vunpack.c.h.b16 %v668
      %v723 = vpack.c.b16 %v695, %v691
      %v724 = vpack.c.b16 %v696, %v692
      %v725 = vpack.c.b16 %v697, %v693
      %v726 = vpack.c.b16 %v698, %v694
      %v727 = vpack.c.b16 %v703, %v699
      %v728 = vpack.c.b16 %v704, %v700
      %v729 = vpack.c.b16 %v705, %v701
      %v730 = vpack.c.b16 %v706, %v702
      %v731 = vpack.c.b16 %v711, %v707
      %v732 = vpack.c.b16 %v712, %v708
      %v733 = vpack.c.b16 %v713, %v709
      %v734 = vpack.c.b16 %v714, %v710
      %v735 = vpack.c.b16 %v719, %v715
      %v736 = vpack.c.b16 %v720, %v716
      %v737 = vpack.c.b16 %v721, %v717
      %v738 = vpack.c.b16 %v722, %v718
      %v756 = vsel %vm394, %v674, 0
      %758 = vmatprep.subr.bf16.mxu0 0
      %759 = vmatpush1.bf16.msra.mxu0 0
      %760 = vmatprep.subr.bf16.mxu0 0
      %761 = vmatpush1.bf16.msra.mxu0 0
      %762 = vmatprep.subr.bf16.mxu0 0
      %763 = vmatpush1.bf16.msra.mxu0 0
      %764 = vmatprep.subr.bf16.mxu0 0
      %765 = vmatpush1.bf16.msra.mxu0 0
      %766 = vmatprep.subr.bf16.mxu0 %v736
      %767 = vmatpush1.bf16.msra.mxu0 %v735
      %768 = vmatprep.subr.bf16.mxu0 %v732
      %769 = vmatpush1.bf16.msra.mxu0 %v731
      %770 = vmatprep.subr.bf16.mxu0 %v728
      %771 = vmatpush1.bf16.msra.mxu0 %v727
      %772 = vmatprep.subr.bf16.mxu0 %v724
      %773 = vmatpush1.bf16.msra.mxu0 %v723
      %774 = vmatprep.subr.bf16.mxu0 0
      %775 = vmatpush2.bf16.msra.mxu0 0
      %776 = vmatprep.subr.bf16.mxu0 0
      %777 = vmatpush2.bf16.msra.mxu0 0
      %778 = vmatprep.subr.bf16.mxu0 0
      %779 = vmatpush2.bf16.msra.mxu0 0
      %780 = vmatprep.subr.bf16.mxu0 0
      %781 = vmatpush2.bf16.msra.mxu0 0
      %782 = vmatprep.subr.bf16.mxu0 0
      %783 = vmatpush2.bf16.msra.mxu0 0
      %784 = vmatprep.subr.bf16.mxu0 0
      %785 = vmatpush2.bf16.msra.mxu0 0
      %786 = vmatprep.subr.bf16.mxu0 0
      %787 = vmatpush2.bf16.msra.mxu0 0
      %788 = vmatprep.subr.bf16.mxu0 0
      %789 = vmatpush2.bf16.msra.mxu0 0
      %790 = vmatprep.mubr.bf16.mxu0 0
      %791 = vmatmul.mubr.bf16.gmra.mxu0 %v756
      %v792 = vpop.f32.mrf.mxu0
      %v793 = vadd.f32 0.0, %v792
      %v794 = vpop.f32.mrf.mxu0
      %v795 = vadd.f32 0.0, %v794
      %v796 = vpop.f32.mrf.mxu0
      %v797 = vadd.f32 0.0, %v796
      %v798 = vpop.f32.mrf.mxu0
      %v799 = vadd.f32 0.0, %v798
      %800 = vdwg.mxu0
      %801 = vmatprep.subr.bf16.mxu0 0
      %802 = vmatpush1.bf16.msra.mxu0 0
      %803 = vmatprep.subr.bf16.mxu0 0
      %804 = vmatpush1.bf16.msra.mxu0 0
      %805 = vmatprep.subr.bf16.mxu0 0
      %806 = vmatpush1.bf16.msra.mxu0 0
      %807 = vmatprep.subr.bf16.mxu0 0
      %808 = vmatpush1.bf16.msra.mxu0 0
      %809 = vmatprep.subr.bf16.mxu0 %v738
      %810 = vmatpush1.bf16.msra.mxu0 %v737
      %811 = vmatprep.subr.bf16.mxu0 %v734
      %812 = vmatpush1.bf16.msra.mxu0 %v733
      %813 = vmatprep.subr.bf16.mxu0 %v730
      %814 = vmatpush1.bf16.msra.mxu0 %v729
      %815 = vmatprep.subr.bf16.mxu0 %v726
      %816 = vmatpush1.bf16.msra.mxu0 %v725
      %817 = vmatprep.subr.bf16.mxu0 0
      %818 = vmatpush2.bf16.msra.mxu0 0
      %819 = vmatprep.subr.bf16.mxu0 0
      %820 = vmatpush2.bf16.msra.mxu0 0
      %821 = vmatprep.subr.bf16.mxu0 0
      %822 = vmatpush2.bf16.msra.mxu0 0
      %823 = vmatprep.subr.bf16.mxu0 0
      %824 = vmatpush2.bf16.msra.mxu0 0
      %825 = vmatprep.subr.bf16.mxu0 0
      %826 = vmatpush2.bf16.msra.mxu0 0
      %827 = vmatprep.subr.bf16.mxu0 0
      %828 = vmatpush2.bf16.msra.mxu0 0
      %829 = vmatprep.subr.bf16.mxu0 0
      %830 = vmatpush2.bf16.msra.mxu0 0
      %831 = vmatprep.subr.bf16.mxu0 0
      %832 = vmatpush2.bf16.msra.mxu0 0
      %833 = vmatprep.mubr.bf16.mxu0 0
      %834 = vmatmul.mubr.bf16.gmra.mxu0 %v756
      %v835 = vpop.f32.mrf.mxu0
      %v836 = vadd.f32 0.0, %v835
      %v837 = vpop.f32.mrf.mxu0
      %v838 = vadd.f32 0.0, %v837
      %v839 = vpop.f32.mrf.mxu0
      %v840 = vadd.f32 0.0, %v839
      %v841 = vpop.f32.mrf.mxu0
      %v842 = vadd.f32 0.0, %v841
      %843 = vdwg.mxu0
      %v844 = vadd.f32 %v601, %v793
      %v845 = vadd.f32 %v603, %v795
      %v846 = vadd.f32 %v644, %v836
      %v847 = vadd.f32 %v646, %v838
      %v848 = vadd.f32 %v605, %v797
      %v849 = vadd.f32 %v607, %v799
      %v850 = vadd.f32 %v648, %v840
      %v851 = vadd.f32 %v650, %v842
      %v852 = vld [vmem:[%s2] sm:$0xf]
      %v854 = vlaneseq
      %v855 = vshrl.u32 %v854, 7
      %v856 = vsub.s32 0, %v855
      %v857 = vrot.slane %v852, %v856
      %v858 = vlaneseq
      %v859 = vshrl.u32 %v858, 7
      %v860 = vsub.s32 1, %v859
      %v861 = vrot.slane %v852, %v860
      %v862 = vlaneseq
      %v863 = vshrl.u32 %v862, 7
      %v864 = vsub.s32 2, %v863
      %v865 = vrot.slane %v852, %v864
      %v866 = vlaneseq
      %v867 = vshrl.u32 %v866, 7
      %v868 = vsub.s32 3, %v867
      %v869 = vrot.slane %v852, %v868
      %v874 = vadd.f32 %v844, %v857
      %v875 = vadd.f32 %v845, %v861
      %v876 = vadd.f32 %v846, %v865
      %v877 = vadd.f32 %v847, %v869
      %v878 = vadd.f32 %v848, %v857
      %v879 = vadd.f32 %v849, %v861
      %v880 = vadd.f32 %v850, %v865
      %v881 = vadd.f32 %v851, %v869
      %v882 = vmax.f32 %v874, 0.0
      %v883 = vmax.f32 %v875, 0.0
      %v884 = vmax.f32 %v876, 0.0
      %v885 = vmax.f32 %v877, 0.0
      %v886 = vmax.f32 %v878, 0.0
      %v887 = vmax.f32 %v879, 0.0
      %v888 = vmax.f32 %v880, 0.0
      %v889 = vmax.f32 %v881, 0.0
      %v890 = vadd.f32 %v882, %v886
      %v891 = vrot.slane %v890, 4
      %v892 = vadd.f32 %v890, %v891
      %v893 = vrot.slane %v892, 2
      %v894 = vadd.f32 %v892, %v893
      %v895 = vrot.slane %v894, 1
      %v896 = vadd.f32 %v894, %v895
      %v897 = vadd.f32 %v883, %v887
      %v898 = vrot.slane %v897, 4
      %v899 = vadd.f32 %v897, %v898
      %v900 = vrot.slane %v899, 2
      %v901 = vadd.f32 %v899, %v900
      %v902 = vrot.slane %v901, 1
      %v903 = vadd.f32 %v901, %v902
      %v904 = vadd.f32 %v884, %v888
      %v905 = vrot.slane %v904, 4
      %v906 = vadd.f32 %v904, %v905
      %v907 = vrot.slane %v906, 2
      %v908 = vadd.f32 %v906, %v907
      %v909 = vrot.slane %v908, 1
      %v910 = vadd.f32 %v908, %v909
      %v911 = vadd.f32 %v885, %v889
      %v912 = vrot.slane %v911, 4
      %v913 = vadd.f32 %v911, %v912
      %v914 = vrot.slane %v913, 2
      %v915 = vadd.f32 %v913, %v914
      %v916 = vrot.slane %v915, 1
      %v917 = vadd.f32 %v915, %v916
      %v918 = vpack.c.bf16 %v896, %v896
      %v919 = vpack.c.bf16 %v903, %v903
      %v920 = vpack.c.bf16 %v910, %v910
      %v921 = vpack.c.bf16 %v917, %v917
      %v922 = vld [vmem:[%s3] sm:$0xf]
      %v923 = vld [vmem:[%s3 + $0x4] sm:$0xf]
      %v924 = vld [vmem:[%s3 + $0x8] sm:$0xf]
      %v925 = vld [vmem:[%s3 + $0xc] sm:$0xf]
      %v926 = vld [vmem:[%s3 + $0x10] sm:$0xf]
      %v927 = vld [vmem:[%s3 + $0x14] sm:$0xf]
      %v928 = vld [vmem:[%s3 + $0x18] sm:$0xf]
      %v929 = vld [vmem:[%s3 + $0x1c] sm:$0xf]
      %v930 = vld [vmem:[%s3 + $0x20] sm:$0xf]
      %v931 = vld [vmem:[%s3 + $0x24] sm:$0xf]
      %v932 = vld [vmem:[%s3 + $0x28] sm:$0xf]
      %v933 = vld [vmem:[%s3 + $0x2c] sm:$0xf]
      %v934 = vld [vmem:[%s3 + $0x30] sm:$0xf]
      %v935 = vld [vmem:[%s3 + $0x34] sm:$0xf]
      %v936 = vld [vmem:[%s3 + $0x38] sm:$0xf]
      %v937 = vld [vmem:[%s3 + $0x3c] sm:$0xf]
      %v938 = vld [vmem:[%s3 + $0x40] sm:$0xf]
      %v939 = vld [vmem:[%s3 + $0x44] sm:$0xf]
      %v940 = vld [vmem:[%s3 + $0x48] sm:$0xf]
      %v941 = vld [vmem:[%s3 + $0x4c] sm:$0xf]
      %v942 = vld [vmem:[%s3 + $0x50] sm:$0xf]
      %v943 = vld [vmem:[%s3 + $0x54] sm:$0xf]
      %v944 = vld [vmem:[%s3 + $0x58] sm:$0xf]
      %v945 = vld [vmem:[%s3 + $0x5c] sm:$0xf]
      %v946 = vld [vmem:[%s3 + $0x60] sm:$0xf]
      %v947 = vld [vmem:[%s3 + $0x64] sm:$0xf]
      %v948 = vld [vmem:[%s3 + $0x68] sm:$0xf]
      %v949 = vld [vmem:[%s3 + $0x6c] sm:$0xf]
      %v950 = vld [vmem:[%s3 + $0x70] sm:$0xf]
      %v951 = vld [vmem:[%s3 + $0x74] sm:$0xf]
      %v952 = vld [vmem:[%s3 + $0x78] sm:$0xf]
      %v953 = vld [vmem:[%s3 + $0x7c] sm:$0xf]
      %v954 = vld [vmem:[%s3 + $0x80] sm:$0xf]
      %v955 = vld [vmem:[%s3 + $0x84] sm:$0xf]
      %v956 = vld [vmem:[%s3 + $0x88] sm:$0xf]
      %v957 = vld [vmem:[%s3 + $0x8c] sm:$0xf]
      %v958 = vld [vmem:[%s3 + $0x90] sm:$0xf]
      %v959 = vld [vmem:[%s3 + $0x94] sm:$0xf]
      %v960 = vld [vmem:[%s3 + $0x98] sm:$0xf]
      %v961 = vld [vmem:[%s3 + $0x9c] sm:$0xf]
      %v962 = vld [vmem:[%s3 + $0xa0] sm:$0xf]
      %v963 = vld [vmem:[%s3 + $0xa4] sm:$0xf]
      %v964 = vld [vmem:[%s3 + $0xa8] sm:$0xf]
      %v965 = vld [vmem:[%s3 + $0xac] sm:$0xf]
      %v966 = vld [vmem:[%s3 + $0xb0] sm:$0xf]
      %v967 = vld [vmem:[%s3 + $0xb4] sm:$0xf]
      %v968 = vld [vmem:[%s3 + $0xb8] sm:$0xf]
      %v969 = vld [vmem:[%s3 + $0xbc] sm:$0xf]
      %v970 = vld [vmem:[%s3 + $0xc0] sm:$0xf]
      %v971 = vld [vmem:[%s3 + $0xc4] sm:$0xf]
      %v972 = vld [vmem:[%s3 + $0xc8] sm:$0xf]
      %v973 = vld [vmem:[%s3 + $0xcc] sm:$0xf]
      %v974 = vld [vmem:[%s3 + $0xd0] sm:$0xf]
      %v975 = vld [vmem:[%s3 + $0xd4] sm:$0xf]
      %v976 = vld [vmem:[%s3 + $0xd8] sm:$0xf]
      %v977 = vld [vmem:[%s3 + $0xdc] sm:$0xf]
      %v978 = vld [vmem:[%s3 + $0xe0] sm:$0xf]
      %v979 = vld [vmem:[%s3 + $0xe4] sm:$0xf]
      %v980 = vld [vmem:[%s3 + $0xe8] sm:$0xf]
      %v981 = vld [vmem:[%s3 + $0xec] sm:$0xf]
      %v982 = vld [vmem:[%s3 + $0xf0] sm:$0xf]
      %v983 = vld [vmem:[%s3 + $0xf4] sm:$0xf]
      %v984 = vld [vmem:[%s3 + $0xf8] sm:$0xf]
      %v985 = vld [vmem:[%s3 + $0xfc] sm:$0xf]
      %v986 = vld [vmem:[%s4] sm:$0x1]
      %v1051 = vunpack.c.l.b16 %v922
      %v1052 = vunpack.c.l.b16 %v923
      %v1053 = vunpack.c.l.b16 %v924
      %v1054 = vunpack.c.l.b16 %v925
      %v1055 = vunpack.c.l.b16 %v926
      %v1056 = vunpack.c.l.b16 %v927
      %v1057 = vunpack.c.l.b16 %v928
      %v1058 = vunpack.c.l.b16 %v929
      %v1059 = vunpack.c.l.b16 %v930
      %v1060 = vunpack.c.l.b16 %v931
      %v1061 = vunpack.c.l.b16 %v932
      %v1062 = vunpack.c.l.b16 %v933
      %v1063 = vunpack.c.l.b16 %v934
      %v1064 = vunpack.c.l.b16 %v935
      %v1065 = vunpack.c.l.b16 %v936
      %v1066 = vunpack.c.l.b16 %v937
      %v1067 = vunpack.c.l.b16 %v938
      %v1068 = vunpack.c.l.b16 %v939
      %v1069 = vunpack.c.l.b16 %v940
      %v1070 = vunpack.c.l.b16 %v941
      %v1071 = vunpack.c.l.b16 %v942
      %v1072 = vunpack.c.l.b16 %v943
      %v1073 = vunpack.c.l.b16 %v944
      %v1074 = vunpack.c.l.b16 %v945
      %v1075 = vunpack.c.l.b16 %v946
      %v1076 = vunpack.c.l.b16 %v947
      %v1077 = vunpack.c.l.b16 %v948
      %v1078 = vunpack.c.l.b16 %v949
      %v1079 = vunpack.c.l.b16 %v950
      %v1080 = vunpack.c.l.b16 %v951
      %v1081 = vunpack.c.l.b16 %v952
      %v1082 = vunpack.c.l.b16 %v953
      %v1083 = vunpack.c.l.b16 %v954
      %v1084 = vunpack.c.l.b16 %v955
      %v1085 = vunpack.c.l.b16 %v956
      %v1086 = vunpack.c.l.b16 %v957
      %v1087 = vunpack.c.l.b16 %v958
      %v1088 = vunpack.c.l.b16 %v959
      %v1089 = vunpack.c.l.b16 %v960
      %v1090 = vunpack.c.l.b16 %v961
      %v1091 = vunpack.c.l.b16 %v962
      %v1092 = vunpack.c.l.b16 %v963
      %v1093 = vunpack.c.l.b16 %v964
      %v1094 = vunpack.c.l.b16 %v965
      %v1095 = vunpack.c.l.b16 %v966
      %v1096 = vunpack.c.l.b16 %v967
      %v1097 = vunpack.c.l.b16 %v968
      %v1098 = vunpack.c.l.b16 %v969
      %v1099 = vunpack.c.l.b16 %v970
      %v1100 = vunpack.c.l.b16 %v971
      %v1101 = vunpack.c.l.b16 %v972
      %v1102 = vunpack.c.l.b16 %v973
      %v1103 = vunpack.c.l.b16 %v974
      %v1104 = vunpack.c.l.b16 %v975
      %v1105 = vunpack.c.l.b16 %v976
      %v1106 = vunpack.c.l.b16 %v977
      %v1107 = vunpack.c.l.b16 %v978
      %v1108 = vunpack.c.l.b16 %v979
      %v1109 = vunpack.c.l.b16 %v980
      %v1110 = vunpack.c.l.b16 %v981
      %v1111 = vunpack.c.l.b16 %v982
      %v1112 = vunpack.c.l.b16 %v983
      %v1113 = vunpack.c.l.b16 %v984
      %v1114 = vunpack.c.l.b16 %v985
      %v1115 = vpack.c.b16 %v1052, %v1051
      %v1116 = vpack.c.b16 %v1054, %v1053
      %v1117 = vpack.c.b16 %v1056, %v1055
      %v1118 = vpack.c.b16 %v1058, %v1057
      %v1119 = vpack.c.b16 %v1060, %v1059
      %v1120 = vpack.c.b16 %v1062, %v1061
      %v1121 = vpack.c.b16 %v1064, %v1063
      %v1122 = vpack.c.b16 %v1066, %v1065
      %v1123 = vpack.c.b16 %v1068, %v1067
      %v1124 = vpack.c.b16 %v1070, %v1069
      %v1125 = vpack.c.b16 %v1072, %v1071
      %v1126 = vpack.c.b16 %v1074, %v1073
      %v1127 = vpack.c.b16 %v1076, %v1075
      %v1128 = vpack.c.b16 %v1078, %v1077
      %v1129 = vpack.c.b16 %v1080, %v1079
      %v1130 = vpack.c.b16 %v1082, %v1081
      %v1131 = vpack.c.b16 %v1084, %v1083
      %v1132 = vpack.c.b16 %v1086, %v1085
      %v1133 = vpack.c.b16 %v1088, %v1087
      %v1134 = vpack.c.b16 %v1090, %v1089
      %v1135 = vpack.c.b16 %v1092, %v1091
      %v1136 = vpack.c.b16 %v1094, %v1093
      %v1137 = vpack.c.b16 %v1096, %v1095
      %v1138 = vpack.c.b16 %v1098, %v1097
      %v1139 = vpack.c.b16 %v1100, %v1099
      %v1140 = vpack.c.b16 %v1102, %v1101
      %v1141 = vpack.c.b16 %v1104, %v1103
      %v1142 = vpack.c.b16 %v1106, %v1105
      %v1143 = vpack.c.b16 %v1108, %v1107
      %v1144 = vpack.c.b16 %v1110, %v1109
      %v1145 = vpack.c.b16 %v1112, %v1111
      %v1146 = vpack.c.b16 %v1114, %v1113
      %1179 = vmatprep.subr.bf16.mxu0 0
      %1180 = vmatpush1.bf16.msra.mxu0 %v1122
      %1181 = vmatprep.subr.bf16.mxu0 0
      %1182 = vmatpush1.bf16.msra.mxu0 %v1121
      %1183 = vmatprep.subr.bf16.mxu0 0
      %1184 = vmatpush1.bf16.msra.mxu0 %v1120
      %1185 = vmatprep.subr.bf16.mxu0 0
      %1186 = vmatpush1.bf16.msra.mxu0 %v1119
      %1187 = vmatprep.subr.bf16.mxu0 0
      %1188 = vmatpush1.bf16.msra.mxu0 %v1118
      %1189 = vmatprep.subr.bf16.mxu0 0
      %1190 = vmatpush1.bf16.msra.mxu0 %v1117
      %1191 = vmatprep.subr.bf16.mxu0 0
      %1192 = vmatpush1.bf16.msra.mxu0 %v1116
      %1193 = vmatprep.subr.bf16.mxu0 0
      %1194 = vmatpush1.bf16.msra.mxu0 %v1115
      %1195 = vmatprep.subr.bf16.mxu0 0
      %1196 = vmatpush2.bf16.msra.mxu0 %v1130
      %1197 = vmatprep.subr.bf16.mxu0 0
      %1198 = vmatpush2.bf16.msra.mxu0 %v1129
      %1199 = vmatprep.subr.bf16.mxu0 0
      %1200 = vmatpush2.bf16.msra.mxu0 %v1128
      %1201 = vmatprep.subr.bf16.mxu0 0
      %1202 = vmatpush2.bf16.msra.mxu0 %v1127
      %1203 = vmatprep.subr.bf16.mxu0 0
      %1204 = vmatpush2.bf16.msra.mxu0 %v1126
      %1205 = vmatprep.subr.bf16.mxu0 0
      %1206 = vmatpush2.bf16.msra.mxu0 %v1125
      %1207 = vmatprep.subr.bf16.mxu0 0
      %1208 = vmatpush2.bf16.msra.mxu0 %v1124
      %1209 = vmatprep.subr.bf16.mxu0 0
      %1210 = vmatpush2.bf16.msra.mxu0 %v1123
      %1211 = vmatprep.mubr.bf16.mxu0 %v919
      %1212 = vmatmul.mubr.bf16.gmra.mxu0 %v918
      %v1213 = vpop.f32.mrf.mxu0
      %v1214 = vadd.f32 %v986, %v1213
      %v1215 = vpop.f32.mrf.mxu0
      %v1216 = vpop.f32.mrf.mxu0
      %v1217 = vpop.f32.mrf.mxu0
      %1218 = vdwg.mxu0
      %1219 = vmatprep.subr.bf16.mxu0 0
      %1220 = vmatpush1.bf16.msra.mxu0 %v1138
      %1221 = vmatprep.subr.bf16.mxu0 0
      %1222 = vmatpush1.bf16.msra.mxu0 %v1137
      %1223 = vmatprep.subr.bf16.mxu0 0
      %1224 = vmatpush1.bf16.msra.mxu0 %v1136
      %1225 = vmatprep.subr.bf16.mxu0 0
      %1226 = vmatpush1.bf16.msra.mxu0 %v1135
      %1227 = vmatprep.subr.bf16.mxu0 0
      %1228 = vmatpush1.bf16.msra.mxu0 %v1134
      %1229 = vmatprep.subr.bf16.mxu0 0
      %1230 = vmatpush1.bf16.msra.mxu0 %v1133
      %1231 = vmatprep.subr.bf16.mxu0 0
      %1232 = vmatpush1.bf16.msra.mxu0 %v1132
      %1233 = vmatprep.subr.bf16.mxu0 0
      %1234 = vmatpush1.bf16.msra.mxu0 %v1131
      %1235 = vmatprep.subr.bf16.mxu0 0
      %1236 = vmatpush2.bf16.msra.mxu0 %v1146
      %1237 = vmatprep.subr.bf16.mxu0 0
      %1238 = vmatpush2.bf16.msra.mxu0 %v1145
      %1239 = vmatprep.subr.bf16.mxu0 0
      %1240 = vmatpush2.bf16.msra.mxu0 %v1144
      %1241 = vmatprep.subr.bf16.mxu0 0
      %1242 = vmatpush2.bf16.msra.mxu0 %v1143
      %1243 = vmatprep.subr.bf16.mxu0 0
      %1244 = vmatpush2.bf16.msra.mxu0 %v1142
      %1245 = vmatprep.subr.bf16.mxu0 0
      %1246 = vmatpush2.bf16.msra.mxu0 %v1141
      %1247 = vmatprep.subr.bf16.mxu0 0
      %1248 = vmatpush2.bf16.msra.mxu0 %v1140
      %1249 = vmatprep.subr.bf16.mxu0 0
      %1250 = vmatpush2.bf16.msra.mxu0 %v1139
      %1251 = vmatprep.mubr.bf16.mxu0 %v921
      %1252 = vmatmul.mubr.bf16.gmra.mxu0 %v920
      %v1253 = vpop.f32.mrf.mxu0
      %v1254 = vadd.f32 %v1214, %v1253
      %v1255 = vpop.f32.mrf.mxu0
      %v1256 = vpop.f32.mrf.mxu0
      %v1257 = vpop.f32.mrf.mxu0
      %1258 = vdwg.mxu0
      %v1259 = vld [vmem:[%s258] sm:$0x1]
      %v1260 = vadd.f32 %v1254, %v1259
      %1261 = vst [vmem:[%s261] sm:$0x1] %v1260
      %p1262 = scmp.lt.s32.totalorder %s17, 7
      %s1263 = scalar_select %p1262, %s17, 7
      %s1264 = scalar_lea.vmem %s6, %s1263
      // Predicated region
      $region45: #{forward.2} parent=43 // pred_check
        %p1265 = pneg %p171
      $region46: #{forward.2} parent=43 // pred_check_branch
        %1267 = sbr.rel (%p1265) target = $region48
      $region47: #{forward.2} parent=43 // pred_region
        _
      $region48: #{forward.2} parent=43 // pred_fallthru
        _
    $region44: #{forward.2} parent=5 // pred_fallthru
      _
    %p1268 = scmp.le.s32.totalorder 2, %s12
    // Predicated region
    $region49: #{forward.2} parent=5 // pred_check
      %p1269 = pneg %p1268
    $region50: #{forward.2} parent=5 // pred_check_branch
      %1271 = sbr.rel (%p1269) target = $region52
    $region51: #{forward.2} parent=5 // pred_region
      %s1272 = ssub.s32 %s12, 2
      // Predicated region
      $region53: #{forward.2} parent=51 // pred_check
        %p1273 = pneg %p177
      $region54: #{forward.2} parent=51 // pred_check_branch
        %1275 = sbr.rel (%p1273) target = $region56
      $region55: #{forward.2} parent=51 // pred_region
        %p1276 = scmp.lt.s32.totalorder %s18, 7
        %s1277 = scalar_select %p1276, %s18, 7
        %s1278 = scalar_lea.vmem %s6, %s1277
      $region56: #{forward.2} parent=51 // pred_fallthru
        _
    $region52: #{forward.2} parent=5 // pred_fallthru
      _
  $region6: #{forward.2} parent=0 // loop_footer
    %s16 = sadd.s32 1, %s12
  $region7: #{forward.2} parent=0 // loop_footer_branch
    %11 = sbr.rel target = $region3
  $region8: #{forward.2} parent=0 // loop_exit
    _

// kernel: forward.3
$region0: #{forward.3}
  #allocation0 [shape = 'u32[]', space=smem, size = 0x4, offset = 0x4, fixed_abs, tag = 'smem constant byte address 0x4 - core index']
  #allocation1 [shape = 'u32[144,128]{1,0:T(1,128)}', space=vmem, size = 0x12000, scoped, tag = 'internal scratch']
  #allocation2 [shape = 'f32[8,128]{1,0:T(8,128)}', space=vmem, size = 0x1000, scoped, tag = 'scratch operand']
  %s0 = inlined_call_operand.vmem [shape: f32[8,128], index: 0, kind: input, shape index: {}]
  %s1 = inlined_call_operand.vmem [shape: f32[8,8], index: 1, kind: input, shape index: {}]
  %s2 = inlined_call_operand.vmem [shape: bf16[2,128,384], index: 2, kind: input, shape index: {}]
  %s3 = inlined_call_operand.vmem [shape: f32[2,1,384], index: 3, kind: input, shape index: {}]
  %s4 = inlined_call_operand.vmem [shape: bf16[2,128,128], index: 4, kind: input, shape index: {}]
  %s5 = inlined_call_operand.vmem [shape: f32[2,1,128], index: 5, kind: input, shape index: {}]
  %s6 = inlined_call_operand.vmem [shape: f32[2,1,128], index: 6, kind: input, shape index: {}]
  %s7 = inlined_call_operand.vmem [shape: f32[2,1,128], index: 7, kind: input, shape index: {}]
  %s8 = inlined_call_operand.vmem [shape: bf16[2,128,256], index: 8, kind: input, shape index: {}]
  %s9 = inlined_call_operand.vmem [shape: f32[2,1,256], index: 9, kind: input, shape index: {}]
  %s10 = inlined_call_operand.vmem [shape: bf16[2,256,128], index: 10, kind: input, shape index: {}]
  %s11 = inlined_call_operand.vmem [shape: f32[2,1,128], index: 11, kind: input, shape index: {}]
  %s12 = inlined_call_operand.vmem [shape: f32[2,1,128], index: 12, kind: input, shape index: {}]
  %s13 = inlined_call_operand.vmem [shape: f32[2,1,128], index: 13, kind: input, shape index: {}]
  %s14 = inlined_call_operand.vmem [shape: f32[128,6], index: 14, kind: input, shape index: {}]
  %s15 = inlined_call_operand.vmem [shape: f32[1,6], index: 15, kind: input, shape index: {}]
  %s16 = inlined_call_operand.hbm [shape: f32[2,6], index: 16, kind: output, shape index: {}]
  %s17 = sld [smem:[#allocation0]]
  $region105: #{forward.3} parent=0
    _
  %s19 = ssub.s32 1, %s17
  %s20 = scalar_select 0, %s19, %s17
  $region1: #{forward.3} parent=0
    #allocation3 [shape = 'u8[1024]{0}', space=vmem, size = 0x400, scoped, tag = 'output window, operand 0, single buffered']
    #allocation4 [shape = 's32[2]{0}', space=sflag, size = 0x8, scoped, tag = 'scoped memory for forward.3']
    %21 = vsyncpa [#allocation4], 0
    loop: start=0, step=1, limit=4
    $region2: #{forward.3} parent=1 // loop_pre_header
      _
    $region3: #{forward.3} parent=1 // loop_header
      %s23 = sphi 0, %s27
      %p24 = scmp.ge.s32.totalorder %s23, 4
      %s31 = sphi 0, %s31
      %s33 = sphi 0, %s31
      %s34 = sphi 0, %s33
      %s48 = sphi 0, %s34
      %s52 = sphi 0, %s52
      %s54 = sphi 0, %s52
      %s55 = sphi 0, %s54
      %s69 = sphi 0, %s55
      %s75 = sphi 0, %s77
      %s78 = sphi 0, %s75
      %s79 = sphi 0, %s78
      %s95 = sphi 0, %s79
      %s101 = sphi 0, %s103
      %s104 = sphi 0, %s101
      %s105 = sphi 0, %s104
      %s121 = sphi 0, %s105
      %s127 = sphi 0, %s129
      %s130 = sphi 0, %s127
      %s131 = sphi 0, %s130
      %s147 = sphi 0, %s131
      %s153 = sphi 0, %s155
      %s156 = sphi 0, %s153
      %s157 = sphi 0, %s156
      %s173 = sphi 0, %s157
      %s179 = sphi 0, %s181
      %s182 = sphi 0, %s179
      %s183 = sphi 0, %s182
      %s199 = sphi 0, %s183
      %s205 = sphi 0, %s207
      %s208 = sphi 0, %s205
      %s209 = sphi 0, %s208
      %s225 = sphi 0, %s209
      %s231 = sphi 0, %s233
      %s234 = sphi 0, %s231
      %s235 = sphi 0, %s234
      %s251 = sphi 0, %s235
      %s257 = sphi 0, %s259
      %s260 = sphi 0, %s257
      %s261 = sphi 0, %s260
      %s277 = sphi 0, %s261
      %s283 = sphi 0, %s285
      %s286 = sphi 0, %s283
      %s287 = sphi 0, %s286
      %s303 = sphi 0, %s287
      %s309 = sphi 0, %s311
      %s312 = sphi 0, %s309
      %s313 = sphi 0, %s312
      %s329 = sphi 0, %s313
      %s335 = sphi 0, %s337
      %s338 = sphi 0, %s335
      %s339 = sphi 0, %s338
      %s355 = sphi 0, %s339
      %s361 = sphi 0, %s363
      %s364 = sphi 0, %s361
      %s365 = sphi 0, %s364
      %s381 = sphi 0, %s365
      %s385 = sphi 0, %s385
      %s387 = sphi 0, %s385
      %s388 = sphi 0, %s387
      %s402 = sphi 0, %s388
      %s406 = sphi 0, %s406
      %s408 = sphi 0, %s406
      %s409 = sphi 0, %s408
      %s423 = sphi 0, %s409
      %s427 = sphi 0, %s427
      %s429 = sphi 0, %s427
      %s430 = sphi 0, %s429
      %s444 = sphi 0, %s430
    $region4: #{forward.3} parent=1 // loop_header_branch
      %26 = sbr.rel (%p24) target = $region8
    $region5: #{forward.3} parent=1 // loop_body
      %s28 = ssub.s32 %s23, 1
      %s29 = ssub.s32 %s23, 2
      %s30 = sadd.s32 %s23, 1
      %s32 = sadd.s32 %s31, 1
      %p35 = scmp.eq.s32.totalorder %s23, 1
      %p36 = scmp.ne.s32.totalorder %s31, %s33
      %p37 = scmp.eq.s32.totalorder %s23, 0
      %p38 = por %p36, %p37
      %p39 = scmp.ne.s32.totalorder %s31, %s33
      %p40 = scmp.eq.s32.totalorder %s28, 1
      %p41 = por %p39, %p40
      %p42 = scmp.ne.s32.totalorder %s33, %s34
      %p43 = scmp.eq.s32.totalorder %s28, 0
      %p44 = por %p42, %p43
      %p45 = scmp.ne.s32.totalorder %s33, %s34
      %p46 = scmp.eq.s32.totalorder %s29, 1
      %p47 = por %p45, %p46
      %p49 = scmp.ne.s32.totalorder %s34, %s48
      %p50 = scmp.eq.s32.totalorder %s29, 0
      %p51 = por %p49, %p50
      %s53 = sadd.s32 %s52, 1
      %p56 = scmp.eq.s32.totalorder %s23, 1
      %p57 = scmp.ne.s32.totalorder %s52, %s54
      %p58 = scmp.eq.s32.totalorder %s23, 0
      %p59 = por %p57, %p58
      %p60 = scmp.ne.s32.totalorder %s52, %s54
      %p61 = scmp.eq.s32.totalorder %s28, 1
      %p62 = por %p60, %p61
      %p63 = scmp.ne.s32.totalorder %s54, %s55
      %p64 = scmp.eq.s32.totalorder %s28, 0
      %p65 = por %p63, %p64
      %p66 = scmp.ne.s32.totalorder %s54, %s55
      %p67 = scmp.eq.s32.totalorder %s29, 1
      %p68 = por %p66, %p67
      %p70 = scmp.ne.s32.totalorder %s55, %s69
      %p71 = scmp.eq.s32.totalorder %s29, 0
      %p72 = por %p70, %p71
      %s73 = ssub.s32 %s23, %s30
      %p74 = scmp.eq.s32.totalorder %s73, 0
      %s76 = sadd.s32 %s75, 1
      %s77 = scalar_select %p74, %s75, %s76
      %p80 = pneg %p74
      %p81 = scmp.eq.s32.totalorder %s23, 1
      %p82 = por %p80, %p81
      %p83 = scmp.ne.s32.totalorder %s75, %s78
      %p84 = scmp.eq.s32.totalorder %s23, 0
      %p85 = por %p83, %p84
      %p86 = scmp.ne.s32.totalorder %s75, %s78
      %p87 = scmp.eq.s32.totalorder %s28, 1
      %p88 = por %p86, %p87
      %p89 = scmp.ne.s32.totalorder %s78, %s79
      %p90 = scmp.eq.s32.totalorder %s28, 0
      %p91 = por %p89, %p90
      %p92 = scmp.ne.s32.totalorder %s78, %s79
      %p93 = scmp.eq.s32.totalorder %s29, 1
      %p94 = por %p92, %p93
      %p96 = scmp.ne.s32.totalorder %s79, %s95
      %p97 = scmp.eq.s32.totalorder %s29, 0
      %p98 = por %p96, %p97
      %s99 = ssub.s32 %s23, %s30
      %p100 = scmp.eq.s32.totalorder %s99, 0
      %s102 = sadd.s32 %s101, 1
      %s103 = scalar_select %p100, %s101, %s102
      %p106 = pneg %p100
      %p107 = scmp.eq.s32.totalorder %s23, 1
      %p108 = por %p106, %p107
      %p109 = scmp.ne.s32.totalorder %s101, %s104
      %p110 = scmp.eq.s32.totalorder %s23, 0
      %p111 = por %p109, %p110
      %p112 = scmp.ne.s32.totalorder %s101, %s104
      %p113 = scmp.eq.s32.totalorder %s28, 1
      %p114 = por %p112, %p113
      %p115 = scmp.ne.s32.totalorder %s104, %s105
      %p116 = scmp.eq.s32.totalorder %s28, 0
      %p117 = por %p115, %p116
      %p118 = scmp.ne.s32.totalorder %s104, %s105
      %p119 = scmp.eq.s32.totalorder %s29, 1
      %p120 = por %p118, %p119
      %p122 = scmp.ne.s32.totalorder %s105, %s121
      %p123 = scmp.eq.s32.totalorder %s29, 0
      %p124 = por %p122, %p123
      %s125 = ssub.s32 %s23, %s30
      %p126 = scmp.eq.s32.totalorder %s125, 0
      %s128 = sadd.s32 %s127, 1
      %s129 = scalar_select %p126, %s127, %s128
      %p132 = pneg %p126
      %p133 = scmp.eq.s32.totalorder %s23, 1
      %p134 = por %p132, %p133
      %p135 = scmp.ne.s32.totalorder %s127, %s130
      %p136 = scmp.eq.s32.totalorder %s23, 0
      %p137 = por %p135, %p136
      %p138 = scmp.ne.s32.totalorder %s127, %s130
      %p139 = scmp.eq.s32.totalorder %s28, 1
      %p140 = por %p138, %p139
      %p141 = scmp.ne.s32.totalorder %s130, %s131
      %p142 = scmp.eq.s32.totalorder %s28, 0
      %p143 = por %p141, %p142
      %p144 = scmp.ne.s32.totalorder %s130, %s131
      %p145 = scmp.eq.s32.totalorder %s29, 1
      %p146 = por %p144, %p145
      %p148 = scmp.ne.s32.totalorder %s131, %s147
      %p149 = scmp.eq.s32.totalorder %s29, 0
      %p150 = por %p148, %p149
      %s151 = ssub.s32 %s23, %s30
      %p152 = scmp.eq.s32.totalorder %s151, 0
      %s154 = sadd.s32 %s153, 1
      %s155 = scalar_select %p152, %s153, %s154
      %p158 = pneg %p152
      %p159 = scmp.eq.s32.totalorder %s23, 1
      %p160 = por %p158, %p159
      %p161 = scmp.ne.s32.totalorder %s153, %s156
      %p162 = scmp.eq.s32.totalorder %s23, 0
      %p163 = por %p161, %p162
      %p164 = scmp.ne.s32.totalorder %s153, %s156
      %p165 = scmp.eq.s32.totalorder %s28, 1
      %p166 = por %p164, %p165
      %p167 = scmp.ne.s32.totalorder %s156, %s157
      %p168 = scmp.eq.s32.totalorder %s28, 0
      %p169 = por %p167, %p168
      %p170 = scmp.ne.s32.totalorder %s156, %s157
      %p171 = scmp.eq.s32.totalorder %s29, 1
      %p172 = por %p170, %p171
      %p174 = scmp.ne.s32.totalorder %s157, %s173
      %p175 = scmp.eq.s32.totalorder %s29, 0
      %p176 = por %p174, %p175
      %s177 = ssub.s32 %s23, %s30
      %p178 = scmp.eq.s32.totalorder %s177, 0
      %s180 = sadd.s32 %s179, 1
      %s181 = scalar_select %p178, %s179, %s180
      %p184 = pneg %p178
      %p185 = scmp.eq.s32.totalorder %s23, 1
      %p186 = por %p184, %p185
      %p187 = scmp.ne.s32.totalorder %s179, %s182
      %p188 = scmp.eq.s32.totalorder %s23, 0
      %p189 = por %p187, %p188
      %p190 = scmp.ne.s32.totalorder %s179, %s182
      %p191 = scmp.eq.s32.totalorder %s28, 1
      %p192 = por %p190, %p191
      %p193 = scmp.ne.s32.totalorder %s182, %s183
      %p194 = scmp.eq.s32.totalorder %s28, 0
      %p195 = por %p193, %p194
      %p196 = scmp.ne.s32.totalorder %s182, %s183
      %p197 = scmp.eq.s32.totalorder %s29, 1
      %p198 = por %p196, %p197
      %p200 = scmp.ne.s32.totalorder %s183, %s199
      %p201 = scmp.eq.s32.totalorder %s29, 0
      %p202 = por %p200, %p201
      %s203 = ssub.s32 %s23, %s30
      %p204 = scmp.eq.s32.totalorder %s203, 0
      %s206 = sadd.s32 %s205, 1
      %s207 = scalar_select %p204, %s205, %s206
      %p210 = pneg %p204
      %p211 = scmp.eq.s32.totalorder %s23, 1
      %p212 = por %p210, %p211
      %p213 = scmp.ne.s32.totalorder %s205, %s208
      %p214 = scmp.eq.s32.totalorder %s23, 0
      %p215 = por %p213, %p214
      %p216 = scmp.ne.s32.totalorder %s205, %s208
      %p217 = scmp.eq.s32.totalorder %s28, 1
      %p218 = por %p216, %p217
      %p219 = scmp.ne.s32.totalorder %s208, %s209
      %p220 = scmp.eq.s32.totalorder %s28, 0
      %p221 = por %p219, %p220
      %p222 = scmp.ne.s32.totalorder %s208, %s209
      %p223 = scmp.eq.s32.totalorder %s29, 1
      %p224 = por %p222, %p223
      %p226 = scmp.ne.s32.totalorder %s209, %s225
      %p227 = scmp.eq.s32.totalorder %s29, 0
      %p228 = por %p226, %p227
      %s229 = ssub.s32 %s23, %s30
      %p230 = scmp.eq.s32.totalorder %s229, 0
      %s232 = sadd.s32 %s231, 1
      %s233 = scalar_select %p230, %s231, %s232
      %p236 = pneg %p230
      %p237 = scmp.eq.s32.totalorder %s23, 1
      %p238 = por %p236, %p237
      %p239 = scmp.ne.s32.totalorder %s231, %s234
      %p240 = scmp.eq.s32.totalorder %s23, 0
      %p241 = por %p239, %p240
      %p242 = scmp.ne.s32.totalorder %s231, %s234
      %p243 = scmp.eq.s32.totalorder %s28, 1
      %p244 = por %p242, %p243
      %p245 = scmp.ne.s32.totalorder %s234, %s235
      %p246 = scmp.eq.s32.totalorder %s28, 0
      %p247 = por %p245, %p246
      %p248 = scmp.ne.s32.totalorder %s234, %s235
      %p249 = scmp.eq.s32.totalorder %s29, 1
      %p250 = por %p248, %p249
      %p252 = scmp.ne.s32.totalorder %s235, %s251
      %p253 = scmp.eq.s32.totalorder %s29, 0
      %p254 = por %p252, %p253
      %s255 = ssub.s32 %s23, %s30
      %p256 = scmp.eq.s32.totalorder %s255, 0
      %s258 = sadd.s32 %s257, 1
      %s259 = scalar_select %p256, %s257, %s258
      %p262 = pneg %p256
      %p263 = scmp.eq.s32.totalorder %s23, 1
      %p264 = por %p262, %p263
      %p265 = scmp.ne.s32.totalorder %s257, %s260
      %p266 = scmp.eq.s32.totalorder %s23, 0
      %p267 = por %p265, %p266
      %p268 = scmp.ne.s32.totalorder %s257, %s260
      %p269 = scmp.eq.s32.totalorder %s28, 1
      %p270 = por %p268, %p269
      %p271 = scmp.ne.s32.totalorder %s260, %s261
      %p272 = scmp.eq.s32.totalorder %s28, 0
      %p273 = por %p271, %p272
      %p274 = scmp.ne.s32.totalorder %s260, %s261
      %p275 = scmp.eq.s32.totalorder %s29, 1
      %p276 = por %p274, %p275
      %p278 = scmp.ne.s32.totalorder %s261, %s277
      %p279 = scmp.eq.s32.totalorder %s29, 0
      %p280 = por %p278, %p279
      %s281 = ssub.s32 %s23, %s30
      %p282 = scmp.eq.s32.totalorder %s281, 0
      %s284 = sadd.s32 %s283, 1
      %s285 = scalar_select %p282, %s283, %s284
      %p288 = pneg %p282
      %p289 = scmp.eq.s32.totalorder %s23, 1
      %p290 = por %p288, %p289
      %p291 = scmp.ne.s32.totalorder %s283, %s286
      %p292 = scmp.eq.s32.totalorder %s23, 0
      %p293 = por %p291, %p292
      %p294 = scmp.ne.s32.totalorder %s283, %s286
      %p295 = scmp.eq.s32.totalorder %s28, 1
      %p296 = por %p294, %p295
      %p297 = scmp.ne.s32.totalorder %s286, %s287
      %p298 = scmp.eq.s32.totalorder %s28, 0
      %p299 = por %p297, %p298
      %p300 = scmp.ne.s32.totalorder %s286, %s287
      %p301 = scmp.eq.s32.totalorder %s29, 1
      %p302 = por %p300, %p301
      %p304 = scmp.ne.s32.totalorder %s287, %s303
      %p305 = scmp.eq.s32.totalorder %s29, 0
      %p306 = por %p304, %p305
      %s307 = ssub.s32 %s23, %s30
      %p308 = scmp.eq.s32.totalorder %s307, 0
      %s310 = sadd.s32 %s309, 1
      %s311 = scalar_select %p308, %s309, %s310
      %p314 = pneg %p308
      %p315 = scmp.eq.s32.totalorder %s23, 1
      %p316 = por %p314, %p315
      %p317 = scmp.ne.s32.totalorder %s309, %s312
      %p318 = scmp.eq.s32.totalorder %s23, 0
      %p319 = por %p317, %p318
      %p320 = scmp.ne.s32.totalorder %s309, %s312
      %p321 = scmp.eq.s32.totalorder %s28, 1
      %p322 = por %p320, %p321
      %p323 = scmp.ne.s32.totalorder %s312, %s313
      %p324 = scmp.eq.s32.totalorder %s28, 0
      %p325 = por %p323, %p324
      %p326 = scmp.ne.s32.totalorder %s312, %s313
      %p327 = scmp.eq.s32.totalorder %s29, 1
      %p328 = por %p326, %p327
      %p330 = scmp.ne.s32.totalorder %s313, %s329
      %p331 = scmp.eq.s32.totalorder %s29, 0
      %p332 = por %p330, %p331
      %s333 = ssub.s32 %s23, %s30
      %p334 = scmp.eq.s32.totalorder %s333, 0
      %s336 = sadd.s32 %s335, 1
      %s337 = scalar_select %p334, %s335, %s336
      %p340 = pneg %p334
      %p341 = scmp.eq.s32.totalorder %s23, 1
      %p342 = por %p340, %p341
      %p343 = scmp.ne.s32.totalorder %s335, %s338
      %p344 = scmp.eq.s32.totalorder %s23, 0
      %p345 = por %p343, %p344
      %p346 = scmp.ne.s32.totalorder %s335, %s338
      %p347 = scmp.eq.s32.totalorder %s28, 1
      %p348 = por %p346, %p347
      %p349 = scmp.ne.s32.totalorder %s338, %s339
      %p350 = scmp.eq.s32.totalorder %s28, 0
      %p351 = por %p349, %p350
      %p352 = scmp.ne.s32.totalorder %s338, %s339
      %p353 = scmp.eq.s32.totalorder %s29, 1
      %p354 = por %p352, %p353
      %p356 = scmp.ne.s32.totalorder %s339, %s355
      %p357 = scmp.eq.s32.totalorder %s29, 0
      %p358 = por %p356, %p357
      %s359 = ssub.s32 %s23, %s30
      %p360 = scmp.eq.s32.totalorder %s359, 0
      %s362 = sadd.s32 %s361, 1
      %s363 = scalar_select %p360, %s361, %s362
      %p366 = pneg %p360
      %p367 = scmp.eq.s32.totalorder %s23, 1
      %p368 = por %p366, %p367
      %p369 = scmp.ne.s32.totalorder %s361, %s364
      %p370 = scmp.eq.s32.totalorder %s23, 0
      %p371 = por %p369, %p370
      %p372 = scmp.ne.s32.totalorder %s361, %s364
      %p373 = scmp.eq.s32.totalorder %s28, 1
      %p374 = por %p372, %p373
      %p375 = scmp.ne.s32.totalorder %s364, %s365
      %p376 = scmp.eq.s32.totalorder %s28, 0
      %p377 = por %p375, %p376
      %p378 = scmp.ne.s32.totalorder %s364, %s365
      %p379 = scmp.eq.s32.totalorder %s29, 1
      %p380 = por %p378, %p379
      %p382 = scmp.ne.s32.totalorder %s365, %s381
      %p383 = scmp.eq.s32.totalorder %s29, 0
      %p384 = por %p382, %p383
      %s386 = sadd.s32 %s385, 1
      %p389 = scmp.eq.s32.totalorder %s23, 1
      %p390 = scmp.ne.s32.totalorder %s385, %s387
      %p391 = scmp.eq.s32.totalorder %s23, 0
      %p392 = por %p390, %p391
      %p393 = scmp.ne.s32.totalorder %s385, %s387
      %p394 = scmp.eq.s32.totalorder %s28, 1
      %p395 = por %p393, %p394
      %p396 = scmp.ne.s32.totalorder %s387, %s388
      %p397 = scmp.eq.s32.totalorder %s28, 0
      %p398 = por %p396, %p397
      %p399 = scmp.ne.s32.totalorder %s387, %s388
      %p400 = scmp.eq.s32.totalorder %s29, 1
      %p401 = por %p399, %p400
      %p403 = scmp.ne.s32.totalorder %s388, %s402
      %p404 = scmp.eq.s32.totalorder %s29, 0
      %p405 = por %p403, %p404
      %s407 = sadd.s32 %s406, 1
      %p410 = scmp.eq.s32.totalorder %s23, 1
      %p411 = scmp.ne.s32.totalorder %s406, %s408
      %p412 = scmp.eq.s32.totalorder %s23, 0
      %p413 = por %p411, %p412
      %p414 = scmp.ne.s32.totalorder %s406, %s408
      %p415 = scmp.eq.s32.totalorder %s28, 1
      %p416 = por %p414, %p415
      %p417 = scmp.ne.s32.totalorder %s408, %s409
      %p418 = scmp.eq.s32.totalorder %s28, 0
      %p419 = por %p417, %p418
      %p420 = scmp.ne.s32.totalorder %s408, %s409
      %p421 = scmp.eq.s32.totalorder %s29, 1
      %p422 = por %p420, %p421
      %p424 = scmp.ne.s32.totalorder %s409, %s423
      %p425 = scmp.eq.s32.totalorder %s29, 0
      %p426 = por %p424, %p425
      %s428 = sadd.s32 %s427, 1
      %p431 = scmp.eq.s32.totalorder %s23, 1
      %p432 = scmp.ne.s32.totalorder %s427, %s429
      %p433 = scmp.eq.s32.totalorder %s23, 0
      %p434 = por %p432, %p433
      %p435 = scmp.ne.s32.totalorder %s427, %s429
      %p436 = scmp.eq.s32.totalorder %s28, 1
      %p437 = por %p435, %p436
      %p438 = scmp.ne.s32.totalorder %s429, %s430
      %p439 = scmp.eq.s32.totalorder %s28, 0
      %p440 = por %p438, %p439
      %p441 = scmp.ne.s32.totalorder %s429, %s430
      %p442 = scmp.eq.s32.totalorder %s29, 1
      %p443 = por %p441, %p442
      %p445 = scmp.ne.s32.totalorder %s430, %s444
      %p446 = scmp.eq.s32.totalorder %s29, 0
      %p447 = por %p445, %p446
      %p448 = scmp.le.s32.totalorder 1, %s23
      %p449 = scmp.lt.s32.totalorder %s23, 3
      %p450 = pnand %p448, %p449
      %p451 = pneg %p450
      // Predicated region
      $region9: #{forward.3} parent=5 // pred_check
        _
      $region10: #{forward.3} parent=5 // pred_check_branch
        %453 = sbr.rel (%p450) target = $region12
      $region11: #{forward.3} parent=5 // pred_region
        %s454 = ssub.s32 %s23, 1
        // Predicated region
        $region13: #{forward.3} parent=11 // pred_check
          %p455 = pneg %p44
        $region14: #{forward.3} parent=11 // pred_check_branch
          %457 = sbr.rel (%p455) target = $region16
        $region15: #{forward.3} parent=11 // pred_region
          _
        $region16: #{forward.3} parent=11 // pred_fallthru
          _
        // Predicated region
        $region17: #{forward.3} parent=11 // pred_check
          %p458 = pneg %p65
        $region18: #{forward.3} parent=11 // pred_check_branch
          %460 = sbr.rel (%p458) target = $region20
        $region19: #{forward.3} parent=11 // pred_region
          _
        $region20: #{forward.3} parent=11 // pred_fallthru
          _
        // Predicated region
        $region21: #{forward.3} parent=11 // pred_check
          %p461 = pneg %p398
        $region22: #{forward.3} parent=11 // pred_check_branch
          %463 = sbr.rel (%p461) target = $region24
        $region23: #{forward.3} parent=11 // pred_region
          _
        $region24: #{forward.3} parent=11 // pred_fallthru
          _
        // Predicated region
        $region25: #{forward.3} parent=11 // pred_check
          %p464 = pneg %p419
        $region26: #{forward.3} parent=11 // pred_check_branch
          %466 = sbr.rel (%p464) target = $region28
        $region27: #{forward.3} parent=11 // pred_region
          _
        $region28: #{forward.3} parent=11 // pred_fallthru
          _
      $region12: #{forward.3} parent=5 // pred_fallthru
        _
      %p467 = scmp.lt.s32.totalorder %s23, 2
      // Predicated region
      $region29: #{forward.3} parent=5 // pred_check
        %p468 = pneg %p467
      $region30: #{forward.3} parent=5 // pred_check_branch
        %470 = sbr.rel (%p468) target = $region32
      $region31: #{forward.3} parent=5 // pred_region
        // Predicated region
        $region33: #{forward.3} parent=31 // pred_check
          %p471 = pneg %p85
        $region34: #{forward.3} parent=31 // pred_check_branch
          %473 = sbr.rel (%p471) target = $region36
        $region35: #{forward.3} parent=31 // pred_region
          %p474 = scmp.lt.s32.totalorder %s23, 1
          %s475 = scalar_select %p474, %s23, 1
          %s476 = smul.addr %s475, 48
          %s477 = smul.addr %s476, 4
          %s478 = scalar_lea.vmem %s2, %s477
        $region36: #{forward.3} parent=31 // pred_fallthru
          _
        // Predicated region
        $region37: #{forward.3} parent=31 // pred_check
          %p479 = pneg %p111
        $region38: #{forward.3} parent=31 // pred_check_branch
          %481 = sbr.rel (%p479) target = $region40
        $region39: #{forward.3} parent=31 // pred_region
          %p482 = scmp.lt.s32.totalorder %s23, 1
          %s483 = scalar_select %p482, %s23, 1
          %s484 = smul.addr %s483, 3
          %s485 = scalar_lea.vmem %s3, %s484
        $region40: #{forward.3} parent=31 // pred_fallthru
          _
        // Predicated region
        $region41: #{forward.3} parent=31 // pred_check
          %p486 = pneg %p137
        $region42: #{forward.3} parent=31 // pred_check_branch
          %488 = sbr.rel (%p486) target = $region44
        $region43: #{forward.3} parent=31 // pred_region
          %p489 = scmp.lt.s32.totalorder %s23, 1
          %s490 = scalar_select %p489, %s23, 1
          %s491 = smul.addr %s490, 16
          %s492 = smul.addr %s491, 4
          %s493 = scalar_lea.vmem %s4, %s492
        $region44: #{forward.3} parent=31 // pred_fallthru
          _
        // Predicated region
        $region45: #{forward.3} parent=31 // pred_check
          %p494 = pneg %p163
        $region46: #{forward.3} parent=31 // pred_check_branch
          %496 = sbr.rel (%p494) target = $region48
        $region47: #{forward.3} parent=31 // pred_region
          %p497 = scmp.lt.s32.totalorder %s23, 1
          %s498 = scalar_select %p497, %s23, 1
          %s499 = scalar_lea.vmem %s5, %s498
        $region48: #{forward.3} parent=31 // pred_fallthru
          _
        // Predicated region
        $region49: #{forward.3} parent=31 // pred_check
          %p500 = pneg %p189
        $region50: #{forward.3} parent=31 // pred_check_branch
          %502 = sbr.rel (%p500) target = $region52
        $region51: #{forward.3} parent=31 // pred_region
          %p503 = scmp.lt.s32.totalorder %s23, 1
          %s504 = scalar_select %p503, %s23, 1
          %s505 = scalar_lea.vmem %s6, %s504
        $region52: #{forward.3} parent=31 // pred_fallthru
          _
        // Predicated region
        $region53: #{forward.3} parent=31 // pred_check
          %p506 = pneg %p215
        $region54: #{forward.3} parent=31 // pred_check_branch
          %508 = sbr.rel (%p506) target = $region56
        $region55: #{forward.3} parent=31 // pred_region
          %p509 = scmp.lt.s32.totalorder %s23, 1
          %s510 = scalar_select %p509, %s23, 1
          %s511 = scalar_lea.vmem %s7, %s510
        $region56: #{forward.3} parent=31 // pred_fallthru
          _
        // Predicated region
        $region57: #{forward.3} parent=31 // pred_check
          %p512 = pneg %p241
        $region58: #{forward.3} parent=31 // pred_check_branch
          %514 = sbr.rel (%p512) target = $region60
        $region59: #{forward.3} parent=31 // pred_region
          %p515 = scmp.lt.s32.totalorder %s23, 1
          %s516 = scalar_select %p515, %s23, 1
          %s517 = smul.addr %s516, 32
          %s518 = smul.addr %s517, 4
          %s519 = scalar_lea.vmem %s8, %s518
        $region60: #{forward.3} parent=31 // pred_fallthru
          _
        // Predicated region
        $region61: #{forward.3} parent=31 // pred_check
          %p520 = pneg %p267
        $region62: #{forward.3} parent=31 // pred_check_branch
          %522 = sbr.rel (%p520) target = $region64
        $region63: #{forward.3} parent=31 // pred_region
          %p523 = scmp.lt.s32.totalorder %s23, 1
          %s524 = scalar_select %p523, %s23, 1
          %s525 = smul.addr %s524, 2
          %s526 = scalar_lea.vmem %s9, %s525
        $region64: #{forward.3} parent=31 // pred_fallthru
          _
        // Predicated region
        $region65: #{forward.3} parent=31 // pred_check
          %p527 = pneg %p293
        $region66: #{forward.3} parent=31 // pred_check_branch
          %529 = sbr.rel (%p527) target = $region68
        $region67: #{forward.3} parent=31 // pred_region
          %p530 = scmp.lt.s32.totalorder %s23, 1
          %s531 = scalar_select %p530, %s23, 1
          %s532 = smul.addr %s531, 32
          %s533 = smul.addr %s532, 4
          %s534 = scalar_lea.vmem %s10, %s533
        $region68: #{forward.3} parent=31 // pred_fallthru
          _
        // Predicated region
        $region69: #{forward.3} parent=31 // pred_check
          %p535 = pneg %p319
        $region70: #{forward.3} parent=31 // pred_check_branch
          %537 = sbr.rel (%p535) target = $region72
        $region71: #{forward.3} parent=31 // pred_region
          %p538 = scmp.lt.s32.totalorder %s23, 1
          %s539 = scalar_select %p538, %s23, 1
          %s540 = scalar_lea.vmem %s11, %s539
        $region72: #{forward.3} parent=31 // pred_fallthru
          _
        // Predicated region
        $region73: #{forward.3} parent=31 // pred_check
          %p541 = pneg %p345
        $region74: #{forward.3} parent=31 // pred_check_branch
          %543 = sbr.rel (%p541) target = $region76
        $region75: #{forward.3} parent=31 // pred_region
          %p544 = scmp.lt.s32.totalorder %s23, 1
          %s545 = scalar_select %p544, %s23, 1
          %s546 = scalar_lea.vmem %s12, %s545
        $region76: #{forward.3} parent=31 // pred_fallthru
          _
        // Predicated region
        $region77: #{forward.3} parent=31 // pred_check
          %p547 = pneg %p371
        $region78: #{forward.3} parent=31 // pred_check_branch
          %549 = sbr.rel (%p547) target = $region80
        $region79: #{forward.3} parent=31 // pred_region
          %p550 = scmp.lt.s32.totalorder %s23, 1
          %s551 = scalar_select %p550, %s23, 1
          %s552 = scalar_lea.vmem %s13, %s551
        $region80: #{forward.3} parent=31 // pred_fallthru
          _
      $region32: #{forward.3} parent=5 // pred_fallthru
        _
      %p553 = scmp.le.s32.totalorder 1, %s23
      %p554 = scmp.lt.s32.totalorder %s23, 3
      %p555 = pnand %p553, %p554
      %p556 = pneg %p555
      // Predicated region
      $region81: #{forward.3} parent=5 // pred_check
        _
      $region82: #{forward.3} parent=5 // pred_check_branch
        %558 = sbr.rel (%p555) target = $region84
      $region83: #{forward.3} parent=5 // pred_region
        %s559 = ssub.s32 %s23, 1
        %p560 = pneg %p44
        %p561 = pneg %p41
        %p562 = pneg %p65
        %p563 = pneg %p62
        %p564 = scmp.lt.s32.totalorder %s28, 1
        %s565 = scalar_select %p564, %s28, 1
        %s566 = smul.addr %s565, 48
        %s567 = smul.addr %s566, 4
        %s568 = scalar_lea.vmem %s2, %s567
        %p569 = pneg %p91
        %p570 = pneg %p88
        %p571 = scmp.lt.s32.totalorder %s28, 1
        %s572 = scalar_select %p571, %s28, 1
        %s573 = smul.addr %s572, 3
        %s574 = scalar_lea.vmem %s3, %s573
        %p575 = pneg %p117
        %p576 = pneg %p114
        %p577 = scmp.lt.s32.totalorder %s28, 1
        %s578 = scalar_select %p577, %s28, 1
        %s579 = smul.addr %s578, 16
        %s580 = smul.addr %s579, 4
        %s581 = scalar_lea.vmem %s4, %s580
        %p582 = pneg %p143
        %p583 = pneg %p140
        %p584 = scmp.lt.s32.totalorder %s28, 1
        %s585 = scalar_select %p584, %s28, 1
        %s586 = scalar_lea.vmem %s5, %s585
        %p587 = pneg %p169
        %p588 = pneg %p166
        %p589 = scmp.lt.s32.totalorder %s28, 1
        %s590 = scalar_select %p589, %s28, 1
        %s591 = scalar_lea.vmem %s6, %s590
        %p592 = pneg %p195
        %p593 = pneg %p192
        %p594 = scmp.lt.s32.totalorder %s28, 1
        %s595 = scalar_select %p594, %s28, 1
        %s596 = scalar_lea.vmem %s7, %s595
        %p597 = pneg %p221
        %p598 = pneg %p218
        %p599 = scmp.lt.s32.totalorder %s28, 1
        %s600 = scalar_select %p599, %s28, 1
        %s601 = smul.addr %s600, 32
        %s602 = smul.addr %s601, 4
        %s603 = scalar_lea.vmem %s8, %s602
        %p604 = pneg %p247
        %p605 = pneg %p244
        %p606 = scmp.lt.s32.totalorder %s28, 1
        %s607 = scalar_select %p606, %s28, 1
        %s608 = smul.addr %s607, 2
        %s609 = scalar_lea.vmem %s9, %s608
        %p610 = pneg %p273
        %p611 = pneg %p270
        %p612 = scmp.lt.s32.totalorder %s28, 1
        %s613 = scalar_select %p612, %s28, 1
        %s614 = smul.addr %s613, 32
        %s615 = smul.addr %s614, 4
        %s616 = scalar_lea.vmem %s10, %s615
        %p617 = pneg %p299
        %p618 = pneg %p296
        %p619 = scmp.lt.s32.totalorder %s28, 1
        %s620 = scalar_select %p619, %s28, 1
        %s621 = scalar_lea.vmem %s11, %s620
        %p622 = pneg %p325
        %p623 = pneg %p322
        %p624 = scmp.lt.s32.totalorder %s28, 1
        %s625 = scalar_select %p624, %s28, 1
        %s626 = scalar_lea.vmem %s12, %s625
        %p627 = pneg %p351
        %p628 = pneg %p348
        %p629 = scmp.lt.s32.totalorder %s28, 1
        %s630 = scalar_select %p629, %s28, 1
        %s631 = scalar_lea.vmem %s13, %s630
        %p632 = pneg %p377
        %p633 = pneg %p374
        %p634 = pneg %p398
        %p635 = pneg %p395
        %p636 = pneg %p419
        %p637 = pneg %p416
        %p638 = pneg %p440
        %p639 = pneg %p437
        %p640 = scmp.lt.s32.totalorder %s28, 1
        %s641 = scalar_select %p640, %s28, 1
        %s642 = smul.addr %s641, 48
        %s643 = smul.addr %s642, 4
        %s644 = scalar_lea.vmem %s2, %s643
        %p645 = scmp.lt.s32.totalorder %s28, 1
        %s646 = scalar_select %p645, %s28, 1
        %s647 = smul.addr %s646, 3
        %s648 = scalar_lea.vmem %s3, %s647
        %p649 = scmp.lt.s32.totalorder %s28, 1
        %s650 = scalar_select %p649, %s28, 1
        %s651 = smul.addr %s650, 16
        %s652 = smul.addr %s651, 4
        %s653 = scalar_lea.vmem %s4, %s652
        %p654 = scmp.lt.s32.totalorder %s28, 1
        %s655 = scalar_select %p654, %s28, 1
        %s656 = scalar_lea.vmem %s5, %s655
        %p657 = scmp.lt.s32.totalorder %s28, 1
        %s658 = scalar_select %p657, %s28, 1
        %s659 = scalar_lea.vmem %s6, %s658
        %p660 = scmp.lt.s32.totalorder %s28, 1
        %s661 = scalar_select %p660, %s28, 1
        %s662 = scalar_lea.vmem %s7, %s661
        %p663 = scmp.lt.s32.totalorder %s28, 1
        %s664 = scalar_select %p663, %s28, 1
        %s665 = smul.addr %s664, 32
        %s666 = smul.addr %s665, 4
        %s667 = scalar_lea.vmem %s8, %s666
        %p668 = scmp.lt.s32.totalorder %s28, 1
        %s669 = scalar_select %p668, %s28, 1
        %s670 = smul.addr %s669, 2
        %s671 = scalar_lea.vmem %s9, %s670
        %p672 = scmp.lt.s32.totalorder %s28, 1
        %s673 = scalar_select %p672, %s28, 1
        %s674 = smul.addr %s673, 32
        %s675 = smul.addr %s674, 4
        %s676 = scalar_lea.vmem %s10, %s675
        %p677 = scmp.lt.s32.totalorder %s28, 1
        %s678 = scalar_select %p677, %s28, 1
        %s679 = scalar_lea.vmem %s11, %s678
        %p680 = scmp.lt.s32.totalorder %s28, 1
        %s681 = scalar_select %p680, %s28, 1
        %s682 = scalar_lea.vmem %s12, %s681
        %p683 = scmp.lt.s32.totalorder %s28, 1
        %s684 = scalar_select %p683, %s28, 1
        %s685 = scalar_lea.vmem %s13, %s684
        %p687 = scmp.eq.s32.totalorder %s28, 0
        // Predicated region
        $region85: #{forward.3} parent=83 // pred_check
          %p688 = pneg %p687
        $region86: #{forward.3} parent=83 // pred_check_branch
          %690 = sbr.rel (%p688) target = $region88
        $region87: #{forward.3} parent=83 // pred_region
          %v691 = vld [vmem:[%s0] sm:$0xff]
          %692 = vst [vmem:[#allocation2] sm:$0xff] %v691
        $region88: #{forward.3} parent=83 // pred_fallthru
          _
        %v693 = vld [vmem:[#allocation2] sm:$0xff]
        %v694 = vpack.c.bf16 %v693, %v693
        %v695 = vld [vmem:[%s644] sm:$0xff]
        %v696 = vld [vmem:[%s644 + $0x8] sm:$0xf]
        %v697 = vld [vmem:[%s644 + $0xc] sm:$0xff]
        %v698 = vld [vmem:[%s644 + $0x14] sm:$0xf]
        %v699 = vld [vmem:[%s644 + $0x18] sm:$0xff]
        %v700 = vld [vmem:[%s644 + $0x20] sm:$0xf]
        %v701 = vld [vmem:[%s644 + $0x24] sm:$0xff]
        %v702 = vld [vmem:[%s644 + $0x2c] sm:$0xf]
        %v703 = vld [vmem:[%s644 + $0x30] sm:$0xff]
        %v704 = vld [vmem:[%s644 + $0x38] sm:$0xf]
        %v705 = vld [vmem:[%s644 + $0x3c] sm:$0xff]
        %v706 = vld [vmem:[%s644 + $0x44] sm:$0xf]
        %v707 = vld [vmem:[%s644 + $0x48] sm:$0xff]
        %v708 = vld [vmem:[%s644 + $0x50] sm:$0xf]
        %v709 = vld [vmem:[%s644 + $0x54] sm:$0xff]
        %v710 = vld [vmem:[%s644 + $0x5c] sm:$0xf]
        %v711 = vld [vmem:[%s644 + $0x60] sm:$0xff]
        %v712 = vld [vmem:[%s644 + $0x68] sm:$0xf]
        %v713 = vld [vmem:[%s644 + $0x6c] sm:$0xff]
        %v714 = vld [vmem:[%s644 + $0x74] sm:$0xf]
        %v715 = vld [vmem:[%s644 + $0x78] sm:$0xff]
        %v716 = vld [vmem:[%s644 + $0x80] sm:$0xf]
        %v717 = vld [vmem:[%s644 + $0x84] sm:$0xff]
        %v718 = vld [vmem:[%s644 + $0x8c] sm:$0xf]
        %v719 = vld [vmem:[%s644 + $0x90] sm:$0xff]
        %v720 = vld [vmem:[%s644 + $0x98] sm:$0xf]
        %v721 = vld [vmem:[%s644 + $0x9c] sm:$0xff]
        %v722 = vld [vmem:[%s644 + $0xa4] sm:$0xf]
        %v723 = vld [vmem:[%s644 + $0xa8] sm:$0xff]
        %v724 = vld [vmem:[%s644 + $0xb0] sm:$0xf]
        %v725 = vld [vmem:[%s644 + $0xb4] sm:$0xff]
        %v726 = vld [vmem:[%s644 + $0xbc] sm:$0xf]
        %v727 = vld [vmem:[%s648] sm:$0x7]
        %v729 = vlaneseq
        %v730 = vshrl.u32 %v729, 7
        %v731 = vsub.s32 0, %v730
        %v732 = vrot.slane %v727, %v731
        %v733 = vlaneseq
        %v734 = vshrl.u32 %v733, 7
        %v735 = vsub.s32 1, %v734
        %v736 = vrot.slane %v727, %v735
        %v737 = vlaneseq
        %v738 = vshrl.u32 %v737, 7
        %v739 = vsub.s32 2, %v738
        %v740 = vrot.slane %v727, %v739
        %v776 = vunpack.c.l.b16 %v695
        %v777 = vunpack.c.h.b16 %v695
        %v778 = vunpack.c.l.b16 %v696
        %v779 = vunpack.c.l.b16 %v697
        %v780 = vunpack.c.h.b16 %v697
        %v781 = vunpack.c.l.b16 %v698
        %v782 = vunpack.c.l.b16 %v699
        %v783 = vunpack.c.h.b16 %v699
        %v784 = vunpack.c.l.b16 %v700
        %v785 = vunpack.c.l.b16 %v701
        %v786 = vunpack.c.h.b16 %v701
        %v787 = vunpack.c.l.b16 %v702
        %v788 = vunpack.c.l.b16 %v703
        %v789 = vunpack.c.h.b16 %v703
        %v790 = vunpack.c.l.b16 %v704
        %v791 = vunpack.c.l.b16 %v705
        %v792 = vunpack.c.h.b16 %v705
        %v793 = vunpack.c.l.b16 %v706
        %v794 = vunpack.c.l.b16 %v707
        %v795 = vunpack.c.h.b16 %v707
        %v796 = vunpack.c.l.b16 %v708
        %v797 = vunpack.c.l.b16 %v709
        %v798 = vunpack.c.h.b16 %v709
        %v799 = vunpack.c.l.b16 %v710
        %v800 = vunpack.c.l.b16 %v711
        %v801 = vunpack.c.h.b16 %v711
        %v802 = vunpack.c.l.b16 %v712
        %v803 = vunpack.c.l.b16 %v713
        %v804 = vunpack.c.h.b16 %v713
        %v805 = vunpack.c.l.b16 %v714
        %v806 = vunpack.c.l.b16 %v715
        %v807 = vunpack.c.h.b16 %v715
        %v808 = vunpack.c.l.b16 %v716
        %v809 = vunpack.c.l.b16 %v717
        %v810 = vunpack.c.h.b16 %v717
        %v811 = vunpack.c.l.b16 %v718
        %v812 = vunpack.c.l.b16 %v719
        %v813 = vunpack.c.h.b16 %v719
        %v814 = vunpack.c.l.b16 %v720
        %v815 = vunpack.c.l.b16 %v721
        %v816 = vunpack.c.h.b16 %v721
        %v817 = vunpack.c.l.b16 %v722
        %v818 = vunpack.c.l.b16 %v723
        %v819 = vunpack.c.h.b16 %v723
        %v820 = vunpack.c.l.b16 %v724
        %v821 = vunpack.c.l.b16 %v725
        %v822 = vunpack.c.h.b16 %v725
        %v823 = vunpack.c.l.b16 %v726
        %v824 = vpack.c.b16 %v779, %v776
        %v825 = vpack.c.b16 %v780, %v777
        %v826 = vpack.c.b16 %v781, %v778
        %v827 = vpack.c.b16 %v785, %v782
        %v828 = vpack.c.b16 %v786, %v783
        %v829 = vpack.c.b16 %v787, %v784
        %v830 = vpack.c.b16 %v791, %v788
        %v831 = vpack.c.b16 %v792, %v789
        %v832 = vpack.c.b16 %v793, %v790
        %v833 = vpack.c.b16 %v797, %v794
        %v834 = vpack.c.b16 %v798, %v795
        %v835 = vpack.c.b16 %v799, %v796
        %v836 = vpack.c.b16 %v803, %v800
        %v837 = vpack.c.b16 %v804, %v801
        %v838 = vpack.c.b16 %v805, %v802
        %v839 = vpack.c.b16 %v809, %v806
        %v840 = vpack.c.b16 %v810, %v807
        %v841 = vpack.c.b16 %v811, %v808
        %v842 = vpack.c.b16 %v815, %v812
        %v843 = vpack.c.b16 %v816, %v813
        %v844 = vpack.c.b16 %v817, %v814
        %v845 = vpack.c.b16 %v821, %v818
        %v846 = vpack.c.b16 %v822, %v819
        %v847 = vpack.c.b16 %v823, %v820
        %872 = vmatprep.subr.bf16.mxu0 %v846
        %873 = vmatpush1.bf16.msra.mxu0 %v845
        %874 = vmatprep.subr.bf16.mxu0 %v843
        %875 = vmatpush1.bf16.msra.mxu0 %v842
        %876 = vmatprep.subr.bf16.mxu0 %v840
        %877 = vmatpush1.bf16.msra.mxu0 %v839
        %878 = vmatprep.subr.bf16.mxu0 %v837
        %879 = vmatpush1.bf16.msra.mxu0 %v836
        %880 = vmatprep.subr.bf16.mxu0 %v834
        %881 = vmatpush1.bf16.msra.mxu0 %v833
        %882 = vmatprep.subr.bf16.mxu0 %v831
        %883 = vmatpush1.bf16.msra.mxu0 %v830
        %884 = vmatprep.subr.bf16.mxu0 %v828
        %885 = vmatpush1.bf16.msra.mxu0 %v827
        %886 = vmatprep.subr.bf16.mxu0 %v825
        %887 = vmatpush1.bf16.msra.mxu0 %v824
        %888 = vmatprep.subr.bf16.mxu0 0
        %889 = vmatpush2.bf16.msra.mxu0 0
        %890 = vmatprep.subr.bf16.mxu0 0
        %891 = vmatpush2.bf16.msra.mxu0 0
        %892 = vmatprep.subr.bf16.mxu0 0
        %893 = vmatpush2.bf16.msra.mxu0 0
        %894 = vmatprep.subr.bf16.mxu0 0
        %895 = vmatpush2.bf16.msra.mxu0 0
        %896 = vmatprep.subr.bf16.mxu0 0
        %897 = vmatpush2.bf16.msra.mxu0 0
        %898 = vmatprep.subr.bf16.mxu0 0
        %899 = vmatpush2.bf16.msra.mxu0 0
        %900 = vmatprep.subr.bf16.mxu0 0
        %901 = vmatpush2.bf16.msra.mxu0 0
        %902 = vmatprep.subr.bf16.mxu0 0
        %903 = vmatpush2.bf16.msra.mxu0 0
        %904 = vmatprep.mubr.bf16.mxu0 0
        %905 = vmatmul.mubr.bf16.gmra.mxu0 %v694
        %v906 = vpop.f32.mrf.mxu0
        %v907 = vadd.f32 %v732, %v906
        %v908 = vpop.f32.mrf.mxu0
        %v909 = vadd.f32 %v736, %v908
        %v910 = vpop.f32.mrf.mxu0
        %v911 = vpop.f32.mrf.mxu0
        %912 = vdwg.mxu0
        %913 = vmatprep.subr.bf16.mxu0 0
        %914 = vmatpush1.bf16.msra.mxu0 %v847
        %915 = vmatprep.subr.bf16.mxu0 0
        %916 = vmatpush1.bf16.msra.mxu0 %v844
        %917 = vmatprep.subr.bf16.mxu0 0
        %918 = vmatpush1.bf16.msra.mxu0 %v841
        %919 = vmatprep.subr.bf16.mxu0 0
        %920 = vmatpush1.bf16.msra.mxu0 %v838
        %921 = vmatprep.subr.bf16.mxu0 0
        %922 = vmatpush1.bf16.msra.mxu0 %v835
        %923 = vmatprep.subr.bf16.mxu0 0
        %924 = vmatpush1.bf16.msra.mxu0 %v832
        %925 = vmatprep.subr.bf16.mxu0 0
        %926 = vmatpush1.bf16.msra.mxu0 %v829
        %927 = vmatprep.subr.bf16.mxu0 0
        %928 = vmatpush1.bf16.msra.mxu0 %v826
        %929 = vmatprep.subr.bf16.mxu0 0
        %930 = vmatpush2.bf16.msra.mxu0 0
        %931 = vmatprep.subr.bf16.mxu0 0
        %932 = vmatpush2.bf16.msra.mxu0 0
        %933 = vmatprep.subr.bf16.mxu0 0
        %934 = vmatpush2.bf16.msra.mxu0 0
        %935 = vmatprep.subr.bf16.mxu0 0
        %936 = vmatpush2.bf16.msra.mxu0 0
        %937 = vmatprep.subr.bf16.mxu0 0
        %938 = vmatpush2.bf16.msra.mxu0 0
        %939 = vmatprep.subr.bf16.mxu0 0
        %940 = vmatpush2.bf16.msra.mxu0 0
        %941 = vmatprep.subr.bf16.mxu0 0
        %942 = vmatpush2.bf16.msra.mxu0 0
        %943 = vmatprep.subr.bf16.mxu0 0
        %944 = vmatpush2.bf16.msra.mxu0 0
        %945 = vmatprep.mubr.bf16.mxu0 0
        %946 = vmatmul.mubr.bf16.gmra.mxu0 %v694
        %v947 = vpop.f32.mrf.mxu0
        %v948 = vadd.f32 %v740, %v947
        %v949 = vpop.f32.mrf.mxu0
        %v950 = vpop.f32.mrf.mxu0
        %v951 = vpop.f32.mrf.mxu0
        %952 = vdwg.mxu0
        %vm953 = vcmask 523264
        %v955 = vsel %vm953, %v907, 0
        %v958 = vsel %vm953, %v909, 0
        %960 = vmatprep.subr.mxu0 0.0
        %961 = vmatpush1.xpose.msra.mxu0 0.0
        %962 = vmatprep.subr.mxu0 0.0
        %963 = vmatpush1.xpose.msra.mxu0 0.0
        %964 = vmatprep.subr.mxu0 0.0
        %965 = vmatpush1.xpose.msra.mxu0 0.0
        %966 = vmatprep.subr.mxu0 0.0
        %967 = vmatpush1.xpose.msra.mxu0 0.0
        %968 = vmatprep.subr.mxu0 0.0
        %969 = vmatpush1.xpose.msra.mxu0 0.0
        %970 = vmatprep.subr.mxu0 0.0
        %971 = vmatpush1.xpose.msra.mxu0 0.0
        %972 = vmatprep.subr.mxu0 0.0
        %973 = vmatpush1.xpose.msra.mxu0 0.0
        %974 = vmatprep.subr.mxu0 0.0
        %975 = vmatpush1.xpose.msra.mxu0 0.0
        %976 = vmatprep.subr.mxu0 0.0
        %977 = vmatpush1.xpose.msra.mxu0 0.0
        %978 = vmatprep.subr.mxu0 0.0
        %979 = vmatpush1.xpose.msra.mxu0 0.0
        %980 = vmatprep.subr.mxu0 0.0
        %981 = vmatpush1.xpose.msra.mxu0 0.0
        %982 = vmatprep.subr.mxu0 0.0
        %983 = vmatpush1.xpose.msra.mxu0 0.0
        %984 = vmatprep.subr.mxu0 0.0
        %985 = vmatpush1.xpose.msra.mxu0 0.0
        %986 = vmatprep.subr.mxu0 0.0
        %987 = vmatpush1.xpose.msra.mxu0 0.0
        %988 = vmatprep.subr.mxu0 0.0
        %989 = vmatpush1.xpose.msra.mxu0 0.0
        %990 = vmatprep.subr.mxu0 0.0
        %991 = vmatpush1.xpose.msra.mxu0 %v958
        %992 = vmatprep.subr.mxu0 0.0
        %993 = vmatpush2.xpose.msra.mxu0 0.0
        %994 = vmatprep.subr.mxu0 0.0
        %995 = vmatpush2.xpose.msra.mxu0 0.0
        %996 = vmatprep.subr.mxu0 0.0
        %997 = vmatpush2.xpose.msra.mxu0 0.0
        %998 = vmatprep.subr.mxu0 0.0
        %999 = vmatpush2.xpose.msra.mxu0 0.0
        %1000 = vmatprep.subr.mxu0 0.0
        %1001 = vmatpush2.xpose.msra.mxu0 0.0
        %1002 = vmatprep.subr.mxu0 0.0
        %1003 = vmatpush2.xpose.msra.mxu0 0.0
        %1004 = vmatprep.subr.mxu0 0.0
        %1005 = vmatpush2.xpose.msra.mxu0 0.0
        %1006 = vmatprep.subr.mxu0 0.0
        %1007 = vmatpush2.xpose.msra.mxu0 0.0
        %1008 = vmatprep.subr.mxu0 0.0
        %1009 = vmatpush2.xpose.msra.mxu0 0.0
        %1010 = vmatprep.subr.mxu0 0.0
        %1011 = vmatpush2.xpose.msra.mxu0 0.0
        %1012 = vmatprep.subr.mxu0 0.0
        %1013 = vmatpush2.xpose.msra.mxu0 0.0
        %1014 = vmatprep.subr.mxu0 0.0
        %1015 = vmatpush2.xpose.msra.mxu0 0.0
        %1016 = vmatprep.subr.mxu0 0.0
        %1017 = vmatpush2.xpose.msra.mxu0 0.0
        %1018 = vmatprep.subr.mxu0 0.0
        %1019 = vmatpush2.xpose.msra.mxu0 0.0
        %1020 = vmatprep.subr.mxu0 0.0
        %1021 = vmatpush2.xpose.msra.mxu0 0.0
        %1022 = vmatprep.subr.mxu0 0.0
        %1023 = vmatpush2.xpose.msra.mxu0 0.0
        %1024 = vmatprep.mubr.f32.mxu0 0.0
        %1025 = vmatmul.mubr.f32.gmra.mxu0 %v955
        %v1026 = vpop.f32.mrf.mxu0
        %v1027 = vadd.f32 0.0, %v1026
        %v1028 = vpop.f32.mrf.mxu0
        %1029 = vdwg.mxu0
        %v1030 = vmul.f32 %v1027, 0.125
        %v1031 = vld [vmem:[%s1] sm:$0xff]
        %v1032 = vadd.f32 %v1030, %v1031
        %vm1033 = vcmask 64512
        %v1034 = vsel %vm1033, %v1032, -inf
        %1035 = vmax.xlane.f32.xlu0 %v1034
        %v1036 = vpop.xlane.xlu0 %1035
        %v1037 = vsub.f32 %v1032, %v1036
        %v1038 = vmul.f32 %v1037, 1.442695
        %v1039 = vpow.pop %v1038
        %v1040 = vsel %vm1033, %v1039, 0.0
        %1041 = vadd.xlane.f32.xlu0 %v1040
        %v1042 = vpop.xlane.xlu0 %1041
        %v1043 = vrcp.pop %v1042
        %v1044 = vmul.f32 %v1039, %v1043
        %v1046 = vsel %vm1033, %v1044, 0
        %1048 = vmatprep.subr.mxu0 0.0
        %1049 = vmatpush1.msra.mxu0 0.0
        %1050 = vmatprep.subr.mxu0 0.0
        %1051 = vmatpush1.msra.mxu0 0.0
        %1052 = vmatprep.subr.mxu0 0.0
        %1053 = vmatpush1.msra.mxu0 0.0
        %1054 = vmatprep.subr.mxu0 0.0
        %1055 = vmatpush1.msra.mxu0 0.0
        %1056 = vmatprep.subr.mxu0 0.0
        %1057 = vmatpush1.msra.mxu0 0.0
        %1058 = vmatprep.subr.mxu0 0.0
        %1059 = vmatpush1.msra.mxu0 0.0
        %1060 = vmatprep.subr.mxu0 0.0
        %1061 = vmatpush1.msra.mxu0 0.0
        %1062 = vmatprep.subr.mxu0 0.0
        %1063 = vmatpush1.msra.mxu0 0.0
        %1064 = vmatprep.subr.mxu0 0.0
        %1065 = vmatpush1.msra.mxu0 0.0
        %1066 = vmatprep.subr.mxu0 0.0
        %1067 = vmatpush1.msra.mxu0 0.0
        %1068 = vmatprep.subr.mxu0 0.0
        %1069 = vmatpush1.msra.mxu0 0.0
        %1070 = vmatprep.subr.mxu0 0.0
        %1071 = vmatpush1.msra.mxu0 0.0
        %1072 = vmatprep.subr.mxu0 0.0
        %1073 = vmatpush1.msra.mxu0 0.0
        %1074 = vmatprep.subr.mxu0 0.0
        %1075 = vmatpush1.msra.mxu0 0.0
        %1076 = vmatprep.subr.mxu0 0.0
        %1077 = vmatpush1.msra.mxu0 0.0
        %1078 = vmatprep.subr.mxu0 0.0
        %1079 = vmatpush1.msra.mxu0 %v948
        %1080 = vmatprep.subr.mxu0 0.0
        %1081 = vmatpush2.msra.mxu0 0.0
        %1082 = vmatprep.subr.mxu0 0.0
        %1083 = vmatpush2.msra.mxu0 0.0
        %1084 = vmatprep.subr.mxu0 0.0
        %1085 = vmatpush2.msra.mxu0 0.0
        %1086 = vmatprep.subr.mxu0 0.0
        %1087 = vmatpush2.msra.mxu0 0.0
        %1088 = vmatprep.subr.mxu0 0.0
        %1089 = vmatpush2.msra.mxu0 0.0
        %1090 = vmatprep.subr.mxu0 0.0
        %1091 = vmatpush2.msra.mxu0 0.0
        %1092 = vmatprep.subr.mxu0 0.0
        %1093 = vmatpush2.msra.mxu0 0.0
        %1094 = vmatprep.subr.mxu0 0.0
        %1095 = vmatpush2.msra.mxu0 0.0
        %1096 = vmatprep.subr.mxu0 0.0
        %1097 = vmatpush2.msra.mxu0 0.0
        %1098 = vmatprep.subr.mxu0 0.0
        %1099 = vmatpush2.msra.mxu0 0.0
        %1100 = vmatprep.subr.mxu0 0.0
        %1101 = vmatpush2.msra.mxu0 0.0
        %1102 = vmatprep.subr.mxu0 0.0
        %1103 = vmatpush2.msra.mxu0 0.0
        %1104 = vmatprep.subr.mxu0 0.0
        %1105 = vmatpush2.msra.mxu0 0.0
        %1106 = vmatprep.subr.mxu0 0.0
        %1107 = vmatpush2.msra.mxu0 0.0
        %1108 = vmatprep.subr.mxu0 0.0
        %1109 = vmatpush2.msra.mxu0 0.0
        %1110 = vmatprep.subr.mxu0 0.0
        %1111 = vmatpush2.msra.mxu0 0.0
        %1112 = vmatprep.mubr.f32.mxu0 0.0
        %1113 = vmatmul.mubr.f32.gmra.mxu0 %v1046
        %v1114 = vpop.f32.mrf.mxu0
        %v1115 = vadd.f32 0.0, %v1114
        %v1116 = vpop.f32.mrf.mxu0
        %1117 = vdwg.mxu0
        %1118 = vrot.lane.b32.xlu0 %v907, 64
        %v1119 = vpop.permute.xlu0 %1118
        %1120 = vrot.lane.b32.xlu0 %v909, 64
        %v1121 = vpop.permute.xlu0 %1120
        %v1122 = vsel %vm953, %v1119, 0
        %v1124 = vsel %vm953, %v1121, 0
        %1126 = vmatprep.subr.mxu0 0.0
        %1127 = vmatpush1.xpose.msra.mxu0 0.0
        %1128 = vmatprep.subr.mxu0 0.0
        %1129 = vmatpush1.xpose.msra.mxu0 0.0
        %1130 = vmatprep.subr.mxu0 0.0
        %1131 = vmatpush1.xpose.msra.mxu0 0.0
        %1132 = vmatprep.subr.mxu0 0.0
        %1133 = vmatpush1.xpose.msra.mxu0 0.0
        %1134 = vmatprep.subr.mxu0 0.0
        %1135 = vmatpush1.xpose.msra.mxu0 0.0
        %1136 = vmatprep.subr.mxu0 0.0
        %1137 = vmatpush1.xpose.msra.mxu0 0.0
        %1138 = vmatprep.subr.mxu0 0.0
        %1139 = vmatpush1.xpose.msra.mxu0 0.0
        %1140 = vmatprep.subr.mxu0 0.0
        %1141 = vmatpush1.xpose.msra.mxu0 0.0
        %1142 = vmatprep.subr.mxu0 0.0
        %1143 = vmatpush1.xpose.msra.mxu0 0.0
        %1144 = vmatprep.subr.mxu0 0.0
        %1145 = vmatpush1.xpose.msra.mxu0 0.0
        %1146 = vmatprep.subr.mxu0 0.0
        %1147 = vmatpush1.xpose.msra.mxu0 0.0
        %1148 = vmatprep.subr.mxu0 0.0
        %1149 = vmatpush1.xpose.msra.mxu0 0.0
        %1150 = vmatprep.subr.mxu0 0.0
        %1151 = vmatpush1.xpose.msra.mxu0 0.0
        %1152 = vmatprep.subr.mxu0 0.0
        %1153 = vmatpush1.xpose.msra.mxu0 0.0
        %1154 = vmatprep.subr.mxu0 0.0
        %1155 = vmatpush1.xpose.msra.mxu0 0.0
        %1156 = vmatprep.subr.mxu0 0.0
        %1157 = vmatpush1.xpose.msra.mxu0 %v1124
        %1158 = vmatprep.subr.mxu0 0.0
        %1159 = vmatpush2.xpose.msra.mxu0 0.0
        %1160 = vmatprep.subr.mxu0 0.0
        %1161 = vmatpush2.xpose.msra.mxu0 0.0
        %1162 = vmatprep.subr.mxu0 0.0
        %1163 = vmatpush2.xpose.msra.mxu0 0.0
        %1164 = vmatprep.subr.mxu0 0.0
        %1165 = vmatpush2.xpose.msra.mxu0 0.0
        %1166 = vmatprep.subr.mxu0 0.0
        %1167 = vmatpush2.xpose.msra.mxu0 0.0
        %1168 = vmatprep.subr.mxu0 0.0
        %1169 = vmatpush2.xpose.msra.mxu0 0.0
        %1170 = vmatprep.subr.mxu0 0.0
        %1171 = vmatpush2.xpose.msra.mxu0 0.0
        %1172 = vmatprep.subr.mxu0 0.0
        %1173 = vmatpush2.xpose.msra.mxu0 0.0
        %1174 = vmatprep.subr.mxu0 0.0
        %1175 = vmatpush2.xpose.msra.mxu0 0.0
        %1176 = vmatprep.subr.mxu0 0.0
        %1177 = vmatpush2.xpose.msra.mxu0 0.0
        %1178 = vmatprep.subr.mxu0 0.0
        %1179 = vmatpush2.xpose.msra.mxu0 0.0
        %1180 = vmatprep.subr.mxu0 0.0
        %1181 = vmatpush2.xpose.msra.mxu0 0.0
        %1182 = vmatprep.subr.mxu0 0.0
        %1183 = vmatpush2.xpose.msra.mxu0 0.0
        %1184 = vmatprep.subr.mxu0 0.0
        %1185 = vmatpush2.xpose.msra.mxu0 0.0
        %1186 = vmatprep.subr.mxu0 0.0
        %1187 = vmatpush2.xpose.msra.mxu0 0.0
        %1188 = vmatprep.subr.mxu0 0.0
        %1189 = vmatpush2.xpose.msra.mxu0 0.0
        %1190 = vmatprep.mubr.f32.mxu0 0.0
        %1191 = vmatmul.mubr.f32.gmra.mxu0 %v1122
        %v1192 = vpop.f32.mrf.mxu0
        %v1193 = vadd.f32 0.0, %v1192
        %v1194 = vpop.f32.mrf.mxu0
        %1195 = vdwg.mxu0
        %v1196 = vmul.f32 %v1193, 0.125
        %v1197 = vadd.f32 %v1196, %v1031
        %v1198 = vsel %vm1033, %v1197, -inf
        %1199 = vmax.xlane.f32.xlu0 %v1198
        %v1200 = vpop.xlane.xlu0 %1199
        %v1201 = vsub.f32 %v1197, %v1200
        %v1202 = vmul.f32 %v1201, 1.442695
        %v1203 = vpow.pop %v1202
        %v1204 = vsel %vm1033, %v1203, 0.0
        %1205 = vadd.xlane.f32.xlu0 %v1204
        %v1206 = vpop.xlane.xlu0 %1205
        %v1207 = vrcp.pop %v1206
        %v1208 = vmul.f32 %v1203, %v1207
        %1210 = vrot.lane.b32.xlu0 %v948, 64
        %v1211 = vpop.permute.xlu0 %1210
        %v1214 = vsel %vm1033, %v1208, 0
        %1216 = vmatprep.subr.mxu0 0.0
        %1217 = vmatpush1.msra.mxu0 0.0
        %1218 = vmatprep.subr.mxu0 0.0
        %1219 = vmatpush1.msra.mxu0 0.0
        %1220 = vmatprep.subr.mxu0 0.0
        %1221 = vmatpush1.msra.mxu0 0.0
        %1222 = vmatprep.subr.mxu0 0.0
        %1223 = vmatpush1.msra.mxu0 0.0
        %1224 = vmatprep.subr.mxu0 0.0
        %1225 = vmatpush1.msra.mxu0 0.0
        %1226 = vmatprep.subr.mxu0 0.0
        %1227 = vmatpush1.msra.mxu0 0.0
        %1228 = vmatprep.subr.mxu0 0.0
        %1229 = vmatpush1.msra.mxu0 0.0
        %1230 = vmatprep.subr.mxu0 0.0
        %1231 = vmatpush1.msra.mxu0 0.0
        %1232 = vmatprep.subr.mxu0 0.0
        %1233 = vmatpush1.msra.mxu0 0.0
        %1234 = vmatprep.subr.mxu0 0.0
        %1235 = vmatpush1.msra.mxu0 0.0
        %1236 = vmatprep.subr.mxu0 0.0
        %1237 = vmatpush1.msra.mxu0 0.0
        %1238 = vmatprep.subr.mxu0 0.0
        %1239 = vmatpush1.msra.mxu0 0.0
        %1240 = vmatprep.subr.mxu0 0.0
        %1241 = vmatpush1.msra.mxu0 0.0
        %1242 = vmatprep.subr.mxu0 0.0
        %1243 = vmatpush1.msra.mxu0 0.0
        %1244 = vmatprep.subr.mxu0 0.0
        %1245 = vmatpush1.msra.mxu0 0.0
        %1246 = vmatprep.subr.mxu0 0.0
        %1247 = vmatpush1.msra.mxu0 %v1211
        %1248 = vmatprep.subr.mxu0 0.0
        %1249 = vmatpush2.msra.mxu0 0.0
        %1250 = vmatprep.subr.mxu0 0.0
        %1251 = vmatpush2.msra.mxu0 0.0
        %1252 = vmatprep.subr.mxu0 0.0
        %1253 = vmatpush2.msra.mxu0 0.0
        %1254 = vmatprep.subr.mxu0 0.0
        %1255 = vmatpush2.msra.mxu0 0.0
        %1256 = vmatprep.subr.mxu0 0.0
        %1257 = vmatpush2.msra.mxu0 0.0
        %1258 = vmatprep.subr.mxu0 0.0
        %1259 = vmatpush2.msra.mxu0 0.0
        %1260 = vmatprep.subr.mxu0 0.0
        %1261 = vmatpush2.msra.mxu0 0.0
        %1262 = vmatprep.subr.mxu0 0.0
        %1263 = vmatpush2.msra.mxu0 0.0
        %1264 = vmatprep.subr.mxu0 0.0
        %1265 = vmatpush2.msra.mxu0 0.0
        %1266 = vmatprep.subr.mxu0 0.0
        %1267 = vmatpush2.msra.mxu0 0.0
        %1268 = vmatprep.subr.mxu0 0.0
        %1269 = vmatpush2.msra.mxu0 0.0
        %1270 = vmatprep.subr.mxu0 0.0
        %1271 = vmatpush2.msra.mxu0 0.0
        %1272 = vmatprep.subr.mxu0 0.0
        %1273 = vmatpush2.msra.mxu0 0.0
        %1274 = vmatprep.subr.mxu0 0.0
        %1275 = vmatpush2.msra.mxu0 0.0
        %1276 = vmatprep.subr.mxu0 0.0
        %1277 = vmatpush2.msra.mxu0 0.0
        %1278 = vmatprep.subr.mxu0 0.0
        %1279 = vmatpush2.msra.mxu0 0.0
        %1280 = vmatprep.mubr.f32.mxu0 0.0
        %1281 = vmatmul.mubr.f32.gmra.mxu0 %v1214
        %v1282 = vpop.f32.mrf.mxu0
        %v1283 = vadd.f32 0.0, %v1282
        %v1284 = vpop.f32.mrf.mxu0
        %1285 = vdwg.mxu0
        %1287 = vrot.lane.b32.xlu0 %v1283, 64
        %v1288 = vpop.permute.xlu0 %1287
        %v1290 = vsel %vm953, %v1115, %v1288
        %v1291 = vpack.c.bf16 %v1290, %v1290
        %v1292 = vld [vmem:[%s653] sm:$0xf]
        %v1293 = vld [vmem:[%s653 + $0x4] sm:$0xf]
        %v1294 = vld [vmem:[%s653 + $0x8] sm:$0xf]
        %v1295 = vld [vmem:[%s653 + $0xc] sm:$0xf]
        %v1296 = vld [vmem:[%s653 + $0x10] sm:$0xf]
        %v1297 = vld [vmem:[%s653 + $0x14] sm:$0xf]
        %v1298 = vld [vmem:[%s653 + $0x18] sm:$0xf]
        %v1299 = vld [vmem:[%s653 + $0x1c] sm:$0xf]
        %v1300 = vld [vmem:[%s653 + $0x20] sm:$0xf]
        %v1301 = vld [vmem:[%s653 + $0x24] sm:$0xf]
        %v1302 = vld [vmem:[%s653 + $0x28] sm:$0xf]
        %v1303 = vld [vmem:[%s653 + $0x2c] sm:$0xf]
        %v1304 = vld [vmem:[%s653 + $0x30] sm:$0xf]
        %v1305 = vld [vmem:[%s653 + $0x34] sm:$0xf]
        %v1306 = vld [vmem:[%s653 + $0x38] sm:$0xf]
        %v1307 = vld [vmem:[%s653 + $0x3c] sm:$0xf]
        %v1308 = vld [vmem:[%s656] sm:$0x1]
        %v1310 = vlaneseq
        %v1311 = vshrl.u32 %v1310, 7
        %v1312 = vsub.s32 0, %v1311
        %v1313 = vrot.slane %v1308, %v1312
        %v1331 = vunpack.c.l.b16 %v1292
        %v1332 = vunpack.c.l.b16 %v1293
        %v1333 = vunpack.c.l.b16 %v1294
        %v1334 = vunpack.c.l.b16 %v1295
        %v1335 = vunpack.c.l.b16 %v1296
        %v1336 = vunpack.c.l.b16 %v1297
        %v1337 = vunpack.c.l.b16 %v1298
        %v1338 = vunpack.c.l.b16 %v1299
        %v1339 = vunpack.c.l.b16 %v1300
        %v1340 = vunpack.c.l.b16 %v1301
        %v1341 = vunpack.c.l.b16 %v1302
        %v1342 = vunpack.c.l.b16 %v1303
        %v1343 = vunpack.c.l.b16 %v1304
        %v1344 = vunpack.c.l.b16 %v1305
        %v1345 = vunpack.c.l.b16 %v1306
        %v1346 = vunpack.c.l.b16 %v1307
        %v1347 = vpack.c.b16 %v1332, %v1331
        %v1348 = vpack.c.b16 %v1334, %v1333
        %v1349 = vpack.c.b16 %v1336, %v1335
        %v1350 = vpack.c.b16 %v1338, %v1337
        %v1351 = vpack.c.b16 %v1340, %v1339
        %v1352 = vpack.c.b16 %v1342, %v1341
        %v1353 = vpack.c.b16 %v1344, %v1343
        %v1354 = vpack.c.b16 %v1346, %v1345
        %1363 = vmatprep.subr.bf16.mxu0 0
        %1364 = vmatpush1.bf16.msra.mxu0 %v1354
        %1365 = vmatprep.subr.bf16.mxu0 0
        %1366 = vmatpush1.bf16.msra.mxu0 %v1353
        %1367 = vmatprep.subr.bf16.mxu0 0
        %1368 = vmatpush1.bf16.msra.mxu0 %v1352
        %1369 = vmatprep.subr.bf16.mxu0 0
        %1370 = vmatpush1.bf16.msra.mxu0 %v1351
        %1371 = vmatprep.subr.bf16.mxu0 0
        %1372 = vmatpush1.bf16.msra.mxu0 %v1350
        %1373 = vmatprep.subr.bf16.mxu0 0
        %1374 = vmatpush1.bf16.msra.mxu0 %v1349
        %1375 = vmatprep.subr.bf16.mxu0 0
        %1376 = vmatpush1.bf16.msra.mxu0 %v1348
        %1377 = vmatprep.subr.bf16.mxu0 0
        %1378 = vmatpush1.bf16.msra.mxu0 %v1347
        %1379 = vmatprep.subr.bf16.mxu0 0
        %1380 = vmatpush2.bf16.msra.mxu0 0
        %1381 = vmatprep.subr.bf16.mxu0 0
        %1382 = vmatpush2.bf16.msra.mxu0 0
        %1383 = vmatprep.subr.bf16.mxu0 0
        %1384 = vmatpush2.bf16.msra.mxu0 0
        %1385 = vmatprep.subr.bf16.mxu0 0
        %1386 = vmatpush2.bf16.msra.mxu0 0
        %1387 = vmatprep.subr.bf16.mxu0 0
        %1388 = vmatpush2.bf16.msra.mxu0 0
        %1389 = vmatprep.subr.bf16.mxu0 0
        %1390 = vmatpush2.bf16.msra.mxu0 0
        %1391 = vmatprep.subr.bf16.mxu0 0
        %1392 = vmatpush2.bf16.msra.mxu0 0
        %1393 = vmatprep.subr.bf16.mxu0 0
        %1394 = vmatpush2.bf16.msra.mxu0 0
        %1395 = vmatprep.mubr.bf16.mxu0 0
        %1396 = vmatmul.mubr.bf16.gmra.mxu0 %v1291
        %v1397 = vpop.f32.mrf.mxu0
        %v1398 = vadd.f32 %v1313, %v1397
        %v1399 = vpop.f32.mrf.mxu0
        %v1400 = vpop.f32.mrf.mxu0
        %v1401 = vpop.f32.mrf.mxu0
        %1402 = vdwg.mxu0
        %v1403 = vadd.f32 %v1398, %v693
        %v1404 = vld [vmem:[%s659] sm:$0x1]
        %v1405 = vld [vmem:[%s662] sm:$0x1]
        %1406 = vadd.xlane.f32.xlu0 %v1403
        %v1407 = vpop.xlane.xlu0 %1406
        %v1408 = vrcp.pop 128.0
        %v1409 = vmul.f32 %v1407, %v1408
        %v1410 = vsub.f32 %v1403, %v1409
        %v1411 = vmul.f32 %v1410, %v1410
        %1412 = vadd.xlane.f32.xlu0 %v1411
        %v1413 = vpop.xlane.xlu0 %1412
        %v1414 = vmul.f32 %v1413, %v1408
        %v1415 = vadd.f32 %v1414, 1e-05
        %v1416 = vrsqrt.pop %v1415
        %v1417 = vmul.f32 %v1410, %v1416
        %v1419 = vlaneseq
        %v1420 = vshrl.u32 %v1419, 7
        %v1421 = vsub.s32 0, %v1420
        %v1422 = vrot.slane %v1404, %v1421
        %v1424 = vmul.f32 %v1417, %v1422
        %v1426 = vlaneseq
        %v1427 = vshrl.u32 %v1426, 7
        %v1428 = vsub.s32 0, %v1427
        %v1429 = vrot.slane %v1405, %v1428
        %v1431 = vadd.f32 %v1424, %v1429
        %v1432 = vpack.c.bf16 %v1431, %v1431
        %v1433 = vld [vmem:[%s667] sm:$0xff]
        %v1434 = vld [vmem:[%s667 + $0x8] sm:$0xff]
        %v1435 = vld [vmem:[%s667 + $0x10] sm:$0xff]
        %v1436 = vld [vmem:[%s667 + $0x18] sm:$0xff]
        %v1437 = vld [vmem:[%s667 + $0x20] sm:$0xff]
        %v1438 = vld [vmem:[%s667 + $0x28] sm:$0xff]
        %v1439 = vld [vmem:[%s667 + $0x30] sm:$0xff]
        %v1440 = vld [vmem:[%s667 + $0x38] sm:$0xff]
        %v1441 = vld [vmem:[%s667 + $0x40] sm:$0xff]
        %v1442 = vld [vmem:[%s667 + $0x48] sm:$0xff]
        %v1443 = vld [vmem:[%s667 + $0x50] sm:$0xff]
        %v1444 = vld [vmem:[%s667 + $0x58] sm:$0xff]
        %v1445 = vld [vmem:[%s667 + $0x60] sm:$0xff]
        %v1446 = vld [vmem:[%s667 + $0x68] sm:$0xff]
        %v1447 = vld [vmem:[%s667 + $0x70] sm:$0xff]
        %v1448 = vld [vmem:[%s667 + $0x78] sm:$0xff]
        %v1449 = vld [vmem:[%s671] sm:$0x3]
        %v1451 = vlaneseq
        %v1452 = vshrl.u32 %v1451, 7
        %v1453 = vsub.s32 0, %v1452
        %v1454 = vrot.slane %v1449, %v1453
        %v1455 = vlaneseq
        %v1456 = vshrl.u32 %v1455, 7
        %v1457 = vsub.s32 1, %v1456
        %v1458 = vrot.slane %v1449, %v1457
        %v1477 = vunpack.c.l.b16 %v1433
        %v1478 = vunpack.c.h.b16 %v1433
        %v1479 = vunpack.c.l.b16 %v1434
        %v1480 = vunpack.c.h.b16 %v1434
        %v1481 = vunpack.c.l.b16 %v1435
        %v1482 = vunpack.c.h.b16 %v1435
        %v1483 = vunpack.c.l.b16 %v1436
        %v1484 = vunpack.c.h.b16 %v1436
        %v1485 = vunpack.c.l.b16 %v1437
        %v1486 = vunpack.c.h.b16 %v1437
        %v1487 = vunpack.c.l.b16 %v1438
        %v1488 = vunpack.c.h.b16 %v1438
        %v1489 = vunpack.c.l.b16 %v1439
        %v1490 = vunpack.c.h.b16 %v1439
        %v1491 = vunpack.c.l.b16 %v1440
        %v1492 = vunpack.c.h.b16 %v1440
        %v1493 = vunpack.c.l.b16 %v1441
        %v1494 = vunpack.c.h.b16 %v1441
        %v1495 = vunpack.c.l.b16 %v1442
        %v1496 = vunpack.c.h.b16 %v1442
        %v1497 = vunpack.c.l.b16 %v1443
        %v1498 = vunpack.c.h.b16 %v1443
        %v1499 = vunpack.c.l.b16 %v1444
        %v1500 = vunpack.c.h.b16 %v1444
        %v1501 = vunpack.c.l.b16 %v1445
        %v1502 = vunpack.c.h.b16 %v1445
        %v1503 = vunpack.c.l.b16 %v1446
        %v1504 = vunpack.c.h.b16 %v1446
        %v1505 = vunpack.c.l.b16 %v1447
        %v1506 = vunpack.c.h.b16 %v1447
        %v1507 = vunpack.c.l.b16 %v1448
        %v1508 = vunpack.c.h.b16 %v1448
        %v1509 = vpack.c.b16 %v1479, %v1477
        %v1510 = vpack.c.b16 %v1480, %v1478
        %v1511 = vpack.c.b16 %v1483, %v1481
        %v1512 = vpack.c.b16 %v1484, %v1482
        %v1513 = vpack.c.b16 %v1487, %v1485
        %v1514 = vpack.c.b16 %v1488, %v1486
        %v1515 = vpack.c.b16 %v1491, %v1489
        %v1516 = vpack.c.b16 %v1492, %v1490
        %v1517 = vpack.c.b16 %v1495, %v1493
        %v1518 = vpack.c.b16 %v1496, %v1494
        %v1519 = vpack.c.b16 %v1499, %v1497
        %v1520 = vpack.c.b16 %v1500, %v1498
        %v1521 = vpack.c.b16 %v1503, %v1501
        %v1522 = vpack.c.b16 %v1504, %v1502
        %v1523 = vpack.c.b16 %v1507, %v1505
        %v1524 = vpack.c.b16 %v1508, %v1506
        %1541 = vmatprep.subr.bf16.mxu0 %v1524
        %1542 = vmatpush1.bf16.msra.mxu0 %v1523
        %1543 = vmatprep.subr.bf16.mxu0 %v1522
        %1544 = vmatpush1.bf16.msra.mxu0 %v1521
        %1545 = vmatprep.subr.bf16.mxu0 %v1520
        %1546 = vmatpush1.bf16.msra.mxu0 %v1519
        %1547 = vmatprep.subr.bf16.mxu0 %v1518
        %1548 = vmatpush1.bf16.msra.mxu0 %v1517
        %1549 = vmatprep.subr.bf16.mxu0 %v1516
        %1550 = vmatpush1.bf16.msra.mxu0 %v1515
        %1551 = vmatprep.subr.bf16.mxu0 %v1514
        %1552 = vmatpush1.bf16.msra.mxu0 %v1513
        %1553 = vmatprep.subr.bf16.mxu0 %v1512
        %1554 = vmatpush1.bf16.msra.mxu0 %v1511
        %1555 = vmatprep.subr.bf16.mxu0 %v1510
        %1556 = vmatpush1.bf16.msra.mxu0 %v1509
        %1557 = vmatprep.subr.bf16.mxu0 0
        %1558 = vmatpush2.bf16.msra.mxu0 0
        %1559 = vmatprep.subr.bf16.mxu0 0
        %1560 = vmatpush2.bf16.msra.mxu0 0
        %1561 = vmatprep.subr.bf16.mxu0 0
        %1562 = vmatpush2.bf16.msra.mxu0 0
        %1563 = vmatprep.subr.bf16.mxu0 0
        %1564 = vmatpush2.bf16.msra.mxu0 0
        %1565 = vmatprep.subr.bf16.mxu0 0
        %1566 = vmatpush2.bf16.msra.mxu0 0
        %1567 = vmatprep.subr.bf16.mxu0 0
        %1568 = vmatpush2.bf16.msra.mxu0 0
        %1569 = vmatprep.subr.bf16.mxu0 0
        %1570 = vmatpush2.bf16.msra.mxu0 0
        %1571 = vmatprep.subr.bf16.mxu0 0
        %1572 = vmatpush2.bf16.msra.mxu0 0
        %1573 = vmatprep.mubr.bf16.mxu0 0
        %1574 = vmatmul.mubr.bf16.gmra.mxu0 %v1432
        %v1575 = vpop.f32.mrf.mxu0
        %v1576 = vadd.f32 %v1454, %v1575
        %v1577 = vpop.f32.mrf.mxu0
        %v1578 = vadd.f32 %v1458, %v1577
        %v1579 = vpop.f32.mrf.mxu0
        %v1580 = vpop.f32.mrf.mxu0
        %1581 = vdwg.mxu0
        %v1582 = vmax.f32 %v1576, 0.0
        %v1583 = vmax.f32 %v1578, 0.0
        %v1584 = vpack.c.bf16 %v1582, %v1582
        %v1585 = vpack.c.bf16 %v1583, %v1583
        %v1586 = vld [vmem:[%s676] sm:$0xf]
        %v1587 = vld [vmem:[%s676 + $0x4] sm:$0xf]
        %v1588 = vld [vmem:[%s676 + $0x8] sm:$0xf]
        %v1589 = vld [vmem:[%s676 + $0xc] sm:$0xf]
        %v1590 = vld [vmem:[%s676 + $0x10] sm:$0xf]
        %v1591 = vld [vmem:[%s676 + $0x14] sm:$0xf]
        %v1592 = vld [vmem:[%s676 + $0x18] sm:$0xf]
        %v1593 = vld [vmem:[%s676 + $0x1c] sm:$0xf]
        %v1594 = vld [vmem:[%s676 + $0x20] sm:$0xf]
        %v1595 = vld [vmem:[%s676 + $0x24] sm:$0xf]
        %v1596 = vld [vmem:[%s676 + $0x28] sm:$0xf]
        %v1597 = vld [vmem:[%s676 + $0x2c] sm:$0xf]
        %v1598 = vld [vmem:[%s676 + $0x30] sm:$0xf]
        %v1599 = vld [vmem:[%s676 + $0x34] sm:$0xf]
        %v1600 = vld [vmem:[%s676 + $0x38] sm:$0xf]
        %v1601 = vld [vmem:[%s676 + $0x3c] sm:$0xf]
        %v1602 = vld [vmem:[%s676 + $0x40] sm:$0xf]
        %v1603 = vld [vmem:[%s676 + $0x44] sm:$0xf]
        %v1604 = vld [vmem:[%s676 + $0x48] sm:$0xf]
        %v1605 = vld [vmem:[%s676 + $0x4c] sm:$0xf]
        %v1606 = vld [vmem:[%s676 + $0x50] sm:$0xf]
        %v1607 = vld [vmem:[%s676 + $0x54] sm:$0xf]
        %v1608 = vld [vmem:[%s676 + $0x58] sm:$0xf]
        %v1609 = vld [vmem:[%s676 + $0x5c] sm:$0xf]
        %v1610 = vld [vmem:[%s676 + $0x60] sm:$0xf]
        %v1611 = vld [vmem:[%s676 + $0x64] sm:$0xf]
        %v1612 = vld [vmem:[%s676 + $0x68] sm:$0xf]
        %v1613 = vld [vmem:[%s676 + $0x6c] sm:$0xf]
        %v1614 = vld [vmem:[%s676 + $0x70] sm:$0xf]
        %v1615 = vld [vmem:[%s676 + $0x74] sm:$0xf]
        %v1616 = vld [vmem:[%s676 + $0x78] sm:$0xf]
        %v1617 = vld [vmem:[%s676 + $0x7c] sm:$0xf]
        %v1618 = vld [vmem:[%s679] sm:$0x1]
        %v1620 = vlaneseq
        %v1621 = vshrl.u32 %v1620, 7
        %v1622 = vsub.s32 0, %v1621
        %v1623 = vrot.slane %v1618, %v1622
        %v1657 = vunpack.c.l.b16 %v1586
        %v1658 = vunpack.c.l.b16 %v1587
        %v1659 = vunpack.c.l.b16 %v1588
        %v1660 = vunpack.c.l.b16 %v1589
        %v1661 = vunpack.c.l.b16 %v1590
        %v1662 = vunpack.c.l.b16 %v1591
        %v1663 = vunpack.c.l.b16 %v1592
        %v1664 = vunpack.c.l.b16 %v1593
        %v1665 = vunpack.c.l.b16 %v1594
        %v1666 = vunpack.c.l.b16 %v1595
        %v1667 = vunpack.c.l.b16 %v1596
        %v1668 = vunpack.c.l.b16 %v1597
        %v1669 = vunpack.c.l.b16 %v1598
        %v1670 = vunpack.c.l.b16 %v1599
        %v1671 = vunpack.c.l.b16 %v1600
        %v1672 = vunpack.c.l.b16 %v1601
        %v1673 = vunpack.c.l.b16 %v1602
        %v1674 = vunpack.c.l.b16 %v1603
        %v1675 = vunpack.c.l.b16 %v1604
        %v1676 = vunpack.c.l.b16 %v1605
        %v1677 = vunpack.c.l.b16 %v1606
        %v1678 = vunpack.c.l.b16 %v1607
        %v1679 = vunpack.c.l.b16 %v1608
        %v1680 = vunpack.c.l.b16 %v1609
        %v1681 = vunpack.c.l.b16 %v1610
        %v1682 = vunpack.c.l.b16 %v1611
        %v1683 = vunpack.c.l.b16 %v1612
        %v1684 = vunpack.c.l.b16 %v1613
        %v1685 = vunpack.c.l.b16 %v1614
        %v1686 = vunpack.c.l.b16 %v1615
        %v1687 = vunpack.c.l.b16 %v1616
        %v1688 = vunpack.c.l.b16 %v1617
        %v1689 = vpack.c.b16 %v1658, %v1657
        %v1690 = vpack.c.b16 %v1660, %v1659
        %v1691 = vpack.c.b16 %v1662, %v1661
        %v1692 = vpack.c.b16 %v1664, %v1663
        %v1693 = vpack.c.b16 %v1666, %v1665
        %v1694 = vpack.c.b16 %v1668, %v1667
        %v1695 = vpack.c.b16 %v1670, %v1669
        %v1696 = vpack.c.b16 %v1672, %v1671
        %v1697 = vpack.c.b16 %v1674, %v1673
        %v1698 = vpack.c.b16 %v1676, %v1675
        %v1699 = vpack.c.b16 %v1678, %v1677
        %v1700 = vpack.c.b16 %v1680, %v1679
        %v1701 = vpack.c.b16 %v1682, %v1681
        %v1702 = vpack.c.b16 %v1684, %v1683
        %v1703 = vpack.c.b16 %v1686, %v1685
        %v1704 = vpack.c.b16 %v1688, %v1687
        %1721 = vmatprep.subr.bf16.mxu0 0
        %1722 = vmatpush1.bf16.msra.mxu0 %v1696
        %1723 = vmatprep.subr.bf16.mxu0 0
        %1724 = vmatpush1.bf16.msra.mxu0 %v1695
        %1725 = vmatprep.subr.bf16.mxu0 0
        %1726 = vmatpush1.bf16.msra.mxu0 %v1694
        %1727 = vmatprep.subr.bf16.mxu0 0
        %1728 = vmatpush1.bf16.msra.mxu0 %v1693
        %1729 = vmatprep.subr.bf16.mxu0 0
        %1730 = vmatpush1.bf16.msra.mxu0 %v1692
        %1731 = vmatprep.subr.bf16.mxu0 0
        %1732 = vmatpush1.bf16.msra.mxu0 %v1691
        %1733 = vmatprep.subr.bf16.mxu0 0
        %1734 = vmatpush1.bf16.msra.mxu0 %v1690
        %1735 = vmatprep.subr.bf16.mxu0 0
        %1736 = vmatpush1.bf16.msra.mxu0 %v1689
        %1737 = vmatprep.subr.bf16.mxu0 0
        %1738 = vmatpush2.bf16.msra.mxu0 %v1704
        %1739 = vmatprep.subr.bf16.mxu0 0
        %1740 = vmatpush2.bf16.msra.mxu0 %v1703
        %1741 = vmatprep.subr.bf16.mxu0 0
        %1742 = vmatpush2.bf16.msra.mxu0 %v1702
        %1743 = vmatprep.subr.bf16.mxu0 0
        %1744 = vmatpush2.bf16.msra.mxu0 %v1701
        %1745 = vmatprep.subr.bf16.mxu0 0
        %1746 = vmatpush2.bf16.msra.mxu0 %v1700
        %1747 = vmatprep.subr.bf16.mxu0 0
        %1748 = vmatpush2.bf16.msra.mxu0 %v1699
        %1749 = vmatprep.subr.bf16.mxu0 0
        %1750 = vmatpush2.bf16.msra.mxu0 %v1698
        %1751 = vmatprep.subr.bf16.mxu0 0
        %1752 = vmatpush2.bf16.msra.mxu0 %v1697
        %1753 = vmatprep.mubr.bf16.mxu0 %v1585
        %1754 = vmatmul.mubr.bf16.gmra.mxu0 %v1584
        %v1755 = vpop.f32.mrf.mxu0
        %v1756 = vadd.f32 %v1623, %v1755
        %v1757 = vpop.f32.mrf.mxu0
        %v1758 = vpop.f32.mrf.mxu0
        %v1759 = vpop.f32.mrf.mxu0
        %1760 = vdwg.mxu0
        %v1761 = vadd.f32 %v1756, %v1431
        %v1762 = vld [vmem:[%s682] sm:$0x1]
        %v1763 = vld [vmem:[%s685] sm:$0x1]
        %1764 = vadd.xlane.f32.xlu0 %v1761
        %v1765 = vpop.xlane.xlu0 %1764
        %v1766 = vmul.f32 %v1765, %v1408
        %v1767 = vsub.f32 %v1761, %v1766
        %v1768 = vmul.f32 %v1767, %v1767
        %1769 = vadd.xlane.f32.xlu0 %v1768
        %v1770 = vpop.xlane.xlu0 %1769
        %v1771 = vmul.f32 %v1770, %v1408
        %v1772 = vadd.f32 %v1771, 1e-05
        %v1773 = vrsqrt.pop %v1772
        %v1774 = vmul.f32 %v1767, %v1773
        %v1776 = vlaneseq
        %v1777 = vshrl.u32 %v1776, 7
        %v1778 = vsub.s32 0, %v1777
        %v1779 = vrot.slane %v1762, %v1778
        %v1781 = vmul.f32 %v1774, %v1779
        %v1783 = vlaneseq
        %v1784 = vshrl.u32 %v1783, 7
        %v1785 = vsub.s32 0, %v1784
        %v1786 = vrot.slane %v1763, %v1785
        %v1788 = vadd.f32 %v1781, %v1786
        %1789 = vst [vmem:[#allocation2] sm:$0xff] %v1788
        %p1790 = scmp.eq.s32.totalorder %s28, 1
        // Predicated region
        $region89: #{forward.3} parent=83 // pred_check
          %p1791 = pneg %p1790
        $region90: #{forward.3} parent=83 // pred_check_branch
          %1793 = sbr.rel (%p1791) target = $region92
        $region91: #{forward.3} parent=83 // pred_region
          %v1794 = vlaneseq
          %v1795 = vshrl.u32 %v1794, 7
          %v1796 = vlaneseq
          %v1797 = vand.u32 %v1796, 127
          %v1798 = vmul.u32 %v1795, 4
          %vm1799 = vcmp.ge.s32.totalorder %v1797, %v1798
          %v1800 = vadd.s32 %v1795, 1
          %v1801 = vmul.u32 %v1800, 4
          %vm1802 = vcmp.lt.s32.totalorder %v1797, %v1801
          %vm1803 = vmand %vm1799, %vm1802
          %v1804 = vsel %vm1803, 0.25, 0.0
          %v1806 = vsel %vm1033, %v1804, 0
          %1808 = vmatprep.subr.mxu0 0.0
          %1809 = vmatpush1.msra.mxu0 0.0
          %1810 = vmatprep.subr.mxu0 0.0
          %1811 = vmatpush1.msra.mxu0 0.0
          %1812 = vmatprep.subr.mxu0 0.0
          %1813 = vmatpush1.msra.mxu0 0.0
          %1814 = vmatprep.subr.mxu0 0.0
          %1815 = vmatpush1.msra.mxu0 0.0
          %1816 = vmatprep.subr.mxu0 0.0
          %1817 = vmatpush1.msra.mxu0 0.0
          %1818 = vmatprep.subr.mxu0 0.0
          %1819 = vmatpush1.msra.mxu0 0.0
          %1820 = vmatprep.subr.mxu0 0.0
          %1821 = vmatpush1.msra.mxu0 0.0
          %1822 = vmatprep.subr.mxu0 0.0
          %1823 = vmatpush1.msra.mxu0 0.0
          %1824 = vmatprep.subr.mxu0 0.0
          %1825 = vmatpush1.msra.mxu0 0.0
          %1826 = vmatprep.subr.mxu0 0.0
          %1827 = vmatpush1.msra.mxu0 0.0
          %1828 = vmatprep.subr.mxu0 0.0
          %1829 = vmatpush1.msra.mxu0 0.0
          %1830 = vmatprep.subr.mxu0 0.0
          %1831 = vmatpush1.msra.mxu0 0.0
          %1832 = vmatprep.subr.mxu0 0.0
          %1833 = vmatpush1.msra.mxu0 0.0
          %1834 = vmatprep.subr.mxu0 0.0
          %1835 = vmatpush1.msra.mxu0 0.0
          %1836 = vmatprep.subr.mxu0 0.0
          %1837 = vmatpush1.msra.mxu0 0.0
          %1838 = vmatprep.subr.mxu0 0.0
          %1839 = vmatpush1.msra.mxu0 %v1788
          %1840 = vmatprep.subr.mxu0 0.0
          %1841 = vmatpush2.msra.mxu0 0.0
          %1842 = vmatprep.subr.mxu0 0.0
          %1843 = vmatpush2.msra.mxu0 0.0
          %1844 = vmatprep.subr.mxu0 0.0
          %1845 = vmatpush2.msra.mxu0 0.0
          %1846 = vmatprep.subr.mxu0 0.0
          %1847 = vmatpush2.msra.mxu0 0.0
          %1848 = vmatprep.subr.mxu0 0.0
          %1849 = vmatpush2.msra.mxu0 0.0
          %1850 = vmatprep.subr.mxu0 0.0
          %1851 = vmatpush2.msra.mxu0 0.0
          %1852 = vmatprep.subr.mxu0 0.0
          %1853 = vmatpush2.msra.mxu0 0.0
          %1854 = vmatprep.subr.mxu0 0.0
          %1855 = vmatpush2.msra.mxu0 0.0
          %1856 = vmatprep.subr.mxu0 0.0
          %1857 = vmatpush2.msra.mxu0 0.0
          %1858 = vmatprep.subr.mxu0 0.0
          %1859 = vmatpush2.msra.mxu0 0.0
          %1860 = vmatprep.subr.mxu0 0.0
          %1861 = vmatpush2.msra.mxu0 0.0
          %1862 = vmatprep.subr.mxu0 0.0
          %1863 = vmatpush2.msra.mxu0 0.0
          %1864 = vmatprep.subr.mxu0 0.0
          %1865 = vmatpush2.msra.mxu0 0.0
          %1866 = vmatprep.subr.mxu0 0.0
          %1867 = vmatpush2.msra.mxu0 0.0
          %1868 = vmatprep.subr.mxu0 0.0
          %1869 = vmatpush2.msra.mxu0 0.0
          %1870 = vmatprep.subr.mxu0 0.0
          %1871 = vmatpush2.msra.mxu0 0.0
          %1872 = vmatprep.mubr.f32.mxu0 0.0
          %1873 = vmatmul.mubr.f32.gmra.mxu0 %v1806
          %v1874 = vpop.f32.mrf.mxu0
          %v1875 = vadd.f32 0.0, %v1874
          %v1876 = vpop.f32.mrf.mxu0
          %1877 = vdwg.mxu0
          %v1878 = vld [vmem:[%s14] sm:$0xff]
          %v1879 = vld [vmem:[%s14 + $0x8] sm:$0xff]
          %v1880 = vld [vmem:[%s14 + $0x10] sm:$0xff]
          %v1881 = vld [vmem:[%s14 + $0x18] sm:$0xff]
          %v1882 = vld [vmem:[%s14 + $0x20] sm:$0xff]
          %v1883 = vld [vmem:[%s14 + $0x28] sm:$0xff]
          %v1884 = vld [vmem:[%s14 + $0x30] sm:$0xff]
          %v1885 = vld [vmem:[%s14 + $0x38] sm:$0xff]
          %v1886 = vld [vmem:[%s14 + $0x40] sm:$0xff]
          %v1887 = vld [vmem:[%s14 + $0x48] sm:$0xff]
          %v1888 = vld [vmem:[%s14 + $0x50] sm:$0xff]
          %v1889 = vld [vmem:[%s14 + $0x58] sm:$0xff]
          %v1890 = vld [vmem:[%s14 + $0x60] sm:$0xff]
          %v1891 = vld [vmem:[%s14 + $0x68] sm:$0xff]
          %v1892 = vld [vmem:[%s14 + $0x70] sm:$0xff]
          %v1893 = vld [vmem:[%s14 + $0x78] sm:$0xff]
          %v1894 = vld [vmem:[%s15] sm:$0x1]
          %v1896 = vlaneseq
          %v1897 = vshrl.u32 %v1896, 7
          %v1898 = vsub.s32 0, %v1897
          %v1899 = vrot.slane %v1894, %v1898
          %1901 = vmatprep.subr.mxu0 0.0
          %1902 = vmatpush1.msra.mxu0 %v1893
          %1903 = vmatprep.subr.mxu0 0.0
          %1904 = vmatpush1.msra.mxu0 %v1892
          %1905 = vmatprep.subr.mxu0 0.0
          %1906 = vmatpush1.msra.mxu0 %v1891
          %1907 = vmatprep.subr.mxu0 0.0
          %1908 = vmatpush1.msra.mxu0 %v1890
          %1909 = vmatprep.subr.mxu0 0.0
          %1910 = vmatpush1.msra.mxu0 %v1889
          %1911 = vmatprep.subr.mxu0 0.0
          %1912 = vmatpush1.msra.mxu0 %v1888
          %1913 = vmatprep.subr.mxu0 0.0
          %1914 = vmatpush1.msra.mxu0 %v1887
          %1915 = vmatprep.subr.mxu0 0.0
          %1916 = vmatpush1.msra.mxu0 %v1886
          %1917 = vmatprep.subr.mxu0 0.0
          %1918 = vmatpush1.msra.mxu0 %v1885
          %1919 = vmatprep.subr.mxu0 0.0
          %1920 = vmatpush1.msra.mxu0 %v1884
          %1921 = vmatprep.subr.mxu0 0.0
          %1922 = vmatpush1.msra.mxu0 %v1883
          %1923 = vmatprep.subr.mxu0 0.0
          %1924 = vmatpush1.msra.mxu0 %v1882
          %1925 = vmatprep.subr.mxu0 0.0
          %1926 = vmatpush1.msra.mxu0 %v1881
          %1927 = vmatprep.subr.mxu0 0.0
          %1928 = vmatpush1.msra.mxu0 %v1880
          %1929 = vmatprep.subr.mxu0 0.0
          %1930 = vmatpush1.msra.mxu0 %v1879
          %1931 = vmatprep.subr.mxu0 0.0
          %1932 = vmatpush1.msra.mxu0 %v1878
          %1933 = vmatprep.subr.mxu0 0.0
          %1934 = vmatpush2.msra.mxu0 0.0
          %1935 = vmatprep.subr.mxu0 0.0
          %1936 = vmatpush2.msra.mxu0 0.0
          %1937 = vmatprep.subr.mxu0 0.0
          %1938 = vmatpush2.msra.mxu0 0.0
          %1939 = vmatprep.subr.mxu0 0.0
          %1940 = vmatpush2.msra.mxu0 0.0
          %1941 = vmatprep.subr.mxu0 0.0
          %1942 = vmatpush2.msra.mxu0 0.0
          %1943 = vmatprep.subr.mxu0 0.0
          %1944 = vmatpush2.msra.mxu0 0.0
          %1945 = vmatprep.subr.mxu0 0.0
          %1946 = vmatpush2.msra.mxu0 0.0
          %1947 = vmatprep.subr.mxu0 0.0
          %1948 = vmatpush2.msra.mxu0 0.0
          %1949 = vmatprep.subr.mxu0 0.0
          %1950 = vmatpush2.msra.mxu0 0.0
          %1951 = vmatprep.subr.mxu0 0.0
          %1952 = vmatpush2.msra.mxu0 0.0
          %1953 = vmatprep.subr.mxu0 0.0
          %1954 = vmatpush2.msra.mxu0 0.0
          %1955 = vmatprep.subr.mxu0 0.0
          %1956 = vmatpush2.msra.mxu0 0.0
          %1957 = vmatprep.subr.mxu0 0.0
          %1958 = vmatpush2.msra.mxu0 0.0
          %1959 = vmatprep.subr.mxu0 0.0
          %1960 = vmatpush2.msra.mxu0 0.0
          %1961 = vmatprep.subr.mxu0 0.0
          %1962 = vmatpush2.msra.mxu0 0.0
          %1963 = vmatprep.subr.mxu0 0.0
          %1964 = vmatpush2.msra.mxu0 0.0
          %1965 = vmatprep.mubr.f32.mxu0 0.0
          %1966 = vmatmul.mubr.f32.gmra.mxu0 %v1875
          %v1967 = vpop.f32.mrf.mxu0
          %v1968 = vadd.f32 %v1899, %v1967
          %v1969 = vpop.f32.mrf.mxu0
          %1970 = vdwg.mxu0
          %vm1971 = vcmask 41984
          %1972 = vst.msk [vmem:[#allocation3] sm:$0x3] %vm1971, %v1968
        $region92: #{forward.3} parent=83 // pred_fallthru
          _
        // Predicated region
        $region93: #{forward.3} parent=83 // pred_check
          %p1973 = pneg %p437
        $region94: #{forward.3} parent=83 // pred_check_branch
          %1975 = sbr.rel (%p1973) target = $region96
        $region95: #{forward.3} parent=83 // pred_region
          %s1977 = ssub.s32 32, 32
          %1978 = vsyncadd [#allocation4], %s1977
          %s1980 = sshll.u32 [#allocation3], 4
          %s1981 = int_to_ptr.vmem [resolvable:$true] %s1980
          %1983 = dma.vmem_to_hbm [thread:$0]  %s1981, 32, %s16, [#allocation4]
        $region96: #{forward.3} parent=83 // pred_fallthru
          _
        // Predicated region
        $region97: #{forward.3} parent=83 // pred_check
          %p1984 = pneg %p437
        $region98: #{forward.3} parent=83 // pred_check_branch
          %1986 = sbr.rel (%p1984) target = $region100
        $region99: #{forward.3} parent=83 // pred_region
          %1987 = dma.done [#allocation4], 32
        $region100: #{forward.3} parent=83 // pred_fallthru
          _
      $region84: #{forward.3} parent=5 // pred_fallthru
        _
      %p1988 = scmp.le.s32.totalorder 2, %s23
      // Predicated region
      $region101: #{forward.3} parent=5 // pred_check
        %p1989 = pneg %p1988
      $region102: #{forward.3} parent=5 // pred_check_branch
        %1991 = sbr.rel (%p1989) target = $region104
      $region103: #{forward.3} parent=5 // pred_region
        %s1992 = ssub.s32 %s23, 2
      $region104: #{forward.3} parent=5 // pred_fallthru
        _
    $region6: #{forward.3} parent=1 // loop_footer
      %s27 = sadd.s32 1, %s23
    $region7: #{forward.3} parent=1 // loop_footer_branch
      %22 = sbr.rel target = $region3
    $region8: #{forward.3} parent=1 // loop_exit
      _
    %1993 = vsyncpa [#allocation4], 1
    %s1994 = scalar_lea.sflag [#allocation4], 1
    %1995 = vsyncpa %s1994, 1

</llo_original>
